<compile_context>
chip_gen: v6e
topology: v6e:2x2x1
jax: 0.10.0
libtpu: 0.0.40
codegen_flags: <defaults>
</compile_context>

<pallas_src>
import math

import jax
import jax.numpy as jnp
from jax.experimental import pallas as pl
from jax.experimental.pallas import tpu as pltpu

NUM_CLASSES = 10


def _round_up(x, m):
    return -(-x // m) * m


def _hw_config():
    """Per-generation tile / VMEM knobs.
    v5e: 128x128 MXU, 128 MiB VMEM, 1 TC.   v6e: 256x256 MXU, 128 MiB, 1 TC.
    v7x: 256x256 MXU, 64 MiB VMEM, 2 TCs."""
    try:
        kind = jax.devices()[0].device_kind.lower()
    except Exception:
        kind = ""
    if "v5" in kind:
        return dict(tn=128, tm_max=512, tb_max=256,
                    vmem=64 * 1024 * 1024, two_cores=False)
    if "v7" in kind:
        return dict(tn=256, tm_max=256, tb_max=256,
                    vmem=48 * 1024 * 1024, two_cores=True)
    return dict(tn=256, tm_max=512, tb_max=256,
                vmem=64 * 1024 * 1024, two_cores=False)


# ----------------------------------------------------------------------------
# Pallas kernels
# ----------------------------------------------------------------------------
def conv_pool_kernel(cols_ref, w_ref, b_ref, o_ref):
    """Fused im2col conv + bias + ReLU + 2x2 maxpool for one (M, Cout) tile.

    cols_ref: (4*TM, K) bf16 -- the 4 pool-window positions of this M tile
              stacked along rows (position-major), so ONE MXU matmul covers
              all four positions.
    w_ref:    (K, TN) bf16   -- conv weights for this output-channel tile.
    b_ref:    (1, TN) f32
    o_ref:    (TM, TN)       -- pooled activations.
    """
    tm = o_ref.shape[0]
    acc = jnp.dot(cols_ref[...], w_ref[...], preferred_element_type=jnp.float32)
    # VPU max-reduce over the 4 pool positions (sublane-aligned static slices).
    pooled = jnp.maximum(jnp.maximum(acc[0:tm], acc[tm:2 * tm]),
                         jnp.maximum(acc[2 * tm:3 * tm], acc[3 * tm:4 * tm]))
    # maxpool(relu(conv + b)) == relu(max_p(conv_p) + b): bias is shared across
    # the window and ReLU is monotone, so bias/ReLU are applied once after max.
    o_ref[...] = jnp.maximum(pooled + b_ref[...], 0.0).astype(o_ref.dtype)


def classifier_kernel(x_ref, w1_ref, b1_ref, w2_ref, b2_ref, w3_ref, b3_ref,
                      o_ref):
    """Fused Linear+ReLU, Linear+ReLU, Linear for one batch tile; weights stay
    VMEM-resident across grid steps (constant block index)."""
    h = jnp.dot(x_ref[...], w1_ref[...], preferred_element_type=jnp.float32)
    h = jnp.maximum(h + b1_ref[...], 0.0).astype(x_ref.dtype)
    h = jnp.dot(h, w2_ref[...], preferred_element_type=jnp.float32)
    h = jnp.maximum(h + b2_ref[...], 0.0).astype(x_ref.dtype)
    out = jnp.dot(h, w3_ref[...], preferred_element_type=jnp.float32)
    o_ref[...] = (out + b3_ref[...]).astype(o_ref.dtype)


# ----------------------------------------------------------------------------
# Pallas wrappers
# ----------------------------------------------------------------------------
def conv3x3_relu_pool(x, w_mat, b, *, tn, tm_max, vmem_limit, two_cores):
    """3x3 conv (pad=1, stride=1) + ReLU + 2x2/2 maxpool on NHWC bf16 input.

    w_mat: kernel-ready (K_pad, Cout) bf16 (K_pad = 9*Cin rounded up to 32,
           zero-padded).  b: (1, Cout) f32.
    """
    B, H, W, Cin = x.shape
    Kp, Cout = w_mat.shape
    K0 = 9 * Cin
    Hh, Wh = H // 2, W // 2
    M = B * Hh * Wh

    # --- XLA glue: im2col per pool-window parity -----------------------------
    # TODO(synk): move im2col in-kernel at scale (see file header TODO).
    xp = jnp.pad(x, ((0, 0), (1, 1), (1, 1), (0, 0)))
    cols = []
    for pr in range(2):
        for pc in range(2):
            taps = [xp[:, pr + ki:pr + ki + H:2, pc + kj:pc + kj + W:2, :]
                    for ki in range(3) for kj in range(3)]
            cols.append(jnp.concatenate(taps, axis=-1).reshape(M, K0))
    cols = jnp.stack(cols, axis=0)                        # (4, M, K0)

    # Pad rows to a sublane-aligned M tile and K to the padded weight rows.
    tm = min(tm_max, _round_up(M, 8))
    m_pad = _round_up(M, tm)
    nmt = m_pad // tm
    cols = jnp.pad(cols, ((0, 0), (0, m_pad - M), (0, Kp - K0)))
    # Row layout = [M-tile t][pool position p][row r]  ->  (nmt*4*tm, Kp):
    cols = cols.reshape(4, nmt, tm, Kp).transpose(1, 0, 2, 3)
    cols = cols.reshape(nmt * 4 * tm, Kp)

    if Cout % tn != 0:
        tn = Cout                                         # small stages: 1 block
    n_ct = Cout // tn
    # v7x (2 TCs): when M-tiling leaves a 1-step grid, split Cout instead,
    # keeping tiles >=128 wide so stores stay lane-dense.
    if two_cores and nmt * n_ct < 2 and tn % 2 == 0 and tn // 2 >= 128:
        tn //= 2
        n_ct = Cout // tn

    out = pl.pallas_call(
        conv_pool_kernel,
        out_shape=jax.ShapeDtypeStruct((m_pad, Cout), x.dtype),
        grid=(nmt, n_ct),
        in_specs=[
            pl.BlockSpec((4 * tm, Kp), lambda i, j: (i, 0)),
            pl.BlockSpec((Kp, tn), lambda i, j: (0, j)),
            pl.BlockSpec((1, tn), lambda i, j: (0, j)),
        ],
        out_specs=pl.BlockSpec((tm, tn), lambda i, j: (i, j)),
        compiler_params=pltpu.CompilerParams(
            dimension_semantics=("parallel", "parallel"),
            vmem_limit_bytes=vmem_limit),
    )(cols, w_mat, b)
    return out[:M].reshape(B, Hh, Wh, Cout)


def classifier_fused(x, lin_params, *, tb_max, vmem_limit):
    """Dropout(id), Linear+ReLU, Dropout(id), Linear+ReLU, Linear.
    Last layer padded N=10 -> 128 for lane-dense stores (caller slices)."""
    # TODO(synk): Dropout is identity (eval-mode semantics).
    (w1, b1), (w2, b2), (w3, b3) = lin_params
    B, F = x.shape
    n_pad = w3.shape[1]                                   # 128 (padded from 10)
    tb = min(tb_max, _round_up(B, 8))
    b_pad = _round_up(B, tb)
    xb = jnp.pad(x, ((0, b_pad - B), (0, 0)))

    out = pl.pallas_call(
        classifier_kernel,
        out_shape=jax.ShapeDtypeStruct((b_pad, n_pad), jnp.float32),
        grid=(b_pad // tb,),
        in_specs=[
            pl.BlockSpec((tb, F), lambda i: (i, 0)),
            pl.BlockSpec(w1.shape, lambda i: (0, 0)),
            pl.BlockSpec(b1.shape, lambda i: (0, 0)),
            pl.BlockSpec(w2.shape, lambda i: (0, 0)),
            pl.BlockSpec(b2.shape, lambda i: (0, 0)),
            pl.BlockSpec(w3.shape, lambda i: (0, 0)),
            pl.BlockSpec(b3.shape, lambda i: (0, 0)),
        ],
        out_specs=pl.BlockSpec((tb, n_pad), lambda i: (i, 0)),
        compiler_params=pltpu.CompilerParams(
            dimension_semantics=("parallel",),
            vmem_limit_bytes=vmem_limit),
    )(xb, w1, b1, w2, b2, w3, b3)
    return out[:B]


# ----------------------------------------------------------------------------
# Parameter construction (mirrors the PyTorch __init__ scheme) + kernel layout
# ----------------------------------------------------------------------------
def init_params(key):
    """PyTorch-layout parameters with the reference init scheme."""
    conv_cfg = [(3, 64), (64, 128), (128, 512)]
    params = {"convs": [], "linears": []}
    for cin, cout in conv_cfg:
        key, k1 = jax.random.split(key)
        n = 3 * 3 * cout
        w = jax.random.normal(k1, (cout, cin, 3, 3), jnp.float32) * math.sqrt(2.0 / n)
        params["convs"].append((w, jnp.zeros((cout,), jnp.float32)))
    for fin, fout in [(512, 512), (512, 512), (512, NUM_CLASSES)]:
        key, k1, k2 = jax.random.split(key, 3)
        bound = 1.0 / math.sqrt(fin)
        w = jax.random.uniform(k1, (fout, fin), jnp.float32, -bound, bound)
        b = jax.random.uniform(k2, (fout,), jnp.float32, -bound, bound)
        params["linears"].append((w, b))
    return params


def prepare_params(params):
    """One-time conversion to kernel-ready layouts:
    conv weights -> (K_pad, Cout) bf16 with K = 9*Cin zero-padded to a multiple
    of 32; linear weights -> (in, out) bf16 with the last layer padded
    10 -> 128 columns for lane-dense stores; biases f32 (1, N) rows."""
    kp = {"convs": [], "classifier": []}
    for w, b in params["convs"]:
        cout, cin = w.shape[0], w.shape[1]
        k0 = 9 * cin
        kpad = _round_up(k0, 32)
        w_mat = jnp.transpose(w, (2, 3, 1, 0)).reshape(k0, cout)
        w_mat = jnp.pad(w_mat, ((0, kpad - k0), (0, 0)))
        kp["convs"].append((w_mat.astype(jnp.bfloat16),
                            b.reshape(1, cout).astype(jnp.float32)))
    for i, (w, b) in enumerate(params["linears"]):
        wt = w.T                                          # (in, out)
        bt = b.reshape(1, -1)
        if i == 2:                                        # pad N=10 -> 128
            wt = jnp.pad(wt, ((0, 0), (0, 128 - wt.shape[1])))
            bt = jnp.pad(bt, ((0, 0), (0, 128 - bt.shape[1])))
        kp["classifier"].append((wt.astype(jnp.bfloat16),
                                 bt.astype(jnp.float32)))
    return kp


# ----------------------------------------------------------------------------
# Full VGG forward
# ----------------------------------------------------------------------------
def vgg_forward(kparams, x_nchw):
    cfg = _hw_config()
    # NCHW (PyTorch) -> NHWC; bf16 activations, f32 accumulation in-kernel.
    x = jnp.transpose(x_nchw, (0, 2, 3, 1)).astype(jnp.bfloat16)

    # features: 3 x (conv3x3 + ReLU + maxpool2), each a single fused kernel.
    for w_mat, b in kparams["convs"]:
        x = conv3x3_relu_pool(x, w_mat, b, tn=cfg["tn"], tm_max=cfg["tm_max"],
                              vmem_limit=cfg["vmem"], two_cores=cfg["two_cores"])

    # flatten: (B, 1, 1, 512) -> (B, 512); identical to PyTorch's view since
    # the spatial extent is 1x1 at this configuration.
    B = x.shape[0]
    x = x.reshape(B, -1)

    # classifier (single fused kernel, batch-tiled), drop the padded columns.
    logits = classifier_fused(x, kparams["classifier"],
                              tb_max=cfg["tb_max"], vmem_limit=cfg["vmem"])
    return logits[:, :NUM_CLASSES]


if __name__ == "__main__":
    key = jax.random.PRNGKey(0)
    key, pkey, xkey = jax.random.split(key, 3)
    params = prepare_params(init_params(pkey))

    # Small example input, NCHW as in PyTorch: batch=2, channels=3, 8x8 spatial
    # (three conv+pool stages bring 8x8 -> 1x1 so the flatten yields the 512
    # features the classifier expects).
    x = jax.random.normal(xkey, (2, 3, 8, 8), jnp.float32)

    out = jax.jit(vgg_forward)(params, x)
    out = jax.block_until_ready(out)
    assert out.shape == (2, NUM_CLASSES), out.shape
    assert bool(jnp.all(jnp.isfinite(out)))
    print("KERNEL_OK")
</pallas_src>

<mosaic_0001>
module attributes {stable_mosaic.version = 11 : i64} {
  func.func @conv_pool_kernel(%arg0: i32, %arg1: i32, %arg2: memref<128x32xbf16, #tpu.memory_space<vmem>>, %arg3: memref<32x64xbf16, #tpu.memory_space<vmem>>, %arg4: memref<1x64xf32, #tpu.memory_space<vmem>>, %arg5: memref<32x64xbf16, #tpu.memory_space<vmem>>) attributes {dimension_semantics = [#tpu.dimension_semantics<parallel>, #tpu.dimension_semantics<parallel>], iteration_bounds = array<i64: 1, 1>, scalar_prefetch = 0 : i64, scratch_operands = 0 : i64, tpu.core_type = #tpu.core_type<tc>, window_params = [{transform_indices = @transform_0, window_bounds = array<i64: 128, 32>}, {transform_indices = @transform_1, window_bounds = array<i64: 32, 64>}, {transform_indices = @transform_2, window_bounds = array<i64: 1, 64>}, {transform_indices = @transform_3, window_bounds = array<i64: 32, 64>}]} {
    %c0 = arith.constant 0 : index
    %c0_0 = arith.constant 0 : index
    %0 = vector.load %arg2[%c0, %c0_0] : memref<128x32xbf16, #tpu.memory_space<vmem>>, vector<128x32xbf16>
    %c0_1 = arith.constant 0 : index
    %c0_2 = arith.constant 0 : index
    %1 = vector.load %arg3[%c0_1, %c0_2] : memref<32x64xbf16, #tpu.memory_space<vmem>>, vector<32x64xbf16>
    %cst = arith.constant dense<0.000000e+00> : vector<128x64xf32>
    %2 = tpu.matmul %0, %1, %cst {dimension_numbers = #tpu.dot_dimension_numbers<[1], [0], [0], [1], [0, 0, 1, 1], [], []>} : vector<128x32xbf16>, vector<32x64xbf16>, vector<128x64xf32> -> vector<128x64xf32>
    %3 = vector.extract_strided_slice %2 {offsets = [0, 0], sizes = [32, 64], strides = [1, 1]} : vector<128x64xf32> to vector<32x64xf32>
    %4 = vector.extract_strided_slice %2 {offsets = [32, 0], sizes = [32, 64], strides = [1, 1]} : vector<128x64xf32> to vector<32x64xf32>
    %5 = arith.maximumf %3, %4 : vector<32x64xf32>
    %6 = vector.extract_strided_slice %2 {offsets = [64, 0], sizes = [32, 64], strides = [1, 1]} : vector<128x64xf32> to vector<32x64xf32>
    %7 = vector.extract_strided_slice %2 {offsets = [96, 0], sizes = [32, 64], strides = [1, 1]} : vector<128x64xf32> to vector<32x64xf32>
    %8 = arith.maximumf %6, %7 : vector<32x64xf32>
    %9 = arith.maximumf %5, %8 : vector<32x64xf32>
    %c0_3 = arith.constant 0 : index
    %c0_4 = arith.constant 0 : index
    %10 = vector.load %arg4[%c0_3, %c0_4] : memref<1x64xf32, #tpu.memory_space<vmem>>, vector<1x64xf32>
    %11 = vector.broadcast %10 : vector<1x64xf32> to vector<32x64xf32>
    %12 = arith.addf %9, %11 : vector<32x64xf32>
    %cst_5 = arith.constant 0.000000e+00 : f32
    %13 = vector.broadcast %cst_5 : f32 to vector<32x64xf32>
    %14 = arith.maximumf %12, %13 : vector<32x64xf32>
    %15 = arith.truncf %14 : vector<32x64xf32> to vector<32x64xbf16>
    %c0_6 = arith.constant 0 : index
    %c0_7 = arith.constant 0 : index
    %16 = vector.load %arg5[%c0_6, %c0_7] : memref<32x64xbf16, #tpu.memory_space<vmem>>, vector<32x64xbf16>
    tpu.vector_store %arg5[%c0_6, %c0_7], %15 {strides = array<i32>} : memref<32x64xbf16, #tpu.memory_space<vmem>>, vector<32x64xbf16>,
    return
  }
  func.func @transform_0(%arg0: i32, %arg1: i32) -> (i32, i32) {
    %c0_i32 = arith.constant 0 : i32
    %c0_i32_0 = arith.constant 0 : i32
    return %arg0, %c0_i32 : i32, i32
  }
  func.func @transform_1(%arg0: i32, %arg1: i32) -> (i32, i32) {
    %c0_i32 = arith.constant 0 : i32
    %c0_i32_0 = arith.constant 0 : i32
    return %c0_i32, %arg1 : i32, i32
  }
  func.func @transform_2(%arg0: i32, %arg1: i32) -> (i32, i32) {
    %c0_i32 = arith.constant 0 : i32
    %c0_i32_0 = arith.constant 0 : i32
    return %c0_i32, %arg1 : i32, i32
  }
  func.func @transform_3(%arg0: i32, %arg1: i32) -> (i32, i32) {
    %c0_i32 = arith.constant 0 : i32
    return %arg0, %arg1 : i32, i32
  }
}

module attributes {stable_mosaic.version = 11 : i64} {
  func.func @conv_pool_kernel(%arg0: i32, %arg1: i32, %arg2: memref<32x576xbf16, #tpu.memory_space<vmem>>, %arg3: memref<576x128xbf16, #tpu.memory_space<vmem>>, %arg4: memref<1x128xf32, #tpu.memory_space<vmem>>, %arg5: memref<8x128xbf16, #tpu.memory_space<vmem>>) attributes {dimension_semantics = [#tpu.dimension_semantics<parallel>, #tpu.dimension_semantics<parallel>], iteration_bounds = array<i64: 1, 1>, scalar_prefetch = 0 : i64, scratch_operands = 0 : i64, tpu.core_type = #tpu.core_type<tc>, window_params = [{transform_indices = @transform_0, window_bounds = array<i64: 32, 576>}, {transform_indices = @transform_1, window_bounds = array<i64: 576, 128>}, {transform_indices = @transform_2, window_bounds = array<i64: 1, 128>}, {transform_indices = @transform_3, window_bounds = array<i64: 8, 128>}]} {
    %c0 = arith.constant 0 : index
    %c0_0 = arith.constant 0 : index
    %0 = vector.load %arg2[%c0, %c0_0] : memref<32x576xbf16, #tpu.memory_space<vmem>>, vector<32x576xbf16>
    %c0_1 = arith.constant 0 : index
    %c0_2 = arith.constant 0 : index
    %1 = vector.load %arg3[%c0_1, %c0_2] : memref<576x128xbf16, #tpu.memory_space<vmem>>, vector<576x128xbf16>
    %cst = arith.constant dense<0.000000e+00> : vector<32x128xf32>
    %2 = tpu.matmul %0, %1, %cst {dimension_numbers = #tpu.dot_dimension_numbers<[1], [0], [0], [1], [0, 0, 1, 1], [], []>} : vector<32x576xbf16>, vector<576x128xbf16>, vector<32x128xf32> -> vector<32x128xf32>
    %3 = vector.extract_strided_slice %2 {offsets = [0, 0], sizes = [8, 128], strides = [1, 1]} : vector<32x128xf32> to vector<8x128xf32>
    %4 = vector.extract_strided_slice %2 {offsets = [8, 0], sizes = [8, 128], strides = [1, 1]} : vector<32x128xf32> to vector<8x128xf32>
    %5 = arith.maximumf %3, %4 : vector<8x128xf32>
    %6 = vector.extract_strided_slice %2 {offsets = [16, 0], sizes = [8, 128], strides = [1, 1]} : vector<32x128xf32> to vector<8x128xf32>
    %7 = vector.extract_strided_slice %2 {offsets = [24, 0], sizes = [8, 128], strides = [1, 1]} : vector<32x128xf32> to vector<8x128xf32>
    %8 = arith.maximumf %6, %7 : vector<8x128xf32>
    %9 = arith.maximumf %5, %8 : vector<8x128xf32>
    %c0_3 = arith.constant 0 : index
    %c0_4 = arith.constant 0 : index
    %10 = vector.load %arg4[%c0_3, %c0_4] : memref<1x128xf32, #tpu.memory_space<vmem>>, vector<1x128xf32>
    %11 = vector.broadcast %10 : vector<1x128xf32> to vector<8x128xf32>
    %12 = arith.addf %9, %11 : vector<8x128xf32>
    %cst_5 = arith.constant 0.000000e+00 : f32
    %13 = vector.broadcast %cst_5 : f32 to vector<8x128xf32>
    %14 = arith.maximumf %12, %13 : vector<8x128xf32>
    %15 = arith.truncf %14 : vector<8x128xf32> to vector<8x128xbf16>
    %c0_6 = arith.constant 0 : index
    %c0_7 = arith.constant 0 : index
    %16 = vector.load %arg5[%c0_6, %c0_7] : memref<8x128xbf16, #tpu.memory_space<vmem>>, vector<8x128xbf16>
    tpu.vector_store %arg5[%c0_6, %c0_7], %15 {strides = array<i32>} : memref<8x128xbf16, #tpu.memory_space<vmem>>, vector<8x128xbf16>,
    return
  }
  func.func @transform_0(%arg0: i32, %arg1: i32) -> (i32, i32) {
    %c0_i32 = arith.constant 0 : i32
    %c0_i32_0 = arith.constant 0 : i32
    return %arg0, %c0_i32 : i32, i32
  }
  func.func @transform_1(%arg0: i32, %arg1: i32) -> (i32, i32) {
    %c0_i32 = arith.constant 0 : i32
    %c0_i32_0 = arith.constant 0 : i32
    return %c0_i32, %arg1 : i32, i32
  }
  func.func @transform_2(%arg0: i32, %arg1: i32) -> (i32, i32) {
    %c0_i32 = arith.constant 0 : i32
    %c0_i32_0 = arith.constant 0 : i32
    return %c0_i32, %arg1 : i32, i32
  }
  func.func @transform_3(%arg0: i32, %arg1: i32) -> (i32, i32) {
    %c0_i32 = arith.constant 0 : i32
    return %arg0, %arg1 : i32, i32
  }
}

module attributes {stable_mosaic.version = 11 : i64} {
  func.func @conv_pool_kernel(%arg0: i32, %arg1: i32, %arg2: memref<32x1152xbf16, #tpu.memory_space<vmem>>, %arg3: memref<1152x256xbf16, #tpu.memory_space<vmem>>, %arg4: memref<1x256xf32, #tpu.memory_space<vmem>>, %arg5: memref<8x256xbf16, #tpu.memory_space<vmem>>) attributes {dimension_semantics = [#tpu.dimension_semantics<parallel>, #tpu.dimension_semantics<parallel>], iteration_bounds = array<i64: 1, 2>, scalar_prefetch = 0 : i64, scratch_operands = 0 : i64, tpu.core_type = #tpu.core_type<tc>, window_params = [{transform_indices = @transform_0, window_bounds = array<i64: 32, 1152>}, {transform_indices = @transform_1, window_bounds = array<i64: 1152, 256>}, {transform_indices = @transform_2, window_bounds = array<i64: 1, 256>}, {transform_indices = @transform_3, window_bounds = array<i64: 8, 256>}]} {
    %c0 = arith.constant 0 : index
    %c0_0 = arith.constant 0 : index
    %0 = vector.load %arg2[%c0, %c0_0] : memref<32x1152xbf16, #tpu.memory_space<vmem>>, vector<32x1152xbf16>
    %c0_1 = arith.constant 0 : index
    %c0_2 = arith.constant 0 : index
    %1 = vector.load %arg3[%c0_1, %c0_2] : memref<1152x256xbf16, #tpu.memory_space<vmem>>, vector<1152x256xbf16>
    %cst = arith.constant dense<0.000000e+00> : vector<32x256xf32>
    %2 = tpu.matmul %0, %1, %cst {dimension_numbers = #tpu.dot_dimension_numbers<[1], [0], [0], [1], [0, 0, 1, 1], [], []>} : vector<32x1152xbf16>, vector<1152x256xbf16>, vector<32x256xf32> -> vector<32x256xf32>
    %3 = vector.extract_strided_slice %2 {offsets = [0, 0], sizes = [8, 256], strides = [1, 1]} : vector<32x256xf32> to vector<8x256xf32>
    %4 = vector.extract_strided_slice %2 {offsets = [8, 0], sizes = [8, 256], strides = [1, 1]} : vector<32x256xf32> to vector<8x256xf32>
    %5 = arith.maximumf %3, %4 : vector<8x256xf32>
    %6 = vector.extract_strided_slice %2 {offsets = [16, 0], sizes = [8, 256], strides = [1, 1]} : vector<32x256xf32> to vector<8x256xf32>
    %7 = vector.extract_strided_slice %2 {offsets = [24, 0], sizes = [8, 256], strides = [1, 1]} : vector<32x256xf32> to vector<8x256xf32>
    %8 = arith.maximumf %6, %7 : vector<8x256xf32>
    %9 = arith.maximumf %5, %8 : vector<8x256xf32>
    %c0_3 = arith.constant 0 : index
    %c0_4 = arith.constant 0 : index
    %10 = vector.load %arg4[%c0_3, %c0_4] : memref<1x256xf32, #tpu.memory_space<vmem>>, vector<1x256xf32>
    %11 = vector.broadcast %10 : vector<1x256xf32> to vector<8x256xf32>
    %12 = arith.addf %9, %11 : vector<8x256xf32>
    %cst_5 = arith.constant 0.000000e+00 : f32
    %13 = vector.broadcast %cst_5 : f32 to vector<8x256xf32>
    %14 = arith.maximumf %12, %13 : vector<8x256xf32>
    %15 = arith.truncf %14 : vector<8x256xf32> to vector<8x256xbf16>
    %c0_6 = arith.constant 0 : index
    %c0_7 = arith.constant 0 : index
    %16 = vector.load %arg5[%c0_6, %c0_7] : memref<8x256xbf16, #tpu.memory_space<vmem>>, vector<8x256xbf16>
    tpu.vector_store %arg5[%c0_6, %c0_7], %15 {strides = array<i32>} : memref<8x256xbf16, #tpu.memory_space<vmem>>, vector<8x256xbf16>,
    return
  }
  func.func @transform_0(%arg0: i32, %arg1: i32) -> (i32, i32) {
    %c0_i32 = arith.constant 0 : i32
    %c0_i32_0 = arith.constant 0 : i32
    return %arg0, %c0_i32 : i32, i32
  }
  func.func @transform_1(%arg0: i32, %arg1: i32) -> (i32, i32) {
    %c0_i32 = arith.constant 0 : i32
    %c0_i32_0 = arith.constant 0 : i32
    return %c0_i32, %arg1 : i32, i32
  }
  func.func @transform_2(%arg0: i32, %arg1: i32) -> (i32, i32) {
    %c0_i32 = arith.constant 0 : i32
    %c0_i32_0 = arith.constant 0 : i32
    return %c0_i32, %arg1 : i32, i32
  }
  func.func @transform_3(%arg0: i32, %arg1: i32) -> (i32, i32) {
    %c0_i32 = arith.constant 0 : i32
    return %arg0, %arg1 : i32, i32
  }
}

module attributes {stable_mosaic.version = 11 : i64} {
  func.func @classifier_kernel(%arg0: i32, %arg1: memref<8x512xbf16, #tpu.memory_space<vmem>>, %arg2: memref<512x512xbf16, #tpu.memory_space<vmem>>, %arg3: memref<1x512xf32, #tpu.memory_space<vmem>>, %arg4: memref<512x512xbf16, #tpu.memory_space<vmem>>, %arg5: memref<1x512xf32, #tpu.memory_space<vmem>>, %arg6: memref<512x128xbf16, #tpu.memory_space<vmem>>, %arg7: memref<1x128xf32, #tpu.memory_space<vmem>>, %arg8: memref<8x128xf32, #tpu.memory_space<vmem>>) attributes {dimension_semantics = [#tpu.dimension_semantics<parallel>], iteration_bounds = array<i64: 1>, scalar_prefetch = 0 : i64, scratch_operands = 0 : i64, tpu.core_type = #tpu.core_type<tc>, window_params = [{transform_indices = @transform_0, window_bounds = array<i64: 8, 512>}, {pipeline_mode = #tpu.pipeline_mode<synchronous>, transform_indices = @transform_1, window_bounds = array<i64: 512, 512>}, {pipeline_mode = #tpu.pipeline_mode<synchronous>, transform_indices = @transform_2, window_bounds = array<i64: 1, 512>}, {pipeline_mode = #tpu.pipeline_mode<synchronous>, transform_indices = @transform_3, window_bounds = array<i64: 512, 512>}, {pipeline_mode = #tpu.pipeline_mode<synchronous>, transform_indices = @transform_4, window_bounds = array<i64: 1, 512>}, {pipeline_mode = #tpu.pipeline_mode<synchronous>, transform_indices = @transform_5, window_bounds = array<i64: 512, 128>}, {pipeline_mode = #tpu.pipeline_mode<synchronous>, transform_indices = @transform_6, window_bounds = array<i64: 1, 128>}, {transform_indices = @transform_7, window_bounds = array<i64: 8, 128>}]} {
    %c0 = arith.constant 0 : index
    %c0_0 = arith.constant 0 : index
    %0 = vector.load %arg1[%c0, %c0_0] : memref<8x512xbf16, #tpu.memory_space<vmem>>, vector<8x512xbf16>
    %c0_1 = arith.constant 0 : index
    %c0_2 = arith.constant 0 : index
    %1 = vector.load %arg2[%c0_1, %c0_2] : memref<512x512xbf16, #tpu.memory_space<vmem>>, vector<512x512xbf16>
    %cst = arith.constant dense<0.000000e+00> : vector<8x512xf32>
    %2 = tpu.matmul %0, %1, %cst {dimension_numbers = #tpu.dot_dimension_numbers<[1], [0], [0], [1], [0, 0, 1, 1], [], []>} : vector<8x512xbf16>, vector<512x512xbf16>, vector<8x512xf32> -> vector<8x512xf32>
    %c0_3 = arith.constant 0 : index
    %c0_4 = arith.constant 0 : index
    %3 = vector.load %arg3[%c0_3, %c0_4] : memref<1x512xf32, #tpu.memory_space<vmem>>, vector<1x512xf32>
    %4 = vector.broadcast %3 : vector<1x512xf32> to vector<8x512xf32>
    %5 = arith.addf %2, %4 : vector<8x512xf32>
    %cst_5 = arith.constant 0.000000e+00 : f32
    %6 = vector.broadcast %cst_5 : f32 to vector<8x512xf32>
    %7 = arith.maximumf %5, %6 : vector<8x512xf32>
    %8 = arith.truncf %7 : vector<8x512xf32> to vector<8x512xbf16>
    %c0_6 = arith.constant 0 : index
    %c0_7 = arith.constant 0 : index
    %9 = vector.load %arg4[%c0_6, %c0_7] : memref<512x512xbf16, #tpu.memory_space<vmem>>, vector<512x512xbf16>
    %cst_8 = arith.constant dense<0.000000e+00> : vector<8x512xf32>
    %10 = tpu.matmul %8, %9, %cst_8 {dimension_numbers = #tpu.dot_dimension_numbers<[1], [0], [0], [1], [0, 0, 1, 1], [], []>} : vector<8x512xbf16>, vector<512x512xbf16>, vector<8x512xf32> -> vector<8x512xf32>
    %c0_9 = arith.constant 0 : index
    %c0_10 = arith.constant 0 : index
    %11 = vector.load %arg5[%c0_9, %c0_10] : memref<1x512xf32, #tpu.memory_space<vmem>>, vector<1x512xf32>
    %12 = vector.broadcast %11 : vector<1x512xf32> to vector<8x512xf32>
    %13 = arith.addf %10, %12 : vector<8x512xf32>
    %cst_11 = arith.constant 0.000000e+00 : f32
    %14 = vector.broadcast %cst_11 : f32 to vector<8x512xf32>
    %15 = arith.maximumf %13, %14 : vector<8x512xf32>
    %16 = arith.truncf %15 : vector<8x512xf32> to vector<8x512xbf16>
    %c0_12 = arith.constant 0 : index
    %c0_13 = arith.constant 0 : index
    %17 = vector.load %arg6[%c0_12, %c0_13] : memref<512x128xbf16, #tpu.memory_space<vmem>>, vector<512x128xbf16>
    %cst_14 = arith.constant dense<0.000000e+00> : vector<8x128xf32>
    %18 = tpu.matmul %16, %17, %cst_14 {dimension_numbers = #tpu.dot_dimension_numbers<[1], [0], [0], [1], [0, 0, 1, 1], [], []>} : vector<8x512xbf16>, vector<512x128xbf16>, vector<8x128xf32> -> vector<8x128xf32>
    %c0_15 = arith.constant 0 : index
    %c0_16 = arith.constant 0 : index
    %19 = vector.load %arg7[%c0_15, %c0_16] : memref<1x128xf32, #tpu.memory_space<vmem>>, vector<1x128xf32>
    %20 = vector.broadcast %19 : vector<1x128xf32> to vector<8x128xf32>
    %21 = arith.addf %18, %20 : vector<8x128xf32>
    %c0_17 = arith.constant 0 : index
    %c0_18 = arith.constant 0 : index
    %22 = vector.load %arg8[%c0_17, %c0_18] : memref<8x128xf32, #tpu.memory_space<vmem>>, vector<8x128xf32>
    tpu.vector_store %arg8[%c0_17, %c0_18], %21 {strides = array<i32>} : memref<8x128xf32, #tpu.memory_space<vmem>>, vector<8x128xf32>,
    return
  }
  func.func @transform_0(%arg0: i32) -> (i32, i32) {
    %c0_i32 = arith.constant 0 : i32
    %c0_i32_0 = arith.constant 0 : i32
    return %arg0, %c0_i32 : i32, i32
  }
  func.func @transform_1(%arg0: i32) -> (i32, i32) {
    %c0_i32 = arith.constant 0 : i32
    %c0_i32_0 = arith.constant 0 : i32
    %c0_i32_1 = arith.constant 0 : i32
    return %c0_i32, %c0_i32_0 : i32, i32
  }
  func.func @transform_2(%arg0: i32) -> (i32, i32) {
    %c0_i32 = arith.constant 0 : i32
    %c0_i32_0 = arith.constant 0 : i32
    %c0_i32_1 = arith.constant 0 : i32
    return %c0_i32, %c0_i32_0 : i32, i32
  }
  func.func @transform_3(%arg0: i32) -> (i32, i32) {
    %c0_i32 = arith.constant 0 : i32
    %c0_i32_0 = arith.constant 0 : i32
    %c0_i32_1 = arith.constant 0 : i32
    return %c0_i32, %c0_i32_0 : i32, i32
  }
  func.func @transform_4(%arg0: i32) -> (i32, i32) {
    %c0_i32 = arith.constant 0 : i32
    %c0_i32_0 = arith.constant 0 : i32
    %c0_i32_1 = arith.constant 0 : i32
    return %c0_i32, %c0_i32_0 : i32, i32
  }
  func.func @transform_5(%arg0: i32) -> (i32, i32) {
    %c0_i32 = arith.constant 0 : i32
    %c0_i32_0 = arith.constant 0 : i32
    %c0_i32_1 = arith.constant 0 : i32
    return %c0_i32, %c0_i32_0 : i32, i32
  }
  func.func @transform_6(%arg0: i32) -> (i32, i32) {
    %c0_i32 = arith.constant 0 : i32
    %c0_i32_0 = arith.constant 0 : i32
    %c0_i32_1 = arith.constant 0 : i32
    return %c0_i32, %c0_i32_0 : i32, i32
  }
  func.func @transform_7(%arg0: i32) -> (i32, i32) {
    %c0_i32 = arith.constant 0 : i32
    %c0_i32_0 = arith.constant 0 : i32
    return %arg0, %c0_i32 : i32, i32
  }
}

</mosaic_0001>

<llo_original>
// kernel: vgg_forward.4
$region0: #{vgg_forward.4}
  #allocation0 [shape = 'u32[]', space=smem, size = 0x4, offset = 0x4, fixed_abs, tag = 'smem constant byte address 0x4 - core index']
  #allocation1 [shape = 'u32[144,128]{1,0:T(1,128)}', space=vmem, size = 0x12000, scoped, tag = 'internal scratch']
  %s0 = inlined_call_operand.vmem [shape: bf16[128,32], index: 0, kind: input, shape index: {}]
  %s1 = inlined_call_operand.hbm [shape: bf16[32,64], index: 1, kind: input, shape index: {}]
  %s2 = inlined_call_operand.hbm [shape: f32[1,64], index: 2, kind: input, shape index: {}]
  %s3 = inlined_call_operand.vmem [shape: bf16[32,64], index: 3, kind: output, shape index: {}]
  %s4 = sld [smem:[#allocation0]]
  $region30: #{vgg_forward.4} parent=0
    _
  %s6 = ssub.s32 1, %s4
  %s7 = scalar_select 0, %s6, %s4
  $region1: #{vgg_forward.4} parent=0
    #allocation2 [shape = 'u8[8192]{0}', space=vmem, size = 0x2000, scoped, tag = 'input window, operand 1, single buffered']
    #allocation3 [shape = 's32[1]{0}', space=sflag, size = 0x4, scoped, tag = 'scoped memory for vgg_forward.4']
    #allocation4 [shape = 'u8[512]{0}', space=vmem, size = 0x400, scoped, tag = 'input window, operand 2, single buffered']
    #allocation5 [shape = 's32[1]{0}', space=sflag, size = 0x4, scoped, tag = 'scoped memory for vgg_forward.4']
    %8 = vsyncpa [#allocation3], 0
    %9 = vsyncpa [#allocation5], 0
    // Predicated region
    $region2: #{vgg_forward.4} parent=1 // pred_check
      _
    $region3: #{vgg_forward.4} parent=1 // pred_check_branch
      %11 = sbr.rel (0) target = $region5
    $region4: #{vgg_forward.4} parent=1 // pred_region
      _
    $region5: #{vgg_forward.4} parent=1 // pred_fallthru
      _
    // Predicated region
    $region6: #{vgg_forward.4} parent=1 // pred_check
      _
    $region7: #{vgg_forward.4} parent=1 // pred_check_branch
      %13 = sbr.rel (0) target = $region9
    $region8: #{vgg_forward.4} parent=1 // pred_region
      %s15 = ssub.s32 256, 256
      %16 = vsyncadd [#allocation3], %s15
      %s17 = sshll.u32 [#allocation2], 4
      %s18 = int_to_ptr.vmem [resolvable:$true] %s17
      %23 = dma.hbm_to_vmem [thread:$0]  %s1, 256, %s18, [#allocation3], 64, 64, 4
    $region9: #{vgg_forward.4} parent=1 // pred_fallthru
      _
    // Predicated region
    $region10: #{vgg_forward.4} parent=1 // pred_check
      _
    $region11: #{vgg_forward.4} parent=1 // pred_check_branch
      %25 = sbr.rel (0) target = $region13
    $region12: #{vgg_forward.4} parent=1 // pred_region
      %s27 = ssub.s32 16, 16
      %28 = vsyncadd [#allocation5], %s27
      %s30 = sshll.u32 [#allocation4], 4
      %s31 = int_to_ptr.vmem [resolvable:$true] %s30
      %33 = dma.hbm_to_vmem [thread:$0]  %s2, 16, %s31, [#allocation5]
    $region13: #{vgg_forward.4} parent=1 // pred_fallthru
      _
    // Predicated region
    $region14: #{vgg_forward.4} parent=1 // pred_check
      _
    $region15: #{vgg_forward.4} parent=1 // pred_check_branch
      %35 = sbr.rel (0) target = $region17
    $region16: #{vgg_forward.4} parent=1 // pred_region
      %36 = dma.done [#allocation3], 256
    $region17: #{vgg_forward.4} parent=1 // pred_fallthru
      _
    // Predicated region
    $region18: #{vgg_forward.4} parent=1 // pred_check
      _
    $region19: #{vgg_forward.4} parent=1 // pred_check_branch
      %38 = sbr.rel (0) target = $region21
    $region20: #{vgg_forward.4} parent=1 // pred_region
      %39 = dma.done [#allocation5], 16
    $region21: #{vgg_forward.4} parent=1 // pred_fallthru
      _
    %v41 = vld [vmem:[%s0] sm:$0xf]
    %v42 = vld [vmem:[%s0 + $0x4] sm:$0xf]
    %v43 = vld [vmem:[%s0 + $0x8] sm:$0xf]
    %v44 = vld [vmem:[%s0 + $0xc] sm:$0xf]
    %v45 = vld [vmem:[%s0 + $0x10] sm:$0xf]
    %v46 = vld [vmem:[%s0 + $0x14] sm:$0xf]
    %v47 = vld [vmem:[%s0 + $0x18] sm:$0xf]
    %v48 = vld [vmem:[%s0 + $0x1c] sm:$0xf]
    %v49 = vld [vmem:[%s0 + $0x20] sm:$0xf]
    %v50 = vld [vmem:[%s0 + $0x24] sm:$0xf]
    %v51 = vld [vmem:[%s0 + $0x28] sm:$0xf]
    %v52 = vld [vmem:[%s0 + $0x2c] sm:$0xf]
    %v53 = vld [vmem:[%s0 + $0x30] sm:$0xf]
    %v54 = vld [vmem:[%s0 + $0x34] sm:$0xf]
    %v55 = vld [vmem:[%s0 + $0x38] sm:$0xf]
    %v56 = vld [vmem:[%s0 + $0x3c] sm:$0xf]
    %v57 = vld [vmem:[#allocation2] sm:$0xf]
    %v58 = vld [vmem:[#allocation2 + $0x4] sm:$0xf]
    %v59 = vld [vmem:[#allocation2 + $0x8] sm:$0xf]
    %v60 = vld [vmem:[#allocation2 + $0xc] sm:$0xf]
    %v77 = vunpack.c.l.b16 %v41
    %v78 = vunpack.c.l.b16 %v42
    %v79 = vunpack.c.l.b16 %v43
    %v80 = vunpack.c.l.b16 %v44
    %v81 = vunpack.c.l.b16 %v45
    %v82 = vunpack.c.l.b16 %v46
    %v83 = vunpack.c.l.b16 %v47
    %v84 = vunpack.c.l.b16 %v48
    %v85 = vunpack.c.l.b16 %v49
    %v86 = vunpack.c.l.b16 %v50
    %v87 = vunpack.c.l.b16 %v51
    %v88 = vunpack.c.l.b16 %v52
    %v89 = vunpack.c.l.b16 %v53
    %v90 = vunpack.c.l.b16 %v54
    %v91 = vunpack.c.l.b16 %v55
    %v92 = vunpack.c.l.b16 %v56
    %v93 = vpack.c.b16 %v78, %v77
    %v94 = vpack.c.b16 %v80, %v79
    %v95 = vpack.c.b16 %v82, %v81
    %v96 = vpack.c.b16 %v84, %v83
    %v97 = vpack.c.b16 %v86, %v85
    %v98 = vpack.c.b16 %v88, %v87
    %v99 = vpack.c.b16 %v90, %v89
    %v100 = vpack.c.b16 %v92, %v91
    %v105 = vunpack.c.l.b16 %v57
    %v106 = vunpack.c.l.b16 %v58
    %v107 = vunpack.c.l.b16 %v59
    %v108 = vunpack.c.l.b16 %v60
    %v109 = vpack.c.b16 %v106, %v105
    %v110 = vpack.c.b16 %v108, %v107
    %vm113 = vcmask 261120
    %v115 = vsel %vm113, %v93, 0
    %v118 = vsel %vm113, %v94, 0
    %v121 = vsel %vm113, %v95, 0
    %v124 = vsel %vm113, %v96, 0
    %v127 = vsel %vm113, %v97, 0
    %v130 = vsel %vm113, %v98, 0
    %v133 = vsel %vm113, %v99, 0
    %v136 = vsel %vm113, %v100, 0
    %138 = vmatprep.subr.bf16.mxu0 0
    %139 = vmatpush1.bf16.msra.mxu0 0
    %140 = vmatprep.subr.bf16.mxu0 0
    %141 = vmatpush1.bf16.msra.mxu0 0
    %142 = vmatprep.subr.bf16.mxu0 0
    %143 = vmatpush1.bf16.msra.mxu0 0
    %144 = vmatprep.subr.bf16.mxu0 0
    %145 = vmatpush1.bf16.msra.mxu0 0
    %146 = vmatprep.subr.bf16.mxu0 0
    %147 = vmatpush1.bf16.msra.mxu0 0
    %148 = vmatprep.subr.bf16.mxu0 0
    %149 = vmatpush1.bf16.msra.mxu0 0
    %150 = vmatprep.subr.bf16.mxu0 0
    %151 = vmatpush1.bf16.msra.mxu0 %v110
    %152 = vmatprep.subr.bf16.mxu0 0
    %153 = vmatpush1.bf16.msra.mxu0 %v109
    %154 = vmatprep.subr.bf16.mxu0 0
    %155 = vmatpush2.bf16.msra.mxu0 0
    %156 = vmatprep.subr.bf16.mxu0 0
    %157 = vmatpush2.bf16.msra.mxu0 0
    %158 = vmatprep.subr.bf16.mxu0 0
    %159 = vmatpush2.bf16.msra.mxu0 0
    %160 = vmatprep.subr.bf16.mxu0 0
    %161 = vmatpush2.bf16.msra.mxu0 0
    %162 = vmatprep.subr.bf16.mxu0 0
    %163 = vmatpush2.bf16.msra.mxu0 0
    %164 = vmatprep.subr.bf16.mxu0 0
    %165 = vmatpush2.bf16.msra.mxu0 0
    %166 = vmatprep.subr.bf16.mxu0 0
    %167 = vmatpush2.bf16.msra.mxu0 0
    %168 = vmatprep.subr.bf16.mxu0 0
    %169 = vmatpush2.bf16.msra.mxu0 0
    %170 = vmatprep.mubr.bf16.mxu0 0
    %171 = vmatmul.mubr.bf16.gmra.mxu0 %v115
    %v172 = vpop.f32.mrf.mxu0
    %v173 = vadd.f32 0.0, %v172
    %v174 = vpop.f32.mrf.mxu0
    %v175 = vpop.f32.mrf.mxu0
    %v176 = vadd.f32 0.0, %v175
    %v177 = vpop.f32.mrf.mxu0
    %178 = vmatprep.mubr.bf16.mxu0 0
    %179 = vmatmul.mubr.bf16.gmra.mxu0 %v118
    %v180 = vpop.f32.mrf.mxu0
    %v181 = vadd.f32 0.0, %v180
    %v182 = vpop.f32.mrf.mxu0
    %v183 = vpop.f32.mrf.mxu0
    %v184 = vadd.f32 0.0, %v183
    %v185 = vpop.f32.mrf.mxu0
    %186 = vmatprep.mubr.bf16.mxu0 0
    %187 = vmatmul.mubr.bf16.gmra.mxu0 %v121
    %v188 = vpop.f32.mrf.mxu0
    %v189 = vadd.f32 0.0, %v188
    %v190 = vpop.f32.mrf.mxu0
    %v191 = vpop.f32.mrf.mxu0
    %v192 = vadd.f32 0.0, %v191
    %v193 = vpop.f32.mrf.mxu0
    %194 = vmatprep.mubr.bf16.mxu0 0
    %195 = vmatmul.mubr.bf16.gmra.mxu0 %v124
    %v196 = vpop.f32.mrf.mxu0
    %v197 = vadd.f32 0.0, %v196
    %v198 = vpop.f32.mrf.mxu0
    %v199 = vpop.f32.mrf.mxu0
    %v200 = vadd.f32 0.0, %v199
    %v201 = vpop.f32.mrf.mxu0
    %202 = vmatprep.mubr.bf16.mxu0 0
    %203 = vmatmul.mubr.bf16.gmra.mxu0 %v127
    %v204 = vpop.f32.mrf.mxu0
    %v205 = vadd.f32 0.0, %v204
    %v206 = vpop.f32.mrf.mxu0
    %v207 = vpop.f32.mrf.mxu0
    %v208 = vadd.f32 0.0, %v207
    %v209 = vpop.f32.mrf.mxu0
    %210 = vmatprep.mubr.bf16.mxu0 0
    %211 = vmatmul.mubr.bf16.gmra.mxu0 %v130
    %v212 = vpop.f32.mrf.mxu0
    %v213 = vadd.f32 0.0, %v212
    %v214 = vpop.f32.mrf.mxu0
    %v215 = vpop.f32.mrf.mxu0
    %v216 = vadd.f32 0.0, %v215
    %v217 = vpop.f32.mrf.mxu0
    %218 = vmatprep.mubr.bf16.mxu0 0
    %219 = vmatmul.mubr.bf16.gmra.mxu0 %v133
    %v220 = vpop.f32.mrf.mxu0
    %v221 = vadd.f32 0.0, %v220
    %v222 = vpop.f32.mrf.mxu0
    %v223 = vpop.f32.mrf.mxu0
    %v224 = vadd.f32 0.0, %v223
    %v225 = vpop.f32.mrf.mxu0
    %226 = vmatprep.mubr.bf16.mxu0 0
    %227 = vmatmul.mubr.bf16.gmra.mxu0 %v136
    %v228 = vpop.f32.mrf.mxu0
    %v229 = vadd.f32 0.0, %v228
    %v230 = vpop.f32.mrf.mxu0
    %v231 = vpop.f32.mrf.mxu0
    %v232 = vadd.f32 0.0, %v231
    %v233 = vpop.f32.mrf.mxu0
    %234 = vdwg.mxu0
    %v235 = vmax.f32 %v173, %v189
    %v236 = vmax.f32 %v176, %v192
    %v237 = vmax.f32 %v181, %v197
    %v238 = vmax.f32 %v184, %v200
    %v239 = vmax.f32 %v205, %v221
    %v240 = vmax.f32 %v208, %v224
    %v241 = vmax.f32 %v213, %v229
    %v242 = vmax.f32 %v216, %v232
    %v243 = vmax.f32 %v235, %v239
    %v244 = vmax.f32 %v236, %v240
    %v245 = vmax.f32 %v237, %v241
    %v246 = vmax.f32 %v238, %v242
    %v247 = vld [vmem:[#allocation4] sm:$0x1]
    %v249 = vlaneseq
    %v250 = vshrl.u32 %v249, 7
    %v251 = vsub.s32 0, %v250
    %v252 = vrot.slane %v247, %v251
    %v254 = vadd.f32 %v243, %v252
    %v255 = vadd.f32 %v244, %v252
    %v256 = vadd.f32 %v245, %v252
    %v257 = vadd.f32 %v246, %v252
    %v258 = vmax.f32 %v254, 0.0
    %v259 = vmax.f32 %v255, 0.0
    %v260 = vmax.f32 %v256, 0.0
    %v261 = vmax.f32 %v257, 0.0
    %v262 = vpack.c.bf16 %v259, %v258
    %v263 = vpack.c.bf16 %v261, %v260
    %v266 = vunpack.c.l.b16 %v262
    %v267 = vunpack.c.h.b16 %v262
    %v268 = vunpack.c.l.b16 %v263
    %v269 = vunpack.c.h.b16 %v263
    %v270 = vpack.c.b16 %v266, %v266
    %v271 = vpack.c.b16 %v267, %v267
    %v272 = vpack.c.b16 %v268, %v268
    %v273 = vpack.c.b16 %v269, %v269
    %vm278 = vcmask 519168
    %279 = vst.msk [vmem:[%s3] sm:$0xf] %vm278, %v270
    %280 = vst.msk [vmem:[%s3 + $0x4] sm:$0xf] %vm278, %v271
    %281 = vst.msk [vmem:[%s3 + $0x8] sm:$0xf] %vm278, %v272
    %282 = vst.msk [vmem:[%s3 + $0xc] sm:$0xf] %vm278, %v273
    // Predicated region
    $region22: #{vgg_forward.4} parent=1 // pred_check
      _
    $region23: #{vgg_forward.4} parent=1 // pred_check_branch
      %284 = sbr.rel (0) target = $region25
    $region24: #{vgg_forward.4} parent=1 // pred_region
      _
    $region25: #{vgg_forward.4} parent=1 // pred_fallthru
      _
    // Predicated region
    $region26: #{vgg_forward.4} parent=1 // pred_check
      _
    $region27: #{vgg_forward.4} parent=1 // pred_check_branch
      %286 = sbr.rel (0) target = $region29
    $region28: #{vgg_forward.4} parent=1 // pred_region
      _
    $region29: #{vgg_forward.4} parent=1 // pred_fallthru
      _
    %287 = vsyncpa [#allocation3], 1
    %288 = vsyncpa [#allocation5], 1

// kernel: vgg_forward.5
$region0: #{vgg_forward.5}
  #allocation0 [shape = 'u32[]', space=smem, size = 0x4, offset = 0x4, fixed_abs, tag = 'smem constant byte address 0x4 - core index']
  #allocation1 [shape = 'u32[144,128]{1,0:T(1,128)}', space=vmem, size = 0x12000, scoped, tag = 'internal scratch']
  %s0 = inlined_call_operand.vmem [shape: bf16[32,576], index: 0, kind: input, shape index: {}]
  %s1 = inlined_call_operand.vmem [shape: bf16[576,128], index: 1, kind: input, shape index: {}]
  %s2 = inlined_call_operand.vmem [shape: f32[1,128], index: 2, kind: input, shape index: {}]
  %s3 = inlined_call_operand.vmem [shape: bf16[8,128], index: 3, kind: output, shape index: {}]
  %s4 = sld [smem:[#allocation0]]
  $region22: #{vgg_forward.5} parent=0
    _
  %s6 = ssub.s32 1, %s4
  %s7 = scalar_select 0, %s6, %s4
  // Predicated region
  $region2: #{vgg_forward.5} parent=0 // pred_check
    _
  $region3: #{vgg_forward.5} parent=0 // pred_check_branch
    %9 = sbr.rel (0) target = $region5
  $region4: #{vgg_forward.5} parent=0 // pred_region
    _
  $region5: #{vgg_forward.5} parent=0 // pred_fallthru
    _
  // Predicated region
  $region6: #{vgg_forward.5} parent=0 // pred_check
    _
  $region7: #{vgg_forward.5} parent=0 // pred_check_branch
    %11 = sbr.rel (0) target = $region9
  $region8: #{vgg_forward.5} parent=0 // pred_region
    _
  $region9: #{vgg_forward.5} parent=0 // pred_fallthru
    _
  // Predicated region
  $region10: #{vgg_forward.5} parent=0 // pred_check
    _
  $region11: #{vgg_forward.5} parent=0 // pred_check_branch
    %13 = sbr.rel (0) target = $region13
  $region12: #{vgg_forward.5} parent=0 // pred_region
    _
  $region13: #{vgg_forward.5} parent=0 // pred_fallthru
    _
  %v15 = vld [vmem:[%s0] sm:$0xff]
  %v16 = vld [vmem:[%s0 + $0x8] sm:$0xff]
  %v17 = vld [vmem:[%s0 + $0x10] sm:$0xf]
  %v18 = vld [vmem:[%s0 + $0x14] sm:$0xff]
  %v19 = vld [vmem:[%s0 + $0x1c] sm:$0xff]
  %v20 = vld [vmem:[%s0 + $0x24] sm:$0xf]
  %v21 = vld [vmem:[%s0 + $0x28] sm:$0xff]
  %v22 = vld [vmem:[%s0 + $0x30] sm:$0xff]
  %v23 = vld [vmem:[%s0 + $0x38] sm:$0xf]
  %v24 = vld [vmem:[%s0 + $0x3c] sm:$0xff]
  %v25 = vld [vmem:[%s0 + $0x44] sm:$0xff]
  %v26 = vld [vmem:[%s0 + $0x4c] sm:$0xf]
  %v27 = vld [vmem:[%s1] sm:$0xf]
  %v28 = vld [vmem:[%s1 + $0x4] sm:$0xf]
  %v29 = vld [vmem:[%s1 + $0x8] sm:$0xf]
  %v30 = vld [vmem:[%s1 + $0xc] sm:$0xf]
  %v31 = vld [vmem:[%s1 + $0x10] sm:$0xf]
  %v32 = vld [vmem:[%s1 + $0x14] sm:$0xf]
  %v33 = vld [vmem:[%s1 + $0x18] sm:$0xf]
  %v34 = vld [vmem:[%s1 + $0x1c] sm:$0xf]
  %v35 = vld [vmem:[%s1 + $0x20] sm:$0xf]
  %v36 = vld [vmem:[%s1 + $0x24] sm:$0xf]
  %v37 = vld [vmem:[%s1 + $0x28] sm:$0xf]
  %v38 = vld [vmem:[%s1 + $0x2c] sm:$0xf]
  %v39 = vld [vmem:[%s1 + $0x30] sm:$0xf]
  %v40 = vld [vmem:[%s1 + $0x34] sm:$0xf]
  %v41 = vld [vmem:[%s1 + $0x38] sm:$0xf]
  %v42 = vld [vmem:[%s1 + $0x3c] sm:$0xf]
  %v43 = vld [vmem:[%s1 + $0x40] sm:$0xf]
  %v44 = vld [vmem:[%s1 + $0x44] sm:$0xf]
  %v45 = vld [vmem:[%s1 + $0x48] sm:$0xf]
  %v46 = vld [vmem:[%s1 + $0x4c] sm:$0xf]
  %v47 = vld [vmem:[%s1 + $0x50] sm:$0xf]
  %v48 = vld [vmem:[%s1 + $0x54] sm:$0xf]
  %v49 = vld [vmem:[%s1 + $0x58] sm:$0xf]
  %v50 = vld [vmem:[%s1 + $0x5c] sm:$0xf]
  %v51 = vld [vmem:[%s1 + $0x60] sm:$0xf]
  %v52 = vld [vmem:[%s1 + $0x64] sm:$0xf]
  %v53 = vld [vmem:[%s1 + $0x68] sm:$0xf]
  %v54 = vld [vmem:[%s1 + $0x6c] sm:$0xf]
  %v55 = vld [vmem:[%s1 + $0x70] sm:$0xf]
  %v56 = vld [vmem:[%s1 + $0x74] sm:$0xf]
  %v57 = vld [vmem:[%s1 + $0x78] sm:$0xf]
  %v58 = vld [vmem:[%s1 + $0x7c] sm:$0xf]
  %v59 = vld [vmem:[%s1 + $0x80] sm:$0xf]
  %v60 = vld [vmem:[%s1 + $0x84] sm:$0xf]
  %v61 = vld [vmem:[%s1 + $0x88] sm:$0xf]
  %v62 = vld [vmem:[%s1 + $0x8c] sm:$0xf]
  %v63 = vld [vmem:[%s1 + $0x90] sm:$0xf]
  %v64 = vld [vmem:[%s1 + $0x94] sm:$0xf]
  %v65 = vld [vmem:[%s1 + $0x98] sm:$0xf]
  %v66 = vld [vmem:[%s1 + $0x9c] sm:$0xf]
  %v67 = vld [vmem:[%s1 + $0xa0] sm:$0xf]
  %v68 = vld [vmem:[%s1 + $0xa4] sm:$0xf]
  %v69 = vld [vmem:[%s1 + $0xa8] sm:$0xf]
  %v70 = vld [vmem:[%s1 + $0xac] sm:$0xf]
  %v71 = vld [vmem:[%s1 + $0xb0] sm:$0xf]
  %v72 = vld [vmem:[%s1 + $0xb4] sm:$0xf]
  %v73 = vld [vmem:[%s1 + $0xb8] sm:$0xf]
  %v74 = vld [vmem:[%s1 + $0xbc] sm:$0xf]
  %v75 = vld [vmem:[%s1 + $0xc0] sm:$0xf]
  %v76 = vld [vmem:[%s1 + $0xc4] sm:$0xf]
  %v77 = vld [vmem:[%s1 + $0xc8] sm:$0xf]
  %v78 = vld [vmem:[%s1 + $0xcc] sm:$0xf]
  %v79 = vld [vmem:[%s1 + $0xd0] sm:$0xf]
  %v80 = vld [vmem:[%s1 + $0xd4] sm:$0xf]
  %v81 = vld [vmem:[%s1 + $0xd8] sm:$0xf]
  %v82 = vld [vmem:[%s1 + $0xdc] sm:$0xf]
  %v83 = vld [vmem:[%s1 + $0xe0] sm:$0xf]
  %v84 = vld [vmem:[%s1 + $0xe4] sm:$0xf]
  %v85 = vld [vmem:[%s1 + $0xe8] sm:$0xf]
  %v86 = vld [vmem:[%s1 + $0xec] sm:$0xf]
  %v87 = vld [vmem:[%s1 + $0xf0] sm:$0xf]
  %v88 = vld [vmem:[%s1 + $0xf4] sm:$0xf]
  %v89 = vld [vmem:[%s1 + $0xf8] sm:$0xf]
  %v90 = vld [vmem:[%s1 + $0xfc] sm:$0xf]
  %v91 = vld [vmem:[%s1 + $0x100] sm:$0xf]
  %v92 = vld [vmem:[%s1 + $0x104] sm:$0xf]
  %v93 = vld [vmem:[%s1 + $0x108] sm:$0xf]
  %v94 = vld [vmem:[%s1 + $0x10c] sm:$0xf]
  %v95 = vld [vmem:[%s1 + $0x110] sm:$0xf]
  %v96 = vld [vmem:[%s1 + $0x114] sm:$0xf]
  %v97 = vld [vmem:[%s1 + $0x118] sm:$0xf]
  %v98 = vld [vmem:[%s1 + $0x11c] sm:$0xf]
  %v111 = vunpack.c.l.b16 %v15
  %v112 = vunpack.c.h.b16 %v15
  %v113 = vunpack.c.l.b16 %v16
  %v114 = vunpack.c.h.b16 %v16
  %v115 = vunpack.c.l.b16 %v17
  %v116 = vunpack.c.l.b16 %v18
  %v117 = vunpack.c.h.b16 %v18
  %v118 = vunpack.c.l.b16 %v19
  %v119 = vunpack.c.h.b16 %v19
  %v120 = vunpack.c.l.b16 %v20
  %v121 = vunpack.c.l.b16 %v21
  %v122 = vunpack.c.h.b16 %v21
  %v123 = vunpack.c.l.b16 %v22
  %v124 = vunpack.c.h.b16 %v22
  %v125 = vunpack.c.l.b16 %v23
  %v126 = vunpack.c.l.b16 %v24
  %v127 = vunpack.c.h.b16 %v24
  %v128 = vunpack.c.l.b16 %v25
  %v129 = vunpack.c.h.b16 %v25
  %v130 = vunpack.c.l.b16 %v26
  %v131 = vpack.c.b16 %v116, %v111
  %v132 = vpack.c.b16 %v117, %v112
  %v133 = vpack.c.b16 %v118, %v113
  %v134 = vpack.c.b16 %v119, %v114
  %v135 = vpack.c.b16 %v120, %v115
  %v136 = vpack.c.b16 %v126, %v121
  %v137 = vpack.c.b16 %v127, %v122
  %v138 = vpack.c.b16 %v128, %v123
  %v139 = vpack.c.b16 %v129, %v124
  %v140 = vpack.c.b16 %v130, %v125
  %v221 = vunpack.c.l.b16 %v27
  %v222 = vunpack.c.l.b16 %v28
  %v223 = vunpack.c.l.b16 %v29
  %v224 = vunpack.c.l.b16 %v30
  %v225 = vunpack.c.l.b16 %v31
  %v226 = vunpack.c.l.b16 %v32
  %v227 = vunpack.c.l.b16 %v33
  %v228 = vunpack.c.l.b16 %v34
  %v229 = vunpack.c.l.b16 %v35
  %v230 = vunpack.c.l.b16 %v36
  %v231 = vunpack.c.l.b16 %v37
  %v232 = vunpack.c.l.b16 %v38
  %v233 = vunpack.c.l.b16 %v39
  %v234 = vunpack.c.l.b16 %v40
  %v235 = vunpack.c.l.b16 %v41
  %v236 = vunpack.c.l.b16 %v42
  %v237 = vunpack.c.l.b16 %v43
  %v238 = vunpack.c.l.b16 %v44
  %v239 = vunpack.c.l.b16 %v45
  %v240 = vunpack.c.l.b16 %v46
  %v241 = vunpack.c.l.b16 %v47
  %v242 = vunpack.c.l.b16 %v48
  %v243 = vunpack.c.l.b16 %v49
  %v244 = vunpack.c.l.b16 %v50
  %v245 = vunpack.c.l.b16 %v51
  %v246 = vunpack.c.l.b16 %v52
  %v247 = vunpack.c.l.b16 %v53
  %v248 = vunpack.c.l.b16 %v54
  %v249 = vunpack.c.l.b16 %v55
  %v250 = vunpack.c.l.b16 %v56
  %v251 = vunpack.c.l.b16 %v57
  %v252 = vunpack.c.l.b16 %v58
  %v253 = vunpack.c.l.b16 %v59
  %v254 = vunpack.c.l.b16 %v60
  %v255 = vunpack.c.l.b16 %v61
  %v256 = vunpack.c.l.b16 %v62
  %v257 = vunpack.c.l.b16 %v63
  %v258 = vunpack.c.l.b16 %v64
  %v259 = vunpack.c.l.b16 %v65
  %v260 = vunpack.c.l.b16 %v66
  %v261 = vunpack.c.l.b16 %v67
  %v262 = vunpack.c.l.b16 %v68
  %v263 = vunpack.c.l.b16 %v69
  %v264 = vunpack.c.l.b16 %v70
  %v265 = vunpack.c.l.b16 %v71
  %v266 = vunpack.c.l.b16 %v72
  %v267 = vunpack.c.l.b16 %v73
  %v268 = vunpack.c.l.b16 %v74
  %v269 = vunpack.c.l.b16 %v75
  %v270 = vunpack.c.l.b16 %v76
  %v271 = vunpack.c.l.b16 %v77
  %v272 = vunpack.c.l.b16 %v78
  %v273 = vunpack.c.l.b16 %v79
  %v274 = vunpack.c.l.b16 %v80
  %v275 = vunpack.c.l.b16 %v81
  %v276 = vunpack.c.l.b16 %v82
  %v277 = vunpack.c.l.b16 %v83
  %v278 = vunpack.c.l.b16 %v84
  %v279 = vunpack.c.l.b16 %v85
  %v280 = vunpack.c.l.b16 %v86
  %v281 = vunpack.c.l.b16 %v87
  %v282 = vunpack.c.l.b16 %v88
  %v283 = vunpack.c.l.b16 %v89
  %v284 = vunpack.c.l.b16 %v90
  %v285 = vunpack.c.l.b16 %v91
  %v286 = vunpack.c.l.b16 %v92
  %v287 = vunpack.c.l.b16 %v93
  %v288 = vunpack.c.l.b16 %v94
  %v289 = vunpack.c.l.b16 %v95
  %v290 = vunpack.c.l.b16 %v96
  %v291 = vunpack.c.l.b16 %v97
  %v292 = vunpack.c.l.b16 %v98
  %v293 = vpack.c.b16 %v222, %v221
  %v294 = vpack.c.b16 %v224, %v223
  %v295 = vpack.c.b16 %v226, %v225
  %v296 = vpack.c.b16 %v228, %v227
  %v297 = vpack.c.b16 %v230, %v229
  %v298 = vpack.c.b16 %v232, %v231
  %v299 = vpack.c.b16 %v234, %v233
  %v300 = vpack.c.b16 %v236, %v235
  %v301 = vpack.c.b16 %v238, %v237
  %v302 = vpack.c.b16 %v240, %v239
  %v303 = vpack.c.b16 %v242, %v241
  %v304 = vpack.c.b16 %v244, %v243
  %v305 = vpack.c.b16 %v246, %v245
  %v306 = vpack.c.b16 %v248, %v247
  %v307 = vpack.c.b16 %v250, %v249
  %v308 = vpack.c.b16 %v252, %v251
  %v309 = vpack.c.b16 %v254, %v253
  %v310 = vpack.c.b16 %v256, %v255
  %v311 = vpack.c.b16 %v258, %v257
  %v312 = vpack.c.b16 %v260, %v259
  %v313 = vpack.c.b16 %v262, %v261
  %v314 = vpack.c.b16 %v264, %v263
  %v315 = vpack.c.b16 %v266, %v265
  %v316 = vpack.c.b16 %v268, %v267
  %v317 = vpack.c.b16 %v270, %v269
  %v318 = vpack.c.b16 %v272, %v271
  %v319 = vpack.c.b16 %v274, %v273
  %v320 = vpack.c.b16 %v276, %v275
  %v321 = vpack.c.b16 %v278, %v277
  %v322 = vpack.c.b16 %v280, %v279
  %v323 = vpack.c.b16 %v282, %v281
  %v324 = vpack.c.b16 %v284, %v283
  %v325 = vpack.c.b16 %v286, %v285
  %v326 = vpack.c.b16 %v288, %v287
  %v327 = vpack.c.b16 %v290, %v289
  %v328 = vpack.c.b16 %v292, %v291
  %vm365 = vcmask 523264
  %v367 = vsel %vm365, %v135, 0
  %v370 = vsel %vm365, %v140, 0
  %372 = vmatprep.subr.bf16.mxu0 0
  %373 = vmatpush1.bf16.msra.mxu0 %v300
  %374 = vmatprep.subr.bf16.mxu0 0
  %375 = vmatpush1.bf16.msra.mxu0 %v299
  %376 = vmatprep.subr.bf16.mxu0 0
  %377 = vmatpush1.bf16.msra.mxu0 %v298
  %378 = vmatprep.subr.bf16.mxu0 0
  %379 = vmatpush1.bf16.msra.mxu0 %v297
  %380 = vmatprep.subr.bf16.mxu0 0
  %381 = vmatpush1.bf16.msra.mxu0 %v296
  %382 = vmatprep.subr.bf16.mxu0 0
  %383 = vmatpush1.bf16.msra.mxu0 %v295
  %384 = vmatprep.subr.bf16.mxu0 0
  %385 = vmatpush1.bf16.msra.mxu0 %v294
  %386 = vmatprep.subr.bf16.mxu0 0
  %387 = vmatpush1.bf16.msra.mxu0 %v293
  %388 = vmatprep.subr.bf16.mxu0 0
  %389 = vmatpush2.bf16.msra.mxu0 %v308
  %390 = vmatprep.subr.bf16.mxu0 0
  %391 = vmatpush2.bf16.msra.mxu0 %v307
  %392 = vmatprep.subr.bf16.mxu0 0
  %393 = vmatpush2.bf16.msra.mxu0 %v306
  %394 = vmatprep.subr.bf16.mxu0 0
  %395 = vmatpush2.bf16.msra.mxu0 %v305
  %396 = vmatprep.subr.bf16.mxu0 0
  %397 = vmatpush2.bf16.msra.mxu0 %v304
  %398 = vmatprep.subr.bf16.mxu0 0
  %399 = vmatpush2.bf16.msra.mxu0 %v303
  %400 = vmatprep.subr.bf16.mxu0 0
  %401 = vmatpush2.bf16.msra.mxu0 %v302
  %402 = vmatprep.subr.bf16.mxu0 0
  %403 = vmatpush2.bf16.msra.mxu0 %v301
  %404 = vmatprep.mubr.bf16.mxu0 %v132
  %405 = vmatmul.mubr.bf16.gmra.mxu0 %v131
  %v406 = vpop.f32.mrf.mxu0
  %v407 = vadd.f32 0.0, %v406
  %v408 = vpop.f32.mrf.mxu0
  %v409 = vpop.f32.mrf.mxu0
  %v410 = vadd.f32 0.0, %v409
  %v411 = vpop.f32.mrf.mxu0
  %412 = vmatprep.mubr.bf16.mxu0 %v137
  %413 = vmatmul.mubr.bf16.gmra.mxu0 %v136
  %v414 = vpop.f32.mrf.mxu0
  %v415 = vadd.f32 0.0, %v414
  %v416 = vpop.f32.mrf.mxu0
  %v417 = vpop.f32.mrf.mxu0
  %v418 = vadd.f32 0.0, %v417
  %v419 = vpop.f32.mrf.mxu0
  %420 = vdwg.mxu0
  %421 = vmatprep.subr.bf16.mxu0 0
  %422 = vmatpush1.bf16.msra.mxu0 %v316
  %423 = vmatprep.subr.bf16.mxu0 0
  %424 = vmatpush1.bf16.msra.mxu0 %v315
  %425 = vmatprep.subr.bf16.mxu0 0
  %426 = vmatpush1.bf16.msra.mxu0 %v314
  %427 = vmatprep.subr.bf16.mxu0 0
  %428 = vmatpush1.bf16.msra.mxu0 %v313
  %429 = vmatprep.subr.bf16.mxu0 0
  %430 = vmatpush1.bf16.msra.mxu0 %v312
  %431 = vmatprep.subr.bf16.mxu0 0
  %432 = vmatpush1.bf16.msra.mxu0 %v311
  %433 = vmatprep.subr.bf16.mxu0 0
  %434 = vmatpush1.bf16.msra.mxu0 %v310
  %435 = vmatprep.subr.bf16.mxu0 0
  %436 = vmatpush1.bf16.msra.mxu0 %v309
  %437 = vmatprep.subr.bf16.mxu0 0
  %438 = vmatpush2.bf16.msra.mxu0 %v324
  %439 = vmatprep.subr.bf16.mxu0 0
  %440 = vmatpush2.bf16.msra.mxu0 %v323
  %441 = vmatprep.subr.bf16.mxu0 0
  %442 = vmatpush2.bf16.msra.mxu0 %v322
  %443 = vmatprep.subr.bf16.mxu0 0
  %444 = vmatpush2.bf16.msra.mxu0 %v321
  %445 = vmatprep.subr.bf16.mxu0 0
  %446 = vmatpush2.bf16.msra.mxu0 %v320
  %447 = vmatprep.subr.bf16.mxu0 0
  %448 = vmatpush2.bf16.msra.mxu0 %v319
  %449 = vmatprep.subr.bf16.mxu0 0
  %450 = vmatpush2.bf16.msra.mxu0 %v318
  %451 = vmatprep.subr.bf16.mxu0 0
  %452 = vmatpush2.bf16.msra.mxu0 %v317
  %453 = vmatprep.mubr.bf16.mxu0 %v134
  %454 = vmatmul.mubr.bf16.gmra.mxu0 %v133
  %v455 = vpop.f32.mrf.mxu0
  %v456 = vadd.f32 %v407, %v455
  %v457 = vpop.f32.mrf.mxu0
  %v458 = vpop.f32.mrf.mxu0
  %v459 = vadd.f32 %v410, %v458
  %v460 = vpop.f32.mrf.mxu0
  %461 = vmatprep.mubr.bf16.mxu0 %v139
  %462 = vmatmul.mubr.bf16.gmra.mxu0 %v138
  %v463 = vpop.f32.mrf.mxu0
  %v464 = vadd.f32 %v415, %v463
  %v465 = vpop.f32.mrf.mxu0
  %v466 = vpop.f32.mrf.mxu0
  %v467 = vadd.f32 %v418, %v466
  %v468 = vpop.f32.mrf.mxu0
  %469 = vdwg.mxu0
  %470 = vmatprep.subr.bf16.mxu0 0
  %471 = vmatpush1.bf16.msra.mxu0 0
  %472 = vmatprep.subr.bf16.mxu0 0
  %473 = vmatpush1.bf16.msra.mxu0 0
  %474 = vmatprep.subr.bf16.mxu0 0
  %475 = vmatpush1.bf16.msra.mxu0 0
  %476 = vmatprep.subr.bf16.mxu0 0
  %477 = vmatpush1.bf16.msra.mxu0 0
  %478 = vmatprep.subr.bf16.mxu0 0
  %479 = vmatpush1.bf16.msra.mxu0 %v328
  %480 = vmatprep.subr.bf16.mxu0 0
  %481 = vmatpush1.bf16.msra.mxu0 %v327
  %482 = vmatprep.subr.bf16.mxu0 0
  %483 = vmatpush1.bf16.msra.mxu0 %v326
  %484 = vmatprep.subr.bf16.mxu0 0
  %485 = vmatpush1.bf16.msra.mxu0 %v325
  %486 = vmatprep.subr.bf16.mxu0 0
  %487 = vmatpush2.bf16.msra.mxu0 0
  %488 = vmatprep.subr.bf16.mxu0 0
  %489 = vmatpush2.bf16.msra.mxu0 0
  %490 = vmatprep.subr.bf16.mxu0 0
  %491 = vmatpush2.bf16.msra.mxu0 0
  %492 = vmatprep.subr.bf16.mxu0 0
  %493 = vmatpush2.bf16.msra.mxu0 0
  %494 = vmatprep.subr.bf16.mxu0 0
  %495 = vmatpush2.bf16.msra.mxu0 0
  %496 = vmatprep.subr.bf16.mxu0 0
  %497 = vmatpush2.bf16.msra.mxu0 0
  %498 = vmatprep.subr.bf16.mxu0 0
  %499 = vmatpush2.bf16.msra.mxu0 0
  %500 = vmatprep.subr.bf16.mxu0 0
  %501 = vmatpush2.bf16.msra.mxu0 0
  %502 = vmatprep.mubr.bf16.mxu0 0
  %503 = vmatmul.mubr.bf16.gmra.mxu0 %v367
  %v504 = vpop.f32.mrf.mxu0
  %v505 = vadd.f32 %v456, %v504
  %v506 = vpop.f32.mrf.mxu0
  %v507 = vpop.f32.mrf.mxu0
  %v508 = vadd.f32 %v459, %v507
  %v509 = vpop.f32.mrf.mxu0
  %510 = vmatprep.mubr.bf16.mxu0 0
  %511 = vmatmul.mubr.bf16.gmra.mxu0 %v370
  %v512 = vpop.f32.mrf.mxu0
  %v513 = vadd.f32 %v464, %v512
  %v514 = vpop.f32.mrf.mxu0
  %v515 = vpop.f32.mrf.mxu0
  %v516 = vadd.f32 %v467, %v515
  %v517 = vpop.f32.mrf.mxu0
  %518 = vdwg.mxu0
  %v519 = vmax.f32 %v505, %v508
  %v520 = vmax.f32 %v513, %v516
  %v521 = vmax.f32 %v519, %v520
  %v522 = vld [vmem:[%s2] sm:$0x1]
  %v524 = vlaneseq
  %v525 = vshrl.u32 %v524, 7
  %v526 = vsub.s32 0, %v525
  %v527 = vrot.slane %v522, %v526
  %v529 = vadd.f32 %v521, %v527
  %v530 = vmax.f32 %v529, 0.0
  %v531 = vpack.c.bf16 %v530, %v530
  %532 = vst [vmem:[%s3] sm:$0xf] %v531
  // Predicated region
  $region14: #{vgg_forward.5} parent=0 // pred_check
    _
  $region15: #{vgg_forward.5} parent=0 // pred_check_branch
    %534 = sbr.rel (0) target = $region17
  $region16: #{vgg_forward.5} parent=0 // pred_region
    _
  $region17: #{vgg_forward.5} parent=0 // pred_fallthru
    _
  // Predicated region
  $region18: #{vgg_forward.5} parent=0 // pred_check
    _
  $region19: #{vgg_forward.5} parent=0 // pred_check_branch
    %536 = sbr.rel (0) target = $region21
  $region20: #{vgg_forward.5} parent=0 // pred_region
    _
  $region21: #{vgg_forward.5} parent=0 // pred_fallthru
    _

// kernel: vgg_forward.6
$region0: #{vgg_forward.6}
  #allocation0 [shape = 'u32[]', space=smem, size = 0x4, offset = 0x4, fixed_abs, tag = 'smem constant byte address 0x4 - core index']
  #allocation1 [shape = 'u32[144,128]{1,0:T(1,128)}', space=vmem, size = 0x12000, scoped, tag = 'internal scratch']
  %s0 = inlined_call_operand.vmem [shape: bf16[32,1152], index: 0, kind: input, shape index: {}]
  %s1 = inlined_call_operand.vmem [shape: bf16[1152,512], index: 1, kind: input, shape index: {}]
  %s2 = inlined_call_operand.vmem [shape: f32[1,512], index: 2, kind: input, shape index: {}]
  %s3 = inlined_call_operand.vmem [shape: bf16[8,512], index: 3, kind: output, shape index: {}]
  %s4 = sld [smem:[#allocation0]]
  $region83: #{vgg_forward.6} parent=0
    _
  %s6 = ssub.s32 1, %s4
  %s7 = scalar_select 0, %s6, %s4
  $region1: #{vgg_forward.6} parent=0
    #allocation2 [shape = 'u8[1179648]{0}', space=vmem, size = 0x120000, scoped, tag = 'input window, operand 1']
    loop: start=0, step=1, limit=4
    $region2: #{vgg_forward.6} parent=1 // loop_pre_header
      _
    $region3: #{vgg_forward.6} parent=1 // loop_header
      %s9 = sphi 0, %s13
      %p10 = scmp.ge.s32.totalorder %s9, 4
      %s16 = sphi 0, %s28
      %s17 = sphi 0, %s24
      %s18 = sphi 0, %s16
      %s19 = sphi 0, %s17
      %s20 = sphi 0, %s18
      %s21 = sphi 0, %s19
      %s31 = sphi 0, %s33
      %s34 = sphi 0, %s31
      %s35 = sphi 0, %s34
      %s51 = sphi 0, %s35
      %s57 = sphi 0, %s59
      %s60 = sphi 0, %s57
      %s61 = sphi 0, %s60
      %s77 = sphi 0, %s61
      %s83 = sphi 0, %s85
      %s86 = sphi 0, %s83
      %s87 = sphi 0, %s86
      %s103 = sphi 0, %s87
      %s111 = sphi 0, %s113
      %s114 = sphi 0, %s111
      %s115 = sphi 0, %s114
      %s131 = sphi 0, %s115
    $region4: #{vgg_forward.6} parent=1 // loop_header_branch
      %12 = sbr.rel (%p10) target = $region8
    $region5: #{vgg_forward.6} parent=1 // loop_body
      %s14 = ssub.s32 %s9, 1
      %s15 = ssub.s32 %s9, 2
      %s22 = sadd.s32 1, %s17
      %p23 = scmp.ge.s32.totalorder %s22, 2
      %s24 = scalar_select %p23, 0, %s22
      %s25 = sadd.s32 1, %s16
      %s26 = scalar_select %p23, %s25, %s16
      %p27 = scmp.ge.s32.totalorder %s26, 1
      %s28 = scalar_select %p27, 0, %s26
      %s29 = ssub.s32 %s16, %s28
      %p30 = scmp.eq.s32.totalorder %s29, 0
      %s32 = sadd.s32 %s31, 1
      %s33 = scalar_select %p30, %s31, %s32
      %p36 = pneg %p30
      %p37 = scmp.eq.s32.totalorder %s9, 1
      %p38 = por %p36, %p37
      %p39 = scmp.ne.s32.totalorder %s31, %s34
      %p40 = scmp.eq.s32.totalorder %s9, 0
      %p41 = por %p39, %p40
      %p42 = scmp.ne.s32.totalorder %s31, %s34
      %p43 = scmp.eq.s32.totalorder %s14, 1
      %p44 = por %p42, %p43
      %p45 = scmp.ne.s32.totalorder %s34, %s35
      %p46 = scmp.eq.s32.totalorder %s14, 0
      %p47 = por %p45, %p46
      %p48 = scmp.ne.s32.totalorder %s34, %s35
      %p49 = scmp.eq.s32.totalorder %s15, 1
      %p50 = por %p48, %p49
      %p52 = scmp.ne.s32.totalorder %s35, %s51
      %p53 = scmp.eq.s32.totalorder %s15, 0
      %p54 = por %p52, %p53
      %s55 = ssub.s32 %s17, %s24
      %p56 = scmp.eq.s32.totalorder %s55, 0
      %s58 = sadd.s32 %s57, 1
      %s59 = scalar_select %p56, %s57, %s58
      %p62 = pneg %p56
      %p63 = scmp.eq.s32.totalorder %s9, 1
      %p64 = por %p62, %p63
      %p65 = scmp.ne.s32.totalorder %s57, %s60
      %p66 = scmp.eq.s32.totalorder %s9, 0
      %p67 = por %p65, %p66
      %p68 = scmp.ne.s32.totalorder %s57, %s60
      %p69 = scmp.eq.s32.totalorder %s14, 1
      %p70 = por %p68, %p69
      %p71 = scmp.ne.s32.totalorder %s60, %s61
      %p72 = scmp.eq.s32.totalorder %s14, 0
      %p73 = por %p71, %p72
      %p74 = scmp.ne.s32.totalorder %s60, %s61
      %p75 = scmp.eq.s32.totalorder %s15, 1
      %p76 = por %p74, %p75
      %p78 = scmp.ne.s32.totalorder %s61, %s77
      %p79 = scmp.eq.s32.totalorder %s15, 0
      %p80 = por %p78, %p79
      %s81 = ssub.s32 %s17, %s24
      %p82 = scmp.eq.s32.totalorder %s81, 0
      %s84 = sadd.s32 %s83, 1
      %s85 = scalar_select %p82, %s83, %s84
      %p88 = pneg %p82
      %p89 = scmp.eq.s32.totalorder %s9, 1
      %p90 = por %p88, %p89
      %p91 = scmp.ne.s32.totalorder %s83, %s86
      %p92 = scmp.eq.s32.totalorder %s9, 0
      %p93 = por %p91, %p92
      %p94 = scmp.ne.s32.totalorder %s83, %s86
      %p95 = scmp.eq.s32.totalorder %s14, 1
      %p96 = por %p94, %p95
      %p97 = scmp.ne.s32.totalorder %s86, %s87
      %p98 = scmp.eq.s32.totalorder %s14, 0
      %p99 = por %p97, %p98
      %p100 = scmp.ne.s32.totalorder %s86, %s87
      %p101 = scmp.eq.s32.totalorder %s15, 1
      %p102 = por %p100, %p101
      %p104 = scmp.ne.s32.totalorder %s87, %s103
      %p105 = scmp.eq.s32.totalorder %s15, 0
      %p106 = por %p104, %p105
      %s107 = ssub.s32 %s16, %s28
      %s108 = ssub.s32 %s17, %s24
      %s109 = sor.u32 %s107, %s108
      %p110 = scmp.eq.s32.totalorder %s109, 0
      %s112 = sadd.s32 %s111, 1
      %s113 = scalar_select %p110, %s111, %s112
      %p116 = pneg %p110
      %p117 = scmp.eq.s32.totalorder %s9, 1
      %p118 = por %p116, %p117
      %p119 = scmp.ne.s32.totalorder %s111, %s114
      %p120 = scmp.eq.s32.totalorder %s9, 0
      %p121 = por %p119, %p120
      %p122 = scmp.ne.s32.totalorder %s111, %s114
      %p123 = scmp.eq.s32.totalorder %s14, 1
      %p124 = por %p122, %p123
      %p125 = scmp.ne.s32.totalorder %s114, %s115
      %p126 = scmp.eq.s32.totalorder %s14, 0
      %p127 = por %p125, %p126
      %p128 = scmp.ne.s32.totalorder %s114, %s115
      %p129 = scmp.eq.s32.totalorder %s15, 1
      %p130 = por %p128, %p129
      %p132 = scmp.ne.s32.totalorder %s115, %s131
      %p133 = scmp.eq.s32.totalorder %s15, 0
      %p134 = por %p132, %p133
      %p135 = scmp.le.s32.totalorder 1, %s9
      %p136 = scmp.lt.s32.totalorder %s9, 3
      %p137 = pnand %p135, %p136
      %p138 = pneg %p137
      // Predicated region
      $region9: #{vgg_forward.6} parent=5 // pred_check
        _
      $region10: #{vgg_forward.6} parent=5 // pred_check_branch
        %140 = sbr.rel (%p137) target = $region12
      $region11: #{vgg_forward.6} parent=5 // pred_region
        %s141 = ssub.s32 %s9, 1
        // Predicated region
        $region13: #{vgg_forward.6} parent=11 // pred_check
          %p142 = pneg %p47
        $region14: #{vgg_forward.6} parent=11 // pred_check_branch
          %144 = sbr.rel (%p142) target = $region16
        $region15: #{vgg_forward.6} parent=11 // pred_region
          %s145 = smul.u32 4, %s18
          %p146 = scmp.lt.s32.totalorder %s145, 3
          %s147 = scalar_select %p146, %s145, 3
          %s148 = smul.addr %s147, 9
          %s149 = smul.addr %s148, 4
          %s150 = scalar_lea.vmem %s0, %s149
          %s151 = smul.u32 4, %s18
        $region16: #{vgg_forward.6} parent=11 // pred_fallthru
          _
      $region12: #{vgg_forward.6} parent=5 // pred_fallthru
        _
      %p152 = scmp.lt.s32.totalorder %s9, 2
      // Predicated region
      $region17: #{vgg_forward.6} parent=5 // pred_check
        %p153 = pneg %p152
      $region18: #{vgg_forward.6} parent=5 // pred_check_branch
        %155 = sbr.rel (%p153) target = $region20
      $region19: #{vgg_forward.6} parent=5 // pred_region
        // Predicated region
        $region21: #{vgg_forward.6} parent=19 // pred_check
          %p156 = pneg %p67
        $region22: #{vgg_forward.6} parent=19 // pred_check_branch
          %158 = sbr.rel (%p156) target = $region24
        $region23: #{vgg_forward.6} parent=19 // pred_region
          %s159 = sand.u32 %s57, 1
          %s160 = sand.u32 %s57, 1
          %s161 = smul.addr %s160, 1152
          %s162 = scalar_lea.vmem [#allocation2], %s161
          %s163 = smul.u32 2, %s17
          %s164 = smul.addr %s163, 4
          %s165 = scalar_lea.vmem %s1, %s164
          // Predicated region
          $region25: #{vgg_forward.6} parent=23 // pred_check
            _
          $region26: #{vgg_forward.6} parent=23 // pred_check_branch
            %167 = sbr.rel (0) target = $region28
          $region27: #{vgg_forward.6} parent=23 // pred_region
            // Predicated region
            $region29: #{vgg_forward.6} parent=27 // pred_check
              _
            $region30: #{vgg_forward.6} parent=27 // pred_check_branch
              %169 = sbr.rel (0) target = $region32
            $region31: #{vgg_forward.6} parent=27 // pred_region
              // Predicated region
              $region44: #{vgg_forward.6} parent=31 // pred_check
                _
              $region45: #{vgg_forward.6} parent=31 // pred_check_branch
                %471 = sbr.rel (0) target = $region47
              $region46: #{vgg_forward.6} parent=31 // pred_region
                loop: start=0, step=1, limit=1
                $region48: #{vgg_forward.6} parent=46 // loop_pre_header
                  _
                $region49: #{vgg_forward.6} parent=46 // loop_header
                  %s473 = sphi 0, %s477
                  %p474 = scmp.ge.s32.totalorder %s473, 1
                  %s478 = sphi %s165, %s165
                  %s479 = sphi %s162, %s162
                $region50: #{vgg_forward.6} parent=46 // loop_header_branch
                  %476 = sbr.rel (%p474) target = $region54
                $region51: #{vgg_forward.6} parent=46 // loop_body
                  %v480 = vld [vmem:[%s478] sm:$0xff]
                  %481 = vst [vmem:[%s479] sm:$0xff] %v480
                  %v482 = vld [vmem:[%s478 + $0x10] sm:$0xff]
                  %483 = vst [vmem:[%s479 + $0x8] sm:$0xff] %v482
                  %v484 = vld [vmem:[%s478 + $0x20] sm:$0xff]
                  %485 = vst [vmem:[%s479 + $0x10] sm:$0xff] %v484
                  %v486 = vld [vmem:[%s478 + $0x30] sm:$0xff]
                  %487 = vst [vmem:[%s479 + $0x18] sm:$0xff] %v486
                  %v488 = vld [vmem:[%s478 + $0x40] sm:$0xff]
                  %489 = vst [vmem:[%s479 + $0x20] sm:$0xff] %v488
                  %v490 = vld [vmem:[%s478 + $0x50] sm:$0xff]
                  %491 = vst [vmem:[%s479 + $0x28] sm:$0xff] %v490
                  %v492 = vld [vmem:[%s478 + $0x60] sm:$0xff]
                  %493 = vst [vmem:[%s479 + $0x30] sm:$0xff] %v492
                  %v494 = vld [vmem:[%s478 + $0x70] sm:$0xff]
                  %495 = vst [vmem:[%s479 + $0x38] sm:$0xff] %v494
                  %v496 = vld [vmem:[%s478 + $0x80] sm:$0xff]
                  %497 = vst [vmem:[%s479 + $0x40] sm:$0xff] %v496
                  %v498 = vld [vmem:[%s478 + $0x90] sm:$0xff]
                  %499 = vst [vmem:[%s479 + $0x48] sm:$0xff] %v498
                  %v500 = vld [vmem:[%s478 + $0xa0] sm:$0xff]
                  %501 = vst [vmem:[%s479 + $0x50] sm:$0xff] %v500
                  %v502 = vld [vmem:[%s478 + $0xb0] sm:$0xff]
                  %503 = vst [vmem:[%s479 + $0x58] sm:$0xff] %v502
                  %v504 = vld [vmem:[%s478 + $0xc0] sm:$0xff]
                  %505 = vst [vmem:[%s479 + $0x60] sm:$0xff] %v504
                  %v506 = vld [vmem:[%s478 + $0xd0] sm:$0xff]
                  %507 = vst [vmem:[%s479 + $0x68] sm:$0xff] %v506
                  %v508 = vld [vmem:[%s478 + $0xe0] sm:$0xff]
                  %509 = vst [vmem:[%s479 + $0x70] sm:$0xff] %v508
                  %v510 = vld [vmem:[%s478 + $0xf0] sm:$0xff]
                  %511 = vst [vmem:[%s479 + $0x78] sm:$0xff] %v510
                  %v512 = vld [vmem:[%s478 + $0x100] sm:$0xff]
                  %513 = vst [vmem:[%s479 + $0x80] sm:$0xff] %v512
                  %v514 = vld [vmem:[%s478 + $0x110] sm:$0xff]
                  %515 = vst [vmem:[%s479 + $0x88] sm:$0xff] %v514
                  %v516 = vld [vmem:[%s478 + $0x120] sm:$0xff]
                  %517 = vst [vmem:[%s479 + $0x90] sm:$0xff] %v516
                  %v518 = vld [vmem:[%s478 + $0x130] sm:$0xff]
                  %519 = vst [vmem:[%s479 + $0x98] sm:$0xff] %v518
                  %v520 = vld [vmem:[%s478 + $0x140] sm:$0xff]
                  %521 = vst [vmem:[%s479 + $0xa0] sm:$0xff] %v520
                  %v522 = vld [vmem:[%s478 + $0x150] sm:$0xff]
                  %523 = vst [vmem:[%s479 + $0xa8] sm:$0xff] %v522
                  %v524 = vld [vmem:[%s478 + $0x160] sm:$0xff]
                  %525 = vst [vmem:[%s479 + $0xb0] sm:$0xff] %v524
                  %v526 = vld [vmem:[%s478 + $0x170] sm:$0xff]
                  %527 = vst [vmem:[%s479 + $0xb8] sm:$0xff] %v526
                  %v528 = vld [vmem:[%s478 + $0x180] sm:$0xff]
                  %529 = vst [vmem:[%s479 + $0xc0] sm:$0xff] %v528
                  %v530 = vld [vmem:[%s478 + $0x190] sm:$0xff]
                  %531 = vst [vmem:[%s479 + $0xc8] sm:$0xff] %v530
                  %v532 = vld [vmem:[%s478 + $0x1a0] sm:$0xff]
                  %533 = vst [vmem:[%s479 + $0xd0] sm:$0xff] %v532
                  %v534 = vld [vmem:[%s478 + $0x1b0] sm:$0xff]
                  %535 = vst [vmem:[%s479 + $0xd8] sm:$0xff] %v534
                  %v536 = vld [vmem:[%s478 + $0x1c0] sm:$0xff]
                  %537 = vst [vmem:[%s479 + $0xe0] sm:$0xff] %v536
                  %v538 = vld [vmem:[%s478 + $0x1d0] sm:$0xff]
                  %539 = vst [vmem:[%s479 + $0xe8] sm:$0xff] %v538
                  %v540 = vld [vmem:[%s478 + $0x1e0] sm:$0xff]
                  %541 = vst [vmem:[%s479 + $0xf0] sm:$0xff] %v540
                  %v542 = vld [vmem:[%s478 + $0x1f0] sm:$0xff]
                  %543 = vst [vmem:[%s479 + $0xf8] sm:$0xff] %v542
                  %v544 = vld [vmem:[%s478 + $0x200] sm:$0xff]
                  %545 = vst [vmem:[%s479 + $0x100] sm:$0xff] %v544
                  %v546 = vld [vmem:[%s478 + $0x210] sm:$0xff]
                  %547 = vst [vmem:[%s479 + $0x108] sm:$0xff] %v546
                  %v548 = vld [vmem:[%s478 + $0x220] sm:$0xff]
                  %549 = vst [vmem:[%s479 + $0x110] sm:$0xff] %v548
                  %v550 = vld [vmem:[%s478 + $0x230] sm:$0xff]
                  %551 = vst [vmem:[%s479 + $0x118] sm:$0xff] %v550
                  %v552 = vld [vmem:[%s478 + $0x240] sm:$0xff]
                  %553 = vst [vmem:[%s479 + $0x120] sm:$0xff] %v552
                  %v554 = vld [vmem:[%s478 + $0x250] sm:$0xff]
                  %555 = vst [vmem:[%s479 + $0x128] sm:$0xff] %v554
                  %v556 = vld [vmem:[%s478 + $0x260] sm:$0xff]
                  %557 = vst [vmem:[%s479 + $0x130] sm:$0xff] %v556
                  %v558 = vld [vmem:[%s478 + $0x270] sm:$0xff]
                  %559 = vst [vmem:[%s479 + $0x138] sm:$0xff] %v558
                  %v560 = vld [vmem:[%s478 + $0x280] sm:$0xff]
                  %561 = vst [vmem:[%s479 + $0x140] sm:$0xff] %v560
                  %v562 = vld [vmem:[%s478 + $0x290] sm:$0xff]
                  %563 = vst [vmem:[%s479 + $0x148] sm:$0xff] %v562
                  %v564 = vld [vmem:[%s478 + $0x2a0] sm:$0xff]
                  %565 = vst [vmem:[%s479 + $0x150] sm:$0xff] %v564
                  %v566 = vld [vmem:[%s478 + $0x2b0] sm:$0xff]
                  %567 = vst [vmem:[%s479 + $0x158] sm:$0xff] %v566
                  %v568 = vld [vmem:[%s478 + $0x2c0] sm:$0xff]
                  %569 = vst [vmem:[%s479 + $0x160] sm:$0xff] %v568
                  %v570 = vld [vmem:[%s478 + $0x2d0] sm:$0xff]
                  %571 = vst [vmem:[%s479 + $0x168] sm:$0xff] %v570
                  %v572 = vld [vmem:[%s478 + $0x2e0] sm:$0xff]
                  %573 = vst [vmem:[%s479 + $0x170] sm:$0xff] %v572
                  %v574 = vld [vmem:[%s478 + $0x2f0] sm:$0xff]
                  %575 = vst [vmem:[%s479 + $0x178] sm:$0xff] %v574
                  %v576 = vld [vmem:[%s478 + $0x300] sm:$0xff]
                  %577 = vst [vmem:[%s479 + $0x180] sm:$0xff] %v576
                  %v578 = vld [vmem:[%s478 + $0x310] sm:$0xff]
                  %579 = vst [vmem:[%s479 + $0x188] sm:$0xff] %v578
                  %v580 = vld [vmem:[%s478 + $0x320] sm:$0xff]
                  %581 = vst [vmem:[%s479 + $0x190] sm:$0xff] %v580
                  %v582 = vld [vmem:[%s478 + $0x330] sm:$0xff]
                  %583 = vst [vmem:[%s479 + $0x198] sm:$0xff] %v582
                  %v584 = vld [vmem:[%s478 + $0x340] sm:$0xff]
                  %585 = vst [vmem:[%s479 + $0x1a0] sm:$0xff] %v584
                  %v586 = vld [vmem:[%s478 + $0x350] sm:$0xff]
                  %587 = vst [vmem:[%s479 + $0x1a8] sm:$0xff] %v586
                  %v588 = vld [vmem:[%s478 + $0x360] sm:$0xff]
                  %589 = vst [vmem:[%s479 + $0x1b0] sm:$0xff] %v588
                  %v590 = vld [vmem:[%s478 + $0x370] sm:$0xff]
                  %591 = vst [vmem:[%s479 + $0x1b8] sm:$0xff] %v590
                  %v592 = vld [vmem:[%s478 + $0x380] sm:$0xff]
                  %593 = vst [vmem:[%s479 + $0x1c0] sm:$0xff] %v592
                  %v594 = vld [vmem:[%s478 + $0x390] sm:$0xff]
                  %595 = vst [vmem:[%s479 + $0x1c8] sm:$0xff] %v594
                  %v596 = vld [vmem:[%s478 + $0x3a0] sm:$0xff]
                  %597 = vst [vmem:[%s479 + $0x1d0] sm:$0xff] %v596
                  %v598 = vld [vmem:[%s478 + $0x3b0] sm:$0xff]
                  %599 = vst [vmem:[%s479 + $0x1d8] sm:$0xff] %v598
                  %v600 = vld [vmem:[%s478 + $0x3c0] sm:$0xff]
                  %601 = vst [vmem:[%s479 + $0x1e0] sm:$0xff] %v600
                  %v602 = vld [vmem:[%s478 + $0x3d0] sm:$0xff]
                  %603 = vst [vmem:[%s479 + $0x1e8] sm:$0xff] %v602
                  %v604 = vld [vmem:[%s478 + $0x3e0] sm:$0xff]
                  %605 = vst [vmem:[%s479 + $0x1f0] sm:$0xff] %v604
                  %v606 = vld [vmem:[%s478 + $0x3f0] sm:$0xff]
                  %607 = vst [vmem:[%s479 + $0x1f8] sm:$0xff] %v606
                  %v608 = vld [vmem:[%s478 + $0x400] sm:$0xff]
                  %609 = vst [vmem:[%s479 + $0x200] sm:$0xff] %v608
                  %v610 = vld [vmem:[%s478 + $0x410] sm:$0xff]
                  %611 = vst [vmem:[%s479 + $0x208] sm:$0xff] %v610
                  %v612 = vld [vmem:[%s478 + $0x420] sm:$0xff]
                  %613 = vst [vmem:[%s479 + $0x210] sm:$0xff] %v612
                  %v614 = vld [vmem:[%s478 + $0x430] sm:$0xff]
                  %615 = vst [vmem:[%s479 + $0x218] sm:$0xff] %v614
                  %v616 = vld [vmem:[%s478 + $0x440] sm:$0xff]
                  %617 = vst [vmem:[%s479 + $0x220] sm:$0xff] %v616
                  %v618 = vld [vmem:[%s478 + $0x450] sm:$0xff]
                  %619 = vst [vmem:[%s479 + $0x228] sm:$0xff] %v618
                  %v620 = vld [vmem:[%s478 + $0x460] sm:$0xff]
                  %621 = vst [vmem:[%s479 + $0x230] sm:$0xff] %v620
                  %v622 = vld [vmem:[%s478 + $0x470] sm:$0xff]
                  %623 = vst [vmem:[%s479 + $0x238] sm:$0xff] %v622
                  %v624 = vld [vmem:[%s478 + $0x480] sm:$0xff]
                  %625 = vst [vmem:[%s479 + $0x240] sm:$0xff] %v624
                  %v626 = vld [vmem:[%s478 + $0x490] sm:$0xff]
                  %627 = vst [vmem:[%s479 + $0x248] sm:$0xff] %v626
                  %v628 = vld [vmem:[%s478 + $0x4a0] sm:$0xff]
                  %629 = vst [vmem:[%s479 + $0x250] sm:$0xff] %v628
                  %v630 = vld [vmem:[%s478 + $0x4b0] sm:$0xff]
                  %631 = vst [vmem:[%s479 + $0x258] sm:$0xff] %v630
                  %v632 = vld [vmem:[%s478 + $0x4c0] sm:$0xff]
                  %633 = vst [vmem:[%s479 + $0x260] sm:$0xff] %v632
                  %v634 = vld [vmem:[%s478 + $0x4d0] sm:$0xff]
                  %635 = vst [vmem:[%s479 + $0x268] sm:$0xff] %v634
                  %v636 = vld [vmem:[%s478 + $0x4e0] sm:$0xff]
                  %637 = vst [vmem:[%s479 + $0x270] sm:$0xff] %v636
                  %v638 = vld [vmem:[%s478 + $0x4f0] sm:$0xff]
                  %639 = vst [vmem:[%s479 + $0x278] sm:$0xff] %v638
                  %v640 = vld [vmem:[%s478 + $0x500] sm:$0xff]
                  %641 = vst [vmem:[%s479 + $0x280] sm:$0xff] %v640
                  %v642 = vld [vmem:[%s478 + $0x510] sm:$0xff]
                  %643 = vst [vmem:[%s479 + $0x288] sm:$0xff] %v642
                  %v644 = vld [vmem:[%s478 + $0x520] sm:$0xff]
                  %645 = vst [vmem:[%s479 + $0x290] sm:$0xff] %v644
                  %v646 = vld [vmem:[%s478 + $0x530] sm:$0xff]
                  %647 = vst [vmem:[%s479 + $0x298] sm:$0xff] %v646
                  %v648 = vld [vmem:[%s478 + $0x540] sm:$0xff]
                  %649 = vst [vmem:[%s479 + $0x2a0] sm:$0xff] %v648
                  %v650 = vld [vmem:[%s478 + $0x550] sm:$0xff]
                  %651 = vst [vmem:[%s479 + $0x2a8] sm:$0xff] %v650
                  %v652 = vld [vmem:[%s478 + $0x560] sm:$0xff]
                  %653 = vst [vmem:[%s479 + $0x2b0] sm:$0xff] %v652
                  %v654 = vld [vmem:[%s478 + $0x570] sm:$0xff]
                  %655 = vst [vmem:[%s479 + $0x2b8] sm:$0xff] %v654
                  %v656 = vld [vmem:[%s478 + $0x580] sm:$0xff]
                  %657 = vst [vmem:[%s479 + $0x2c0] sm:$0xff] %v656
                  %v658 = vld [vmem:[%s478 + $0x590] sm:$0xff]
                  %659 = vst [vmem:[%s479 + $0x2c8] sm:$0xff] %v658
                  %v660 = vld [vmem:[%s478 + $0x5a0] sm:$0xff]
                  %661 = vst [vmem:[%s479 + $0x2d0] sm:$0xff] %v660
                  %v662 = vld [vmem:[%s478 + $0x5b0] sm:$0xff]
                  %663 = vst [vmem:[%s479 + $0x2d8] sm:$0xff] %v662
                  %v664 = vld [vmem:[%s478 + $0x5c0] sm:$0xff]
                  %665 = vst [vmem:[%s479 + $0x2e0] sm:$0xff] %v664
                  %v666 = vld [vmem:[%s478 + $0x5d0] sm:$0xff]
                  %667 = vst [vmem:[%s479 + $0x2e8] sm:$0xff] %v666
                  %v668 = vld [vmem:[%s478 + $0x5e0] sm:$0xff]
                  %669 = vst [vmem:[%s479 + $0x2f0] sm:$0xff] %v668
                  %v670 = vld [vmem:[%s478 + $0x5f0] sm:$0xff]
                  %671 = vst [vmem:[%s479 + $0x2f8] sm:$0xff] %v670
                  %v672 = vld [vmem:[%s478 + $0x600] sm:$0xff]
                  %673 = vst [vmem:[%s479 + $0x300] sm:$0xff] %v672
                  %v674 = vld [vmem:[%s478 + $0x610] sm:$0xff]
                  %675 = vst [vmem:[%s479 + $0x308] sm:$0xff] %v674
                  %v676 = vld [vmem:[%s478 + $0x620] sm:$0xff]
                  %677 = vst [vmem:[%s479 + $0x310] sm:$0xff] %v676
                  %v678 = vld [vmem:[%s478 + $0x630] sm:$0xff]
                  %679 = vst [vmem:[%s479 + $0x318] sm:$0xff] %v678
                  %v680 = vld [vmem:[%s478 + $0x640] sm:$0xff]
                  %681 = vst [vmem:[%s479 + $0x320] sm:$0xff] %v680
                  %v682 = vld [vmem:[%s478 + $0x650] sm:$0xff]
                  %683 = vst [vmem:[%s479 + $0x328] sm:$0xff] %v682
                  %v684 = vld [vmem:[%s478 + $0x660] sm:$0xff]
                  %685 = vst [vmem:[%s479 + $0x330] sm:$0xff] %v684
                  %v686 = vld [vmem:[%s478 + $0x670] sm:$0xff]
                  %687 = vst [vmem:[%s479 + $0x338] sm:$0xff] %v686
                  %v688 = vld [vmem:[%s478 + $0x680] sm:$0xff]
                  %689 = vst [vmem:[%s479 + $0x340] sm:$0xff] %v688
                  %v690 = vld [vmem:[%s478 + $0x690] sm:$0xff]
                  %691 = vst [vmem:[%s479 + $0x348] sm:$0xff] %v690
                  %v692 = vld [vmem:[%s478 + $0x6a0] sm:$0xff]
                  %693 = vst [vmem:[%s479 + $0x350] sm:$0xff] %v692
                  %v694 = vld [vmem:[%s478 + $0x6b0] sm:$0xff]
                  %695 = vst [vmem:[%s479 + $0x358] sm:$0xff] %v694
                  %v696 = vld [vmem:[%s478 + $0x6c0] sm:$0xff]
                  %697 = vst [vmem:[%s479 + $0x360] sm:$0xff] %v696
                  %v698 = vld [vmem:[%s478 + $0x6d0] sm:$0xff]
                  %699 = vst [vmem:[%s479 + $0x368] sm:$0xff] %v698
                  %v700 = vld [vmem:[%s478 + $0x6e0] sm:$0xff]
                  %701 = vst [vmem:[%s479 + $0x370] sm:$0xff] %v700
                  %v702 = vld [vmem:[%s478 + $0x6f0] sm:$0xff]
                  %703 = vst [vmem:[%s479 + $0x378] sm:$0xff] %v702
                  %v704 = vld [vmem:[%s478 + $0x700] sm:$0xff]
                  %705 = vst [vmem:[%s479 + $0x380] sm:$0xff] %v704
                  %v706 = vld [vmem:[%s478 + $0x710] sm:$0xff]
                  %707 = vst [vmem:[%s479 + $0x388] sm:$0xff] %v706
                  %v708 = vld [vmem:[%s478 + $0x720] sm:$0xff]
                  %709 = vst [vmem:[%s479 + $0x390] sm:$0xff] %v708
                  %v710 = vld [vmem:[%s478 + $0x730] sm:$0xff]
                  %711 = vst [vmem:[%s479 + $0x398] sm:$0xff] %v710
                  %v712 = vld [vmem:[%s478 + $0x740] sm:$0xff]
                  %713 = vst [vmem:[%s479 + $0x3a0] sm:$0xff] %v712
                  %v714 = vld [vmem:[%s478 + $0x750] sm:$0xff]
                  %715 = vst [vmem:[%s479 + $0x3a8] sm:$0xff] %v714
                  %v716 = vld [vmem:[%s478 + $0x760] sm:$0xff]
                  %717 = vst [vmem:[%s479 + $0x3b0] sm:$0xff] %v716
                  %v718 = vld [vmem:[%s478 + $0x770] sm:$0xff]
                  %719 = vst [vmem:[%s479 + $0x3b8] sm:$0xff] %v718
                  %v720 = vld [vmem:[%s478 + $0x780] sm:$0xff]
                  %721 = vst [vmem:[%s479 + $0x3c0] sm:$0xff] %v720
                  %v722 = vld [vmem:[%s478 + $0x790] sm:$0xff]
                  %723 = vst [vmem:[%s479 + $0x3c8] sm:$0xff] %v722
                  %v724 = vld [vmem:[%s478 + $0x7a0] sm:$0xff]
                  %725 = vst [vmem:[%s479 + $0x3d0] sm:$0xff] %v724
                  %v726 = vld [vmem:[%s478 + $0x7b0] sm:$0xff]
                  %727 = vst [vmem:[%s479 + $0x3d8] sm:$0xff] %v726
                  %v728 = vld [vmem:[%s478 + $0x7c0] sm:$0xff]
                  %729 = vst [vmem:[%s479 + $0x3e0] sm:$0xff] %v728
                  %v730 = vld [vmem:[%s478 + $0x7d0] sm:$0xff]
                  %731 = vst [vmem:[%s479 + $0x3e8] sm:$0xff] %v730
                  %v732 = vld [vmem:[%s478 + $0x7e0] sm:$0xff]
                  %733 = vst [vmem:[%s479 + $0x3f0] sm:$0xff] %v732
                  %v734 = vld [vmem:[%s478 + $0x7f0] sm:$0xff]
                  %735 = vst [vmem:[%s479 + $0x3f8] sm:$0xff] %v734
                  %v736 = vld [vmem:[%s478 + $0x800] sm:$0xff]
                  %737 = vst [vmem:[%s479 + $0x400] sm:$0xff] %v736
                  %v738 = vld [vmem:[%s478 + $0x810] sm:$0xff]
                  %739 = vst [vmem:[%s479 + $0x408] sm:$0xff] %v738
                  %v740 = vld [vmem:[%s478 + $0x820] sm:$0xff]
                  %741 = vst [vmem:[%s479 + $0x410] sm:$0xff] %v740
                  %v742 = vld [vmem:[%s478 + $0x830] sm:$0xff]
                  %743 = vst [vmem:[%s479 + $0x418] sm:$0xff] %v742
                  %v744 = vld [vmem:[%s478 + $0x840] sm:$0xff]
                  %745 = vst [vmem:[%s479 + $0x420] sm:$0xff] %v744
                  %v746 = vld [vmem:[%s478 + $0x850] sm:$0xff]
                  %747 = vst [vmem:[%s479 + $0x428] sm:$0xff] %v746
                  %v748 = vld [vmem:[%s478 + $0x860] sm:$0xff]
                  %749 = vst [vmem:[%s479 + $0x430] sm:$0xff] %v748
                  %v750 = vld [vmem:[%s478 + $0x870] sm:$0xff]
                  %751 = vst [vmem:[%s479 + $0x438] sm:$0xff] %v750
                  %v752 = vld [vmem:[%s478 + $0x880] sm:$0xff]
                  %753 = vst [vmem:[%s479 + $0x440] sm:$0xff] %v752
                  %v754 = vld [vmem:[%s478 + $0x890] sm:$0xff]
                  %755 = vst [vmem:[%s479 + $0x448] sm:$0xff] %v754
                  %v756 = vld [vmem:[%s478 + $0x8a0] sm:$0xff]
                  %757 = vst [vmem:[%s479 + $0x450] sm:$0xff] %v756
                  %v758 = vld [vmem:[%s478 + $0x8b0] sm:$0xff]
                  %759 = vst [vmem:[%s479 + $0x458] sm:$0xff] %v758
                  %v760 = vld [vmem:[%s478 + $0x8c0] sm:$0xff]
                  %761 = vst [vmem:[%s479 + $0x460] sm:$0xff] %v760
                  %v762 = vld [vmem:[%s478 + $0x8d0] sm:$0xff]
                  %763 = vst [vmem:[%s479 + $0x468] sm:$0xff] %v762
                  %v764 = vld [vmem:[%s478 + $0x8e0] sm:$0xff]
                  %765 = vst [vmem:[%s479 + $0x470] sm:$0xff] %v764
                  %v766 = vld [vmem:[%s478 + $0x8f0] sm:$0xff]
                  %767 = vst [vmem:[%s479 + $0x478] sm:$0xff] %v766
                $region52: #{vgg_forward.6} parent=46 // loop_footer
                  %s477 = sadd.s32 1, %s473
                $region53: #{vgg_forward.6} parent=46 // loop_footer_branch
                  %472 = sbr.rel target = $region49
                $region54: #{vgg_forward.6} parent=46 // loop_exit
                  _
              $region47: #{vgg_forward.6} parent=31 // pred_fallthru
                _
              // Predicated region
              $region55: #{vgg_forward.6} parent=31 // pred_check
                _
              $region56: #{vgg_forward.6} parent=31 // pred_check_branch
                %769 = sbr.rel target = $region58
              $region57: #{vgg_forward.6} parent=31 // pred_region
                _
              $region58: #{vgg_forward.6} parent=31 // pred_fallthru
                _
            $region32: #{vgg_forward.6} parent=27 // pred_fallthru
              _
            // Predicated region
            $region33: #{vgg_forward.6} parent=27 // pred_check
              _
            $region34: #{vgg_forward.6} parent=27 // pred_check_branch
              %171 = sbr.rel target = $region36
            $region35: #{vgg_forward.6} parent=27 // pred_region
              %s173 = ssub.s32 256, 1
              loop: start=0, step=1, limit=1
              $region37: #{vgg_forward.6} parent=35 // loop_pre_header
                _
              $region38: #{vgg_forward.6} parent=35 // loop_header
                %s175 = sphi 0, %s179
                %p176 = scmp.ge.s32.totalorder %s175, 1
                %s180 = sphi %s165, %s165
                %s181 = sphi %s162, %s162
              $region39: #{vgg_forward.6} parent=35 // loop_header_branch
                %178 = sbr.rel (%p176) target = $region43
              $region40: #{vgg_forward.6} parent=35 // loop_body
                %v182 = vld [vmem:[%s180] sm:%s173]
                %183 = vst [vmem:[%s181] sm:%s173] %v182
                %v184 = vld [vmem:[%s180 + $0x10] sm:%s173]
                %185 = vst [vmem:[%s181 + $0x8] sm:%s173] %v184
                %v186 = vld [vmem:[%s180 + $0x20] sm:%s173]
                %187 = vst [vmem:[%s181 + $0x10] sm:%s173] %v186
                %v188 = vld [vmem:[%s180 + $0x30] sm:%s173]
                %189 = vst [vmem:[%s181 + $0x18] sm:%s173] %v188
                %v190 = vld [vmem:[%s180 + $0x40] sm:%s173]
                %191 = vst [vmem:[%s181 + $0x20] sm:%s173] %v190
                %v192 = vld [vmem:[%s180 + $0x50] sm:%s173]
                %193 = vst [vmem:[%s181 + $0x28] sm:%s173] %v192
                %v194 = vld [vmem:[%s180 + $0x60] sm:%s173]
                %195 = vst [vmem:[%s181 + $0x30] sm:%s173] %v194
                %v196 = vld [vmem:[%s180 + $0x70] sm:%s173]
                %197 = vst [vmem:[%s181 + $0x38] sm:%s173] %v196
                %v198 = vld [vmem:[%s180 + $0x80] sm:%s173]
                %199 = vst [vmem:[%s181 + $0x40] sm:%s173] %v198
                %v200 = vld [vmem:[%s180 + $0x90] sm:%s173]
                %201 = vst [vmem:[%s181 + $0x48] sm:%s173] %v200
                %v202 = vld [vmem:[%s180 + $0xa0] sm:%s173]
                %203 = vst [vmem:[%s181 + $0x50] sm:%s173] %v202
                %v204 = vld [vmem:[%s180 + $0xb0] sm:%s173]
                %205 = vst [vmem:[%s181 + $0x58] sm:%s173] %v204
                %v206 = vld [vmem:[%s180 + $0xc0] sm:%s173]
                %207 = vst [vmem:[%s181 + $0x60] sm:%s173] %v206
                %v208 = vld [vmem:[%s180 + $0xd0] sm:%s173]
                %209 = vst [vmem:[%s181 + $0x68] sm:%s173] %v208
                %v210 = vld [vmem:[%s180 + $0xe0] sm:%s173]
                %211 = vst [vmem:[%s181 + $0x70] sm:%s173] %v210
                %v212 = vld [vmem:[%s180 + $0xf0] sm:%s173]
                %213 = vst [vmem:[%s181 + $0x78] sm:%s173] %v212
                %v214 = vld [vmem:[%s180 + $0x100] sm:%s173]
                %215 = vst [vmem:[%s181 + $0x80] sm:%s173] %v214
                %v216 = vld [vmem:[%s180 + $0x110] sm:%s173]
                %217 = vst [vmem:[%s181 + $0x88] sm:%s173] %v216
                %v218 = vld [vmem:[%s180 + $0x120] sm:%s173]
                %219 = vst [vmem:[%s181 + $0x90] sm:%s173] %v218
                %v220 = vld [vmem:[%s180 + $0x130] sm:%s173]
                %221 = vst [vmem:[%s181 + $0x98] sm:%s173] %v220
                %v222 = vld [vmem:[%s180 + $0x140] sm:%s173]
                %223 = vst [vmem:[%s181 + $0xa0] sm:%s173] %v222
                %v224 = vld [vmem:[%s180 + $0x150] sm:%s173]
                %225 = vst [vmem:[%s181 + $0xa8] sm:%s173] %v224
                %v226 = vld [vmem:[%s180 + $0x160] sm:%s173]
                %227 = vst [vmem:[%s181 + $0xb0] sm:%s173] %v226
                %v228 = vld [vmem:[%s180 + $0x170] sm:%s173]
                %229 = vst [vmem:[%s181 + $0xb8] sm:%s173] %v228
                %v230 = vld [vmem:[%s180 + $0x180] sm:%s173]
                %231 = vst [vmem:[%s181 + $0xc0] sm:%s173] %v230
                %v232 = vld [vmem:[%s180 + $0x190] sm:%s173]
                %233 = vst [vmem:[%s181 + $0xc8] sm:%s173] %v232
                %v234 = vld [vmem:[%s180 + $0x1a0] sm:%s173]
                %235 = vst [vmem:[%s181 + $0xd0] sm:%s173] %v234
                %v236 = vld [vmem:[%s180 + $0x1b0] sm:%s173]
                %237 = vst [vmem:[%s181 + $0xd8] sm:%s173] %v236
                %v238 = vld [vmem:[%s180 + $0x1c0] sm:%s173]
                %239 = vst [vmem:[%s181 + $0xe0] sm:%s173] %v238
                %v240 = vld [vmem:[%s180 + $0x1d0] sm:%s173]
                %241 = vst [vmem:[%s181 + $0xe8] sm:%s173] %v240
                %v242 = vld [vmem:[%s180 + $0x1e0] sm:%s173]
                %243 = vst [vmem:[%s181 + $0xf0] sm:%s173] %v242
                %v244 = vld [vmem:[%s180 + $0x1f0] sm:%s173]
                %245 = vst [vmem:[%s181 + $0xf8] sm:%s173] %v244
                %v246 = vld [vmem:[%s180 + $0x200] sm:%s173]
                %247 = vst [vmem:[%s181 + $0x100] sm:%s173] %v246
                %v248 = vld [vmem:[%s180 + $0x210] sm:%s173]
                %249 = vst [vmem:[%s181 + $0x108] sm:%s173] %v248
                %v250 = vld [vmem:[%s180 + $0x220] sm:%s173]
                %251 = vst [vmem:[%s181 + $0x110] sm:%s173] %v250
                %v252 = vld [vmem:[%s180 + $0x230] sm:%s173]
                %253 = vst [vmem:[%s181 + $0x118] sm:%s173] %v252
                %v254 = vld [vmem:[%s180 + $0x240] sm:%s173]
                %255 = vst [vmem:[%s181 + $0x120] sm:%s173] %v254
                %v256 = vld [vmem:[%s180 + $0x250] sm:%s173]
                %257 = vst [vmem:[%s181 + $0x128] sm:%s173] %v256
                %v258 = vld [vmem:[%s180 + $0x260] sm:%s173]
                %259 = vst [vmem:[%s181 + $0x130] sm:%s173] %v258
                %v260 = vld [vmem:[%s180 + $0x270] sm:%s173]
                %261 = vst [vmem:[%s181 + $0x138] sm:%s173] %v260
                %v262 = vld [vmem:[%s180 + $0x280] sm:%s173]
                %263 = vst [vmem:[%s181 + $0x140] sm:%s173] %v262
                %v264 = vld [vmem:[%s180 + $0x290] sm:%s173]
                %265 = vst [vmem:[%s181 + $0x148] sm:%s173] %v264
                %v266 = vld [vmem:[%s180 + $0x2a0] sm:%s173]
                %267 = vst [vmem:[%s181 + $0x150] sm:%s173] %v266
                %v268 = vld [vmem:[%s180 + $0x2b0] sm:%s173]
                %269 = vst [vmem:[%s181 + $0x158] sm:%s173] %v268
                %v270 = vld [vmem:[%s180 + $0x2c0] sm:%s173]
                %271 = vst [vmem:[%s181 + $0x160] sm:%s173] %v270
                %v272 = vld [vmem:[%s180 + $0x2d0] sm:%s173]
                %273 = vst [vmem:[%s181 + $0x168] sm:%s173] %v272
                %v274 = vld [vmem:[%s180 + $0x2e0] sm:%s173]
                %275 = vst [vmem:[%s181 + $0x170] sm:%s173] %v274
                %v276 = vld [vmem:[%s180 + $0x2f0] sm:%s173]
                %277 = vst [vmem:[%s181 + $0x178] sm:%s173] %v276
                %v278 = vld [vmem:[%s180 + $0x300] sm:%s173]
                %279 = vst [vmem:[%s181 + $0x180] sm:%s173] %v278
                %v280 = vld [vmem:[%s180 + $0x310] sm:%s173]
                %281 = vst [vmem:[%s181 + $0x188] sm:%s173] %v280
                %v282 = vld [vmem:[%s180 + $0x320] sm:%s173]
                %283 = vst [vmem:[%s181 + $0x190] sm:%s173] %v282
                %v284 = vld [vmem:[%s180 + $0x330] sm:%s173]
                %285 = vst [vmem:[%s181 + $0x198] sm:%s173] %v284
                %v286 = vld [vmem:[%s180 + $0x340] sm:%s173]
                %287 = vst [vmem:[%s181 + $0x1a0] sm:%s173] %v286
                %v288 = vld [vmem:[%s180 + $0x350] sm:%s173]
                %289 = vst [vmem:[%s181 + $0x1a8] sm:%s173] %v288
                %v290 = vld [vmem:[%s180 + $0x360] sm:%s173]
                %291 = vst [vmem:[%s181 + $0x1b0] sm:%s173] %v290
                %v292 = vld [vmem:[%s180 + $0x370] sm:%s173]
                %293 = vst [vmem:[%s181 + $0x1b8] sm:%s173] %v292
                %v294 = vld [vmem:[%s180 + $0x380] sm:%s173]
                %295 = vst [vmem:[%s181 + $0x1c0] sm:%s173] %v294
                %v296 = vld [vmem:[%s180 + $0x390] sm:%s173]
                %297 = vst [vmem:[%s181 + $0x1c8] sm:%s173] %v296
                %v298 = vld [vmem:[%s180 + $0x3a0] sm:%s173]
                %299 = vst [vmem:[%s181 + $0x1d0] sm:%s173] %v298
                %v300 = vld [vmem:[%s180 + $0x3b0] sm:%s173]
                %301 = vst [vmem:[%s181 + $0x1d8] sm:%s173] %v300
                %v302 = vld [vmem:[%s180 + $0x3c0] sm:%s173]
                %303 = vst [vmem:[%s181 + $0x1e0] sm:%s173] %v302
                %v304 = vld [vmem:[%s180 + $0x3d0] sm:%s173]
                %305 = vst [vmem:[%s181 + $0x1e8] sm:%s173] %v304
                %v306 = vld [vmem:[%s180 + $0x3e0] sm:%s173]
                %307 = vst [vmem:[%s181 + $0x1f0] sm:%s173] %v306
                %v308 = vld [vmem:[%s180 + $0x3f0] sm:%s173]
                %309 = vst [vmem:[%s181 + $0x1f8] sm:%s173] %v308
                %v310 = vld [vmem:[%s180 + $0x400] sm:%s173]
                %311 = vst [vmem:[%s181 + $0x200] sm:%s173] %v310
                %v312 = vld [vmem:[%s180 + $0x410] sm:%s173]
                %313 = vst [vmem:[%s181 + $0x208] sm:%s173] %v312
                %v314 = vld [vmem:[%s180 + $0x420] sm:%s173]
                %315 = vst [vmem:[%s181 + $0x210] sm:%s173] %v314
                %v316 = vld [vmem:[%s180 + $0x430] sm:%s173]
                %317 = vst [vmem:[%s181 + $0x218] sm:%s173] %v316
                %v318 = vld [vmem:[%s180 + $0x440] sm:%s173]
                %319 = vst [vmem:[%s181 + $0x220] sm:%s173] %v318
                %v320 = vld [vmem:[%s180 + $0x450] sm:%s173]
                %321 = vst [vmem:[%s181 + $0x228] sm:%s173] %v320
                %v322 = vld [vmem:[%s180 + $0x460] sm:%s173]
                %323 = vst [vmem:[%s181 + $0x230] sm:%s173] %v322
                %v324 = vld [vmem:[%s180 + $0x470] sm:%s173]
                %325 = vst [vmem:[%s181 + $0x238] sm:%s173] %v324
                %v326 = vld [vmem:[%s180 + $0x480] sm:%s173]
                %327 = vst [vmem:[%s181 + $0x240] sm:%s173] %v326
                %v328 = vld [vmem:[%s180 + $0x490] sm:%s173]
                %329 = vst [vmem:[%s181 + $0x248] sm:%s173] %v328
                %v330 = vld [vmem:[%s180 + $0x4a0] sm:%s173]
                %331 = vst [vmem:[%s181 + $0x250] sm:%s173] %v330
                %v332 = vld [vmem:[%s180 + $0x4b0] sm:%s173]
                %333 = vst [vmem:[%s181 + $0x258] sm:%s173] %v332
                %v334 = vld [vmem:[%s180 + $0x4c0] sm:%s173]
                %335 = vst [vmem:[%s181 + $0x260] sm:%s173] %v334
                %v336 = vld [vmem:[%s180 + $0x4d0] sm:%s173]
                %337 = vst [vmem:[%s181 + $0x268] sm:%s173] %v336
                %v338 = vld [vmem:[%s180 + $0x4e0] sm:%s173]
                %339 = vst [vmem:[%s181 + $0x270] sm:%s173] %v338
                %v340 = vld [vmem:[%s180 + $0x4f0] sm:%s173]
                %341 = vst [vmem:[%s181 + $0x278] sm:%s173] %v340
                %v342 = vld [vmem:[%s180 + $0x500] sm:%s173]
                %343 = vst [vmem:[%s181 + $0x280] sm:%s173] %v342
                %v344 = vld [vmem:[%s180 + $0x510] sm:%s173]
                %345 = vst [vmem:[%s181 + $0x288] sm:%s173] %v344
                %v346 = vld [vmem:[%s180 + $0x520] sm:%s173]
                %347 = vst [vmem:[%s181 + $0x290] sm:%s173] %v346
                %v348 = vld [vmem:[%s180 + $0x530] sm:%s173]
                %349 = vst [vmem:[%s181 + $0x298] sm:%s173] %v348
                %v350 = vld [vmem:[%s180 + $0x540] sm:%s173]
                %351 = vst [vmem:[%s181 + $0x2a0] sm:%s173] %v350
                %v352 = vld [vmem:[%s180 + $0x550] sm:%s173]
                %353 = vst [vmem:[%s181 + $0x2a8] sm:%s173] %v352
                %v354 = vld [vmem:[%s180 + $0x560] sm:%s173]
                %355 = vst [vmem:[%s181 + $0x2b0] sm:%s173] %v354
                %v356 = vld [vmem:[%s180 + $0x570] sm:%s173]
                %357 = vst [vmem:[%s181 + $0x2b8] sm:%s173] %v356
                %v358 = vld [vmem:[%s180 + $0x580] sm:%s173]
                %359 = vst [vmem:[%s181 + $0x2c0] sm:%s173] %v358
                %v360 = vld [vmem:[%s180 + $0x590] sm:%s173]
                %361 = vst [vmem:[%s181 + $0x2c8] sm:%s173] %v360
                %v362 = vld [vmem:[%s180 + $0x5a0] sm:%s173]
                %363 = vst [vmem:[%s181 + $0x2d0] sm:%s173] %v362
                %v364 = vld [vmem:[%s180 + $0x5b0] sm:%s173]
                %365 = vst [vmem:[%s181 + $0x2d8] sm:%s173] %v364
                %v366 = vld [vmem:[%s180 + $0x5c0] sm:%s173]
                %367 = vst [vmem:[%s181 + $0x2e0] sm:%s173] %v366
                %v368 = vld [vmem:[%s180 + $0x5d0] sm:%s173]
                %369 = vst [vmem:[%s181 + $0x2e8] sm:%s173] %v368
                %v370 = vld [vmem:[%s180 + $0x5e0] sm:%s173]
                %371 = vst [vmem:[%s181 + $0x2f0] sm:%s173] %v370
                %v372 = vld [vmem:[%s180 + $0x5f0] sm:%s173]
                %373 = vst [vmem:[%s181 + $0x2f8] sm:%s173] %v372
                %v374 = vld [vmem:[%s180 + $0x600] sm:%s173]
                %375 = vst [vmem:[%s181 + $0x300] sm:%s173] %v374
                %v376 = vld [vmem:[%s180 + $0x610] sm:%s173]
                %377 = vst [vmem:[%s181 + $0x308] sm:%s173] %v376
                %v378 = vld [vmem:[%s180 + $0x620] sm:%s173]
                %379 = vst [vmem:[%s181 + $0x310] sm:%s173] %v378
                %v380 = vld [vmem:[%s180 + $0x630] sm:%s173]
                %381 = vst [vmem:[%s181 + $0x318] sm:%s173] %v380
                %v382 = vld [vmem:[%s180 + $0x640] sm:%s173]
                %383 = vst [vmem:[%s181 + $0x320] sm:%s173] %v382
                %v384 = vld [vmem:[%s180 + $0x650] sm:%s173]
                %385 = vst [vmem:[%s181 + $0x328] sm:%s173] %v384
                %v386 = vld [vmem:[%s180 + $0x660] sm:%s173]
                %387 = vst [vmem:[%s181 + $0x330] sm:%s173] %v386
                %v388 = vld [vmem:[%s180 + $0x670] sm:%s173]
                %389 = vst [vmem:[%s181 + $0x338] sm:%s173] %v388
                %v390 = vld [vmem:[%s180 + $0x680] sm:%s173]
                %391 = vst [vmem:[%s181 + $0x340] sm:%s173] %v390
                %v392 = vld [vmem:[%s180 + $0x690] sm:%s173]
                %393 = vst [vmem:[%s181 + $0x348] sm:%s173] %v392
                %v394 = vld [vmem:[%s180 + $0x6a0] sm:%s173]
                %395 = vst [vmem:[%s181 + $0x350] sm:%s173] %v394
                %v396 = vld [vmem:[%s180 + $0x6b0] sm:%s173]
                %397 = vst [vmem:[%s181 + $0x358] sm:%s173] %v396
                %v398 = vld [vmem:[%s180 + $0x6c0] sm:%s173]
                %399 = vst [vmem:[%s181 + $0x360] sm:%s173] %v398
                %v400 = vld [vmem:[%s180 + $0x6d0] sm:%s173]
                %401 = vst [vmem:[%s181 + $0x368] sm:%s173] %v400
                %v402 = vld [vmem:[%s180 + $0x6e0] sm:%s173]
                %403 = vst [vmem:[%s181 + $0x370] sm:%s173] %v402
                %v404 = vld [vmem:[%s180 + $0x6f0] sm:%s173]
                %405 = vst [vmem:[%s181 + $0x378] sm:%s173] %v404
                %v406 = vld [vmem:[%s180 + $0x700] sm:%s173]
                %407 = vst [vmem:[%s181 + $0x380] sm:%s173] %v406
                %v408 = vld [vmem:[%s180 + $0x710] sm:%s173]
                %409 = vst [vmem:[%s181 + $0x388] sm:%s173] %v408
                %v410 = vld [vmem:[%s180 + $0x720] sm:%s173]
                %411 = vst [vmem:[%s181 + $0x390] sm:%s173] %v410
                %v412 = vld [vmem:[%s180 + $0x730] sm:%s173]
                %413 = vst [vmem:[%s181 + $0x398] sm:%s173] %v412
                %v414 = vld [vmem:[%s180 + $0x740] sm:%s173]
                %415 = vst [vmem:[%s181 + $0x3a0] sm:%s173] %v414
                %v416 = vld [vmem:[%s180 + $0x750] sm:%s173]
                %417 = vst [vmem:[%s181 + $0x3a8] sm:%s173] %v416
                %v418 = vld [vmem:[%s180 + $0x760] sm:%s173]
                %419 = vst [vmem:[%s181 + $0x3b0] sm:%s173] %v418
                %v420 = vld [vmem:[%s180 + $0x770] sm:%s173]
                %421 = vst [vmem:[%s181 + $0x3b8] sm:%s173] %v420
                %v422 = vld [vmem:[%s180 + $0x780] sm:%s173]
                %423 = vst [vmem:[%s181 + $0x3c0] sm:%s173] %v422
                %v424 = vld [vmem:[%s180 + $0x790] sm:%s173]
                %425 = vst [vmem:[%s181 + $0x3c8] sm:%s173] %v424
                %v426 = vld [vmem:[%s180 + $0x7a0] sm:%s173]
                %427 = vst [vmem:[%s181 + $0x3d0] sm:%s173] %v426
                %v428 = vld [vmem:[%s180 + $0x7b0] sm:%s173]
                %429 = vst [vmem:[%s181 + $0x3d8] sm:%s173] %v428
                %v430 = vld [vmem:[%s180 + $0x7c0] sm:%s173]
                %431 = vst [vmem:[%s181 + $0x3e0] sm:%s173] %v430
                %v432 = vld [vmem:[%s180 + $0x7d0] sm:%s173]
                %433 = vst [vmem:[%s181 + $0x3e8] sm:%s173] %v432
                %v434 = vld [vmem:[%s180 + $0x7e0] sm:%s173]
                %435 = vst [vmem:[%s181 + $0x3f0] sm:%s173] %v434
                %v436 = vld [vmem:[%s180 + $0x7f0] sm:%s173]
                %437 = vst [vmem:[%s181 + $0x3f8] sm:%s173] %v436
                %v438 = vld [vmem:[%s180 + $0x800] sm:%s173]
                %439 = vst [vmem:[%s181 + $0x400] sm:%s173] %v438
                %v440 = vld [vmem:[%s180 + $0x810] sm:%s173]
                %441 = vst [vmem:[%s181 + $0x408] sm:%s173] %v440
                %v442 = vld [vmem:[%s180 + $0x820] sm:%s173]
                %443 = vst [vmem:[%s181 + $0x410] sm:%s173] %v442
                %v444 = vld [vmem:[%s180 + $0x830] sm:%s173]
                %445 = vst [vmem:[%s181 + $0x418] sm:%s173] %v444
                %v446 = vld [vmem:[%s180 + $0x840] sm:%s173]
                %447 = vst [vmem:[%s181 + $0x420] sm:%s173] %v446
                %v448 = vld [vmem:[%s180 + $0x850] sm:%s173]
                %449 = vst [vmem:[%s181 + $0x428] sm:%s173] %v448
                %v450 = vld [vmem:[%s180 + $0x860] sm:%s173]
                %451 = vst [vmem:[%s181 + $0x430] sm:%s173] %v450
                %v452 = vld [vmem:[%s180 + $0x870] sm:%s173]
                %453 = vst [vmem:[%s181 + $0x438] sm:%s173] %v452
                %v454 = vld [vmem:[%s180 + $0x880] sm:%s173]
                %455 = vst [vmem:[%s181 + $0x440] sm:%s173] %v454
                %v456 = vld [vmem:[%s180 + $0x890] sm:%s173]
                %457 = vst [vmem:[%s181 + $0x448] sm:%s173] %v456
                %v458 = vld [vmem:[%s180 + $0x8a0] sm:%s173]
                %459 = vst [vmem:[%s181 + $0x450] sm:%s173] %v458
                %v460 = vld [vmem:[%s180 + $0x8b0] sm:%s173]
                %461 = vst [vmem:[%s181 + $0x458] sm:%s173] %v460
                %v462 = vld [vmem:[%s180 + $0x8c0] sm:%s173]
                %463 = vst [vmem:[%s181 + $0x460] sm:%s173] %v462
                %v464 = vld [vmem:[%s180 + $0x8d0] sm:%s173]
                %465 = vst [vmem:[%s181 + $0x468] sm:%s173] %v464
                %v466 = vld [vmem:[%s180 + $0x8e0] sm:%s173]
                %467 = vst [vmem:[%s181 + $0x470] sm:%s173] %v466
                %v468 = vld [vmem:[%s180 + $0x8f0] sm:%s173]
                %469 = vst [vmem:[%s181 + $0x478] sm:%s173] %v468
              $region41: #{vgg_forward.6} parent=35 // loop_footer
                %s179 = sadd.s32 1, %s175
              $region42: #{vgg_forward.6} parent=35 // loop_footer_branch
                %174 = sbr.rel target = $region38
              $region43: #{vgg_forward.6} parent=35 // loop_exit
                _
            $region36: #{vgg_forward.6} parent=27 // pred_fallthru
              _
          $region28: #{vgg_forward.6} parent=23 // pred_fallthru
            _
          %770 = vnop
        $region24: #{vgg_forward.6} parent=19 // pred_fallthru
          _
        // Predicated region
        $region59: #{vgg_forward.6} parent=19 // pred_check
          %p771 = pneg %p93
        $region60: #{vgg_forward.6} parent=19 // pred_check_branch
          %773 = sbr.rel (%p771) target = $region62
        $region61: #{vgg_forward.6} parent=19 // pred_region
          %s774 = smul.u32 2, %s17
          %p775 = scmp.lt.s32.totalorder %s774, 3
          %s776 = scalar_select %p775, %s774, 3
          %s777 = scalar_lea.vmem %s2, %s776
          %s778 = smul.u32 2, %s17
        $region62: #{vgg_forward.6} parent=19 // pred_fallthru
          _
      $region20: #{vgg_forward.6} parent=5 // pred_fallthru
        _
      %p779 = scmp.le.s32.totalorder 1, %s9
      %p780 = scmp.lt.s32.totalorder %s9, 3
      %p781 = pnand %p779, %p780
      %p782 = pneg %p781
      // Predicated region
      $region63: #{vgg_forward.6} parent=5 // pred_check
        _
      $region64: #{vgg_forward.6} parent=5 // pred_check_branch
        %784 = sbr.rel (%p781) target = $region66
      $region65: #{vgg_forward.6} parent=5 // pred_region
        %s785 = ssub.s32 %s9, 1
        %s786 = sand.u32 %s60, 1
        %s787 = sand.u32 %s60, 1
        %s788 = smul.addr %s787, 1152
        %s789 = scalar_lea.vmem [#allocation2], %s788
        // Predicated region
        $region67: #{vgg_forward.6} parent=65 // pred_check
          %p790 = pneg %p73
        $region68: #{vgg_forward.6} parent=65 // pred_check_branch
          %792 = sbr.rel (%p790) target = $region70
        $region69: #{vgg_forward.6} parent=65 // pred_region
          _
        $region70: #{vgg_forward.6} parent=65 // pred_fallthru
          _
        %s793 = smul.u32 4, %s18
        %p794 = scmp.lt.s32.totalorder %s793, 3
        %s795 = scalar_select %p794, %s793, 3
        %s796 = smul.addr %s795, 9
        %s797 = smul.addr %s796, 4
        %s798 = scalar_lea.vmem %s0, %s797
        %p799 = pneg %p47
        %p800 = pneg %p44
        %s801 = sand.u32 %s60, 1
        %s802 = sand.u32 %s60, 1
        %s803 = smul.addr %s802, 1152
        %s804 = scalar_lea.vmem [#allocation2], %s803
        %p805 = pneg %p73
        %p806 = pneg %p70
        %s807 = smul.u32 2, %s19
        %p808 = scmp.lt.s32.totalorder %s807, 3
        %s809 = scalar_select %p808, %s807, 3
        %s810 = scalar_lea.vmem %s2, %s809
        %p811 = pneg %p99
        %p812 = pneg %p96
        %p813 = pneg %p127
        %p814 = pneg %p124
        %s815 = smul.u32 2, %s19
        %p816 = scmp.lt.s32.totalorder %s18, 0
        %s817 = scalar_select %p816, %s18, 0
        %p818 = scmp.lt.s32.totalorder %s815, 3
        %s819 = scalar_select %p818, %s815, 3
        %s820 = smul.addr %s817, 4
        %s821 = sadd.s32 %s819, %s820
        %s822 = smul.addr %s821, 4
        %s823 = scalar_lea.vmem %s3, %s822
        %s824 = smul.u32 4, %s18
        %p825 = scmp.lt.s32.totalorder %s824, 3
        %s826 = scalar_select %p825, %s824, 3
        %s827 = smul.addr %s826, 9
        %s828 = smul.addr %s827, 4
        %s829 = scalar_lea.vmem %s0, %s828
        %s830 = smul.u32 4, %s18
        %s831 = smul.u32 2, %s19
        %s832 = smul.u32 2, %s19
        %p833 = scmp.lt.s32.totalorder %s832, 3
        %s834 = scalar_select %p833, %s832, 3
        %s835 = scalar_lea.vmem %s2, %s834
        %s836 = smul.u32 2, %s19
        %s837 = smul.u32 2, %s19
        %p838 = scmp.lt.s32.totalorder %s18, 0
        %s839 = scalar_select %p838, %s18, 0
        %p840 = scmp.lt.s32.totalorder %s837, 3
        %s841 = scalar_select %p840, %s837, 3
        %s842 = smul.addr %s839, 4
        %s843 = sadd.s32 %s841, %s842
        %s844 = smul.addr %s843, 4
        %s845 = scalar_lea.vmem %s3, %s844
        %s846 = smul.u32 2, %s19
        %v848 = vld [vmem:[%s829] sm:$0xff]
        %v849 = vld [vmem:[%s829 + $0x8] sm:$0xff]
        %v850 = vld [vmem:[%s829 + $0x10] sm:$0xff]
        %v851 = vld [vmem:[%s829 + $0x18] sm:$0xff]
        %v852 = vld [vmem:[%s829 + $0x20] sm:$0xf]
        %v853 = vld [vmem:[%s829 + $0x24] sm:$0xff]
        %v854 = vld [vmem:[%s829 + $0x2c] sm:$0xff]
        %v855 = vld [vmem:[%s829 + $0x34] sm:$0xff]
        %v856 = vld [vmem:[%s829 + $0x3c] sm:$0xff]
        %v857 = vld [vmem:[%s829 + $0x44] sm:$0xf]
        %v858 = vld [vmem:[%s829 + $0x48] sm:$0xff]
        %v859 = vld [vmem:[%s829 + $0x50] sm:$0xff]
        %v860 = vld [vmem:[%s829 + $0x58] sm:$0xff]
        %v861 = vld [vmem:[%s829 + $0x60] sm:$0xff]
        %v862 = vld [vmem:[%s829 + $0x68] sm:$0xf]
        %v863 = vld [vmem:[%s829 + $0x6c] sm:$0xff]
        %v864 = vld [vmem:[%s829 + $0x74] sm:$0xff]
        %v865 = vld [vmem:[%s829 + $0x7c] sm:$0xff]
        %v866 = vld [vmem:[%s829 + $0x84] sm:$0xff]
        %v867 = vld [vmem:[%s829 + $0x8c] sm:$0xf]
        %v868 = vld [vmem:[%s789] sm:$0xff]
        %v869 = vld [vmem:[%s789 + $0x8] sm:$0xff]
        %v870 = vld [vmem:[%s789 + $0x10] sm:$0xff]
        %v871 = vld [vmem:[%s789 + $0x18] sm:$0xff]
        %v872 = vld [vmem:[%s789 + $0x20] sm:$0xff]
        %v873 = vld [vmem:[%s789 + $0x28] sm:$0xff]
        %v874 = vld [vmem:[%s789 + $0x30] sm:$0xff]
        %v875 = vld [vmem:[%s789 + $0x38] sm:$0xff]
        %v876 = vld [vmem:[%s789 + $0x40] sm:$0xff]
        %v877 = vld [vmem:[%s789 + $0x48] sm:$0xff]
        %v878 = vld [vmem:[%s789 + $0x50] sm:$0xff]
        %v879 = vld [vmem:[%s789 + $0x58] sm:$0xff]
        %v880 = vld [vmem:[%s789 + $0x60] sm:$0xff]
        %v881 = vld [vmem:[%s789 + $0x68] sm:$0xff]
        %v882 = vld [vmem:[%s789 + $0x70] sm:$0xff]
        %v883 = vld [vmem:[%s789 + $0x78] sm:$0xff]
        %v884 = vld [vmem:[%s789 + $0x80] sm:$0xff]
        %v885 = vld [vmem:[%s789 + $0x88] sm:$0xff]
        %v886 = vld [vmem:[%s789 + $0x90] sm:$0xff]
        %v887 = vld [vmem:[%s789 + $0x98] sm:$0xff]
        %v888 = vld [vmem:[%s789 + $0xa0] sm:$0xff]
        %v889 = vld [vmem:[%s789 + $0xa8] sm:$0xff]
        %v890 = vld [vmem:[%s789 + $0xb0] sm:$0xff]
        %v891 = vld [vmem:[%s789 + $0xb8] sm:$0xff]
        %v892 = vld [vmem:[%s789 + $0xc0] sm:$0xff]
        %v893 = vld [vmem:[%s789 + $0xc8] sm:$0xff]
        %v894 = vld [vmem:[%s789 + $0xd0] sm:$0xff]
        %v895 = vld [vmem:[%s789 + $0xd8] sm:$0xff]
        %v896 = vld [vmem:[%s789 + $0xe0] sm:$0xff]
        %v897 = vld [vmem:[%s789 + $0xe8] sm:$0xff]
        %v898 = vld [vmem:[%s789 + $0xf0] sm:$0xff]
        %v899 = vld [vmem:[%s789 + $0xf8] sm:$0xff]
        %v900 = vld [vmem:[%s789 + $0x100] sm:$0xff]
        %v901 = vld [vmem:[%s789 + $0x108] sm:$0xff]
        %v902 = vld [vmem:[%s789 + $0x110] sm:$0xff]
        %v903 = vld [vmem:[%s789 + $0x118] sm:$0xff]
        %v904 = vld [vmem:[%s789 + $0x120] sm:$0xff]
        %v905 = vld [vmem:[%s789 + $0x128] sm:$0xff]
        %v906 = vld [vmem:[%s789 + $0x130] sm:$0xff]
        %v907 = vld [vmem:[%s789 + $0x138] sm:$0xff]
        %v908 = vld [vmem:[%s789 + $0x140] sm:$0xff]
        %v909 = vld [vmem:[%s789 + $0x148] sm:$0xff]
        %v910 = vld [vmem:[%s789 + $0x150] sm:$0xff]
        %v911 = vld [vmem:[%s789 + $0x158] sm:$0xff]
        %v912 = vld [vmem:[%s789 + $0x160] sm:$0xff]
        %v913 = vld [vmem:[%s789 + $0x168] sm:$0xff]
        %v914 = vld [vmem:[%s789 + $0x170] sm:$0xff]
        %v915 = vld [vmem:[%s789 + $0x178] sm:$0xff]
        %v916 = vld [vmem:[%s789 + $0x180] sm:$0xff]
        %v917 = vld [vmem:[%s789 + $0x188] sm:$0xff]
        %v918 = vld [vmem:[%s789 + $0x190] sm:$0xff]
        %v919 = vld [vmem:[%s789 + $0x198] sm:$0xff]
        %v920 = vld [vmem:[%s789 + $0x1a0] sm:$0xff]
        %v921 = vld [vmem:[%s789 + $0x1a8] sm:$0xff]
        %v922 = vld [vmem:[%s789 + $0x1b0] sm:$0xff]
        %v923 = vld [vmem:[%s789 + $0x1b8] sm:$0xff]
        %v924 = vld [vmem:[%s789 + $0x1c0] sm:$0xff]
        %v925 = vld [vmem:[%s789 + $0x1c8] sm:$0xff]
        %v926 = vld [vmem:[%s789 + $0x1d0] sm:$0xff]
        %v927 = vld [vmem:[%s789 + $0x1d8] sm:$0xff]
        %v928 = vld [vmem:[%s789 + $0x1e0] sm:$0xff]
        %v929 = vld [vmem:[%s789 + $0x1e8] sm:$0xff]
        %v930 = vld [vmem:[%s789 + $0x1f0] sm:$0xff]
        %v931 = vld [vmem:[%s789 + $0x1f8] sm:$0xff]
        %v932 = vld [vmem:[%s789 + $0x200] sm:$0xff]
        %v933 = vld [vmem:[%s789 + $0x208] sm:$0xff]
        %v934 = vld [vmem:[%s789 + $0x210] sm:$0xff]
        %v935 = vld [vmem:[%s789 + $0x218] sm:$0xff]
        %v936 = vld [vmem:[%s789 + $0x220] sm:$0xff]
        %v937 = vld [vmem:[%s789 + $0x228] sm:$0xff]
        %v938 = vld [vmem:[%s789 + $0x230] sm:$0xff]
        %v939 = vld [vmem:[%s789 + $0x238] sm:$0xff]
        %v940 = vld [vmem:[%s789 + $0x240] sm:$0xff]
        %v941 = vld [vmem:[%s789 + $0x248] sm:$0xff]
        %v942 = vld [vmem:[%s789 + $0x250] sm:$0xff]
        %v943 = vld [vmem:[%s789 + $0x258] sm:$0xff]
        %v944 = vld [vmem:[%s789 + $0x260] sm:$0xff]
        %v945 = vld [vmem:[%s789 + $0x268] sm:$0xff]
        %v946 = vld [vmem:[%s789 + $0x270] sm:$0xff]
        %v947 = vld [vmem:[%s789 + $0x278] sm:$0xff]
        %v948 = vld [vmem:[%s789 + $0x280] sm:$0xff]
        %v949 = vld [vmem:[%s789 + $0x288] sm:$0xff]
        %v950 = vld [vmem:[%s789 + $0x290] sm:$0xff]
        %v951 = vld [vmem:[%s789 + $0x298] sm:$0xff]
        %v952 = vld [vmem:[%s789 + $0x2a0] sm:$0xff]
        %v953 = vld [vmem:[%s789 + $0x2a8] sm:$0xff]
        %v954 = vld [vmem:[%s789 + $0x2b0] sm:$0xff]
        %v955 = vld [vmem:[%s789 + $0x2b8] sm:$0xff]
        %v956 = vld [vmem:[%s789 + $0x2c0] sm:$0xff]
        %v957 = vld [vmem:[%s789 + $0x2c8] sm:$0xff]
        %v958 = vld [vmem:[%s789 + $0x2d0] sm:$0xff]
        %v959 = vld [vmem:[%s789 + $0x2d8] sm:$0xff]
        %v960 = vld [vmem:[%s789 + $0x2e0] sm:$0xff]
        %v961 = vld [vmem:[%s789 + $0x2e8] sm:$0xff]
        %v962 = vld [vmem:[%s789 + $0x2f0] sm:$0xff]
        %v963 = vld [vmem:[%s789 + $0x2f8] sm:$0xff]
        %v964 = vld [vmem:[%s789 + $0x300] sm:$0xff]
        %v965 = vld [vmem:[%s789 + $0x308] sm:$0xff]
        %v966 = vld [vmem:[%s789 + $0x310] sm:$0xff]
        %v967 = vld [vmem:[%s789 + $0x318] sm:$0xff]
        %v968 = vld [vmem:[%s789 + $0x320] sm:$0xff]
        %v969 = vld [vmem:[%s789 + $0x328] sm:$0xff]
        %v970 = vld [vmem:[%s789 + $0x330] sm:$0xff]
        %v971 = vld [vmem:[%s789 + $0x338] sm:$0xff]
        %v972 = vld [vmem:[%s789 + $0x340] sm:$0xff]
        %v973 = vld [vmem:[%s789 + $0x348] sm:$0xff]
        %v974 = vld [vmem:[%s789 + $0x350] sm:$0xff]
        %v975 = vld [vmem:[%s789 + $0x358] sm:$0xff]
        %v976 = vld [vmem:[%s789 + $0x360] sm:$0xff]
        %v977 = vld [vmem:[%s789 + $0x368] sm:$0xff]
        %v978 = vld [vmem:[%s789 + $0x370] sm:$0xff]
        %v979 = vld [vmem:[%s789 + $0x378] sm:$0xff]
        %v980 = vld [vmem:[%s789 + $0x380] sm:$0xff]
        %v981 = vld [vmem:[%s789 + $0x388] sm:$0xff]
        %v982 = vld [vmem:[%s789 + $0x390] sm:$0xff]
        %v983 = vld [vmem:[%s789 + $0x398] sm:$0xff]
        %v984 = vld [vmem:[%s789 + $0x3a0] sm:$0xff]
        %v985 = vld [vmem:[%s789 + $0x3a8] sm:$0xff]
        %v986 = vld [vmem:[%s789 + $0x3b0] sm:$0xff]
        %v987 = vld [vmem:[%s789 + $0x3b8] sm:$0xff]
        %v988 = vld [vmem:[%s789 + $0x3c0] sm:$0xff]
        %v989 = vld [vmem:[%s789 + $0x3c8] sm:$0xff]
        %v990 = vld [vmem:[%s789 + $0x3d0] sm:$0xff]
        %v991 = vld [vmem:[%s789 + $0x3d8] sm:$0xff]
        %v992 = vld [vmem:[%s789 + $0x3e0] sm:$0xff]
        %v993 = vld [vmem:[%s789 + $0x3e8] sm:$0xff]
        %v994 = vld [vmem:[%s789 + $0x3f0] sm:$0xff]
        %v995 = vld [vmem:[%s789 + $0x3f8] sm:$0xff]
        %v996 = vld [vmem:[%s789 + $0x400] sm:$0xff]
        %v997 = vld [vmem:[%s789 + $0x408] sm:$0xff]
        %v998 = vld [vmem:[%s789 + $0x410] sm:$0xff]
        %v999 = vld [vmem:[%s789 + $0x418] sm:$0xff]
        %v1000 = vld [vmem:[%s789 + $0x420] sm:$0xff]
        %v1001 = vld [vmem:[%s789 + $0x428] sm:$0xff]
        %v1002 = vld [vmem:[%s789 + $0x430] sm:$0xff]
        %v1003 = vld [vmem:[%s789 + $0x438] sm:$0xff]
        %v1004 = vld [vmem:[%s789 + $0x440] sm:$0xff]
        %v1005 = vld [vmem:[%s789 + $0x448] sm:$0xff]
        %v1006 = vld [vmem:[%s789 + $0x450] sm:$0xff]
        %v1007 = vld [vmem:[%s789 + $0x458] sm:$0xff]
        %v1008 = vld [vmem:[%s789 + $0x460] sm:$0xff]
        %v1009 = vld [vmem:[%s789 + $0x468] sm:$0xff]
        %v1010 = vld [vmem:[%s789 + $0x470] sm:$0xff]
        %v1011 = vld [vmem:[%s789 + $0x478] sm:$0xff]
        %v1032 = vunpack.c.l.b16 %v848
        %v1033 = vunpack.c.h.b16 %v848
        %v1034 = vunpack.c.l.b16 %v849
        %v1035 = vunpack.c.h.b16 %v849
        %v1036 = vunpack.c.l.b16 %v850
        %v1037 = vunpack.c.h.b16 %v850
        %v1038 = vunpack.c.l.b16 %v851
        %v1039 = vunpack.c.h.b16 %v851
        %v1040 = vunpack.c.l.b16 %v852
        %v1041 = vunpack.c.l.b16 %v853
        %v1042 = vunpack.c.h.b16 %v853
        %v1043 = vunpack.c.l.b16 %v854
        %v1044 = vunpack.c.h.b16 %v854
        %v1045 = vunpack.c.l.b16 %v855
        %v1046 = vunpack.c.h.b16 %v855
        %v1047 = vunpack.c.l.b16 %v856
        %v1048 = vunpack.c.h.b16 %v856
        %v1049 = vunpack.c.l.b16 %v857
        %v1050 = vunpack.c.l.b16 %v858
        %v1051 = vunpack.c.h.b16 %v858
        %v1052 = vunpack.c.l.b16 %v859
        %v1053 = vunpack.c.h.b16 %v859
        %v1054 = vunpack.c.l.b16 %v860
        %v1055 = vunpack.c.h.b16 %v860
        %v1056 = vunpack.c.l.b16 %v861
        %v1057 = vunpack.c.h.b16 %v861
        %v1058 = vunpack.c.l.b16 %v862
        %v1059 = vunpack.c.l.b16 %v863
        %v1060 = vunpack.c.h.b16 %v863
        %v1061 = vunpack.c.l.b16 %v864
        %v1062 = vunpack.c.h.b16 %v864
        %v1063 = vunpack.c.l.b16 %v865
        %v1064 = vunpack.c.h.b16 %v865
        %v1065 = vunpack.c.l.b16 %v866
        %v1066 = vunpack.c.h.b16 %v866
        %v1067 = vunpack.c.l.b16 %v867
        %v1068 = vpack.c.b16 %v1041, %v1032
        %v1069 = vpack.c.b16 %v1042, %v1033
        %v1070 = vpack.c.b16 %v1043, %v1034
        %v1071 = vpack.c.b16 %v1044, %v1035
        %v1072 = vpack.c.b16 %v1045, %v1036
        %v1073 = vpack.c.b16 %v1046, %v1037
        %v1074 = vpack.c.b16 %v1047, %v1038
        %v1075 = vpack.c.b16 %v1048, %v1039
        %v1076 = vpack.c.b16 %v1049, %v1040
        %v1077 = vpack.c.b16 %v1059, %v1050
        %v1078 = vpack.c.b16 %v1060, %v1051
        %v1079 = vpack.c.b16 %v1061, %v1052
        %v1080 = vpack.c.b16 %v1062, %v1053
        %v1081 = vpack.c.b16 %v1063, %v1054
        %v1082 = vpack.c.b16 %v1064, %v1055
        %v1083 = vpack.c.b16 %v1065, %v1056
        %v1084 = vpack.c.b16 %v1066, %v1057
        %v1085 = vpack.c.b16 %v1067, %v1058
        %v1248 = vunpack.c.l.b16 %v868
        %v1249 = vunpack.c.h.b16 %v868
        %v1250 = vunpack.c.l.b16 %v869
        %v1251 = vunpack.c.h.b16 %v869
        %v1252 = vunpack.c.l.b16 %v870
        %v1253 = vunpack.c.h.b16 %v870
        %v1254 = vunpack.c.l.b16 %v871
        %v1255 = vunpack.c.h.b16 %v871
        %v1256 = vunpack.c.l.b16 %v872
        %v1257 = vunpack.c.h.b16 %v872
        %v1258 = vunpack.c.l.b16 %v873
        %v1259 = vunpack.c.h.b16 %v873
        %v1260 = vunpack.c.l.b16 %v874
        %v1261 = vunpack.c.h.b16 %v874
        %v1262 = vunpack.c.l.b16 %v875
        %v1263 = vunpack.c.h.b16 %v875
        %v1264 = vunpack.c.l.b16 %v876
        %v1265 = vunpack.c.h.b16 %v876
        %v1266 = vunpack.c.l.b16 %v877
        %v1267 = vunpack.c.h.b16 %v877
        %v1268 = vunpack.c.l.b16 %v878
        %v1269 = vunpack.c.h.b16 %v878
        %v1270 = vunpack.c.l.b16 %v879
        %v1271 = vunpack.c.h.b16 %v879
        %v1272 = vunpack.c.l.b16 %v880
        %v1273 = vunpack.c.h.b16 %v880
        %v1274 = vunpack.c.l.b16 %v881
        %v1275 = vunpack.c.h.b16 %v881
        %v1276 = vunpack.c.l.b16 %v882
        %v1277 = vunpack.c.h.b16 %v882
        %v1278 = vunpack.c.l.b16 %v883
        %v1279 = vunpack.c.h.b16 %v883
        %v1280 = vunpack.c.l.b16 %v884
        %v1281 = vunpack.c.h.b16 %v884
        %v1282 = vunpack.c.l.b16 %v885
        %v1283 = vunpack.c.h.b16 %v885
        %v1284 = vunpack.c.l.b16 %v886
        %v1285 = vunpack.c.h.b16 %v886
        %v1286 = vunpack.c.l.b16 %v887
        %v1287 = vunpack.c.h.b16 %v887
        %v1288 = vunpack.c.l.b16 %v888
        %v1289 = vunpack.c.h.b16 %v888
        %v1290 = vunpack.c.l.b16 %v889
        %v1291 = vunpack.c.h.b16 %v889
        %v1292 = vunpack.c.l.b16 %v890
        %v1293 = vunpack.c.h.b16 %v890
        %v1294 = vunpack.c.l.b16 %v891
        %v1295 = vunpack.c.h.b16 %v891
        %v1296 = vunpack.c.l.b16 %v892
        %v1297 = vunpack.c.h.b16 %v892
        %v1298 = vunpack.c.l.b16 %v893
        %v1299 = vunpack.c.h.b16 %v893
        %v1300 = vunpack.c.l.b16 %v894
        %v1301 = vunpack.c.h.b16 %v894
        %v1302 = vunpack.c.l.b16 %v895
        %v1303 = vunpack.c.h.b16 %v895
        %v1304 = vunpack.c.l.b16 %v896
        %v1305 = vunpack.c.h.b16 %v896
        %v1306 = vunpack.c.l.b16 %v897
        %v1307 = vunpack.c.h.b16 %v897
        %v1308 = vunpack.c.l.b16 %v898
        %v1309 = vunpack.c.h.b16 %v898
        %v1310 = vunpack.c.l.b16 %v899
        %v1311 = vunpack.c.h.b16 %v899
        %v1312 = vunpack.c.l.b16 %v900
        %v1313 = vunpack.c.h.b16 %v900
        %v1314 = vunpack.c.l.b16 %v901
        %v1315 = vunpack.c.h.b16 %v901
        %v1316 = vunpack.c.l.b16 %v902
        %v1317 = vunpack.c.h.b16 %v902
        %v1318 = vunpack.c.l.b16 %v903
        %v1319 = vunpack.c.h.b16 %v903
        %v1320 = vunpack.c.l.b16 %v904
        %v1321 = vunpack.c.h.b16 %v904
        %v1322 = vunpack.c.l.b16 %v905
        %v1323 = vunpack.c.h.b16 %v905
        %v1324 = vunpack.c.l.b16 %v906
        %v1325 = vunpack.c.h.b16 %v906
        %v1326 = vunpack.c.l.b16 %v907
        %v1327 = vunpack.c.h.b16 %v907
        %v1328 = vunpack.c.l.b16 %v908
        %v1329 = vunpack.c.h.b16 %v908
        %v1330 = vunpack.c.l.b16 %v909
        %v1331 = vunpack.c.h.b16 %v909
        %v1332 = vunpack.c.l.b16 %v910
        %v1333 = vunpack.c.h.b16 %v910
        %v1334 = vunpack.c.l.b16 %v911
        %v1335 = vunpack.c.h.b16 %v911
        %v1336 = vunpack.c.l.b16 %v912
        %v1337 = vunpack.c.h.b16 %v912
        %v1338 = vunpack.c.l.b16 %v913
        %v1339 = vunpack.c.h.b16 %v913
        %v1340 = vunpack.c.l.b16 %v914
        %v1341 = vunpack.c.h.b16 %v914
        %v1342 = vunpack.c.l.b16 %v915
        %v1343 = vunpack.c.h.b16 %v915
        %v1344 = vunpack.c.l.b16 %v916
        %v1345 = vunpack.c.h.b16 %v916
        %v1346 = vunpack.c.l.b16 %v917
        %v1347 = vunpack.c.h.b16 %v917
        %v1348 = vunpack.c.l.b16 %v918
        %v1349 = vunpack.c.h.b16 %v918
        %v1350 = vunpack.c.l.b16 %v919
        %v1351 = vunpack.c.h.b16 %v919
        %v1352 = vunpack.c.l.b16 %v920
        %v1353 = vunpack.c.h.b16 %v920
        %v1354 = vunpack.c.l.b16 %v921
        %v1355 = vunpack.c.h.b16 %v921
        %v1356 = vunpack.c.l.b16 %v922
        %v1357 = vunpack.c.h.b16 %v922
        %v1358 = vunpack.c.l.b16 %v923
        %v1359 = vunpack.c.h.b16 %v923
        %v1360 = vunpack.c.l.b16 %v924
        %v1361 = vunpack.c.h.b16 %v924
        %v1362 = vunpack.c.l.b16 %v925
        %v1363 = vunpack.c.h.b16 %v925
        %v1364 = vunpack.c.l.b16 %v926
        %v1365 = vunpack.c.h.b16 %v926
        %v1366 = vunpack.c.l.b16 %v927
        %v1367 = vunpack.c.h.b16 %v927
        %v1368 = vunpack.c.l.b16 %v928
        %v1369 = vunpack.c.h.b16 %v928
        %v1370 = vunpack.c.l.b16 %v929
        %v1371 = vunpack.c.h.b16 %v929
        %v1372 = vunpack.c.l.b16 %v930
        %v1373 = vunpack.c.h.b16 %v930
        %v1374 = vunpack.c.l.b16 %v931
        %v1375 = vunpack.c.h.b16 %v931
        %v1376 = vunpack.c.l.b16 %v932
        %v1377 = vunpack.c.h.b16 %v932
        %v1378 = vunpack.c.l.b16 %v933
        %v1379 = vunpack.c.h.b16 %v933
        %v1380 = vunpack.c.l.b16 %v934
        %v1381 = vunpack.c.h.b16 %v934
        %v1382 = vunpack.c.l.b16 %v935
        %v1383 = vunpack.c.h.b16 %v935
        %v1384 = vunpack.c.l.b16 %v936
        %v1385 = vunpack.c.h.b16 %v936
        %v1386 = vunpack.c.l.b16 %v937
        %v1387 = vunpack.c.h.b16 %v937
        %v1388 = vunpack.c.l.b16 %v938
        %v1389 = vunpack.c.h.b16 %v938
        %v1390 = vunpack.c.l.b16 %v939
        %v1391 = vunpack.c.h.b16 %v939
        %v1392 = vunpack.c.l.b16 %v940
        %v1393 = vunpack.c.h.b16 %v940
        %v1394 = vunpack.c.l.b16 %v941
        %v1395 = vunpack.c.h.b16 %v941
        %v1396 = vunpack.c.l.b16 %v942
        %v1397 = vunpack.c.h.b16 %v942
        %v1398 = vunpack.c.l.b16 %v943
        %v1399 = vunpack.c.h.b16 %v943
        %v1400 = vunpack.c.l.b16 %v944
        %v1401 = vunpack.c.h.b16 %v944
        %v1402 = vunpack.c.l.b16 %v945
        %v1403 = vunpack.c.h.b16 %v945
        %v1404 = vunpack.c.l.b16 %v946
        %v1405 = vunpack.c.h.b16 %v946
        %v1406 = vunpack.c.l.b16 %v947
        %v1407 = vunpack.c.h.b16 %v947
        %v1408 = vunpack.c.l.b16 %v948
        %v1409 = vunpack.c.h.b16 %v948
        %v1410 = vunpack.c.l.b16 %v949
        %v1411 = vunpack.c.h.b16 %v949
        %v1412 = vunpack.c.l.b16 %v950
        %v1413 = vunpack.c.h.b16 %v950
        %v1414 = vunpack.c.l.b16 %v951
        %v1415 = vunpack.c.h.b16 %v951
        %v1416 = vunpack.c.l.b16 %v952
        %v1417 = vunpack.c.h.b16 %v952
        %v1418 = vunpack.c.l.b16 %v953
        %v1419 = vunpack.c.h.b16 %v953
        %v1420 = vunpack.c.l.b16 %v954
        %v1421 = vunpack.c.h.b16 %v954
        %v1422 = vunpack.c.l.b16 %v955
        %v1423 = vunpack.c.h.b16 %v955
        %v1424 = vunpack.c.l.b16 %v956
        %v1425 = vunpack.c.h.b16 %v956
        %v1426 = vunpack.c.l.b16 %v957
        %v1427 = vunpack.c.h.b16 %v957
        %v1428 = vunpack.c.l.b16 %v958
        %v1429 = vunpack.c.h.b16 %v958
        %v1430 = vunpack.c.l.b16 %v959
        %v1431 = vunpack.c.h.b16 %v959
        %v1432 = vunpack.c.l.b16 %v960
        %v1433 = vunpack.c.h.b16 %v960
        %v1434 = vunpack.c.l.b16 %v961
        %v1435 = vunpack.c.h.b16 %v961
        %v1436 = vunpack.c.l.b16 %v962
        %v1437 = vunpack.c.h.b16 %v962
        %v1438 = vunpack.c.l.b16 %v963
        %v1439 = vunpack.c.h.b16 %v963
        %v1440 = vunpack.c.l.b16 %v964
        %v1441 = vunpack.c.h.b16 %v964
        %v1442 = vunpack.c.l.b16 %v965
        %v1443 = vunpack.c.h.b16 %v965
        %v1444 = vunpack.c.l.b16 %v966
        %v1445 = vunpack.c.h.b16 %v966
        %v1446 = vunpack.c.l.b16 %v967
        %v1447 = vunpack.c.h.b16 %v967
        %v1448 = vunpack.c.l.b16 %v968
        %v1449 = vunpack.c.h.b16 %v968
        %v1450 = vunpack.c.l.b16 %v969
        %v1451 = vunpack.c.h.b16 %v969
        %v1452 = vunpack.c.l.b16 %v970
        %v1453 = vunpack.c.h.b16 %v970
        %v1454 = vunpack.c.l.b16 %v971
        %v1455 = vunpack.c.h.b16 %v971
        %v1456 = vunpack.c.l.b16 %v972
        %v1457 = vunpack.c.h.b16 %v972
        %v1458 = vunpack.c.l.b16 %v973
        %v1459 = vunpack.c.h.b16 %v973
        %v1460 = vunpack.c.l.b16 %v974
        %v1461 = vunpack.c.h.b16 %v974
        %v1462 = vunpack.c.l.b16 %v975
        %v1463 = vunpack.c.h.b16 %v975
        %v1464 = vunpack.c.l.b16 %v976
        %v1465 = vunpack.c.h.b16 %v976
        %v1466 = vunpack.c.l.b16 %v977
        %v1467 = vunpack.c.h.b16 %v977
        %v1468 = vunpack.c.l.b16 %v978
        %v1469 = vunpack.c.h.b16 %v978
        %v1470 = vunpack.c.l.b16 %v979
        %v1471 = vunpack.c.h.b16 %v979
        %v1472 = vunpack.c.l.b16 %v980
        %v1473 = vunpack.c.h.b16 %v980
        %v1474 = vunpack.c.l.b16 %v981
        %v1475 = vunpack.c.h.b16 %v981
        %v1476 = vunpack.c.l.b16 %v982
        %v1477 = vunpack.c.h.b16 %v982
        %v1478 = vunpack.c.l.b16 %v983
        %v1479 = vunpack.c.h.b16 %v983
        %v1480 = vunpack.c.l.b16 %v984
        %v1481 = vunpack.c.h.b16 %v984
        %v1482 = vunpack.c.l.b16 %v985
        %v1483 = vunpack.c.h.b16 %v985
        %v1484 = vunpack.c.l.b16 %v986
        %v1485 = vunpack.c.h.b16 %v986
        %v1486 = vunpack.c.l.b16 %v987
        %v1487 = vunpack.c.h.b16 %v987
        %v1488 = vunpack.c.l.b16 %v988
        %v1489 = vunpack.c.h.b16 %v988
        %v1490 = vunpack.c.l.b16 %v989
        %v1491 = vunpack.c.h.b16 %v989
        %v1492 = vunpack.c.l.b16 %v990
        %v1493 = vunpack.c.h.b16 %v990
        %v1494 = vunpack.c.l.b16 %v991
        %v1495 = vunpack.c.h.b16 %v991
        %v1496 = vunpack.c.l.b16 %v992
        %v1497 = vunpack.c.h.b16 %v992
        %v1498 = vunpack.c.l.b16 %v993
        %v1499 = vunpack.c.h.b16 %v993
        %v1500 = vunpack.c.l.b16 %v994
        %v1501 = vunpack.c.h.b16 %v994
        %v1502 = vunpack.c.l.b16 %v995
        %v1503 = vunpack.c.h.b16 %v995
        %v1504 = vunpack.c.l.b16 %v996
        %v1505 = vunpack.c.h.b16 %v996
        %v1506 = vunpack.c.l.b16 %v997
        %v1507 = vunpack.c.h.b16 %v997
        %v1508 = vunpack.c.l.b16 %v998
        %v1509 = vunpack.c.h.b16 %v998
        %v1510 = vunpack.c.l.b16 %v999
        %v1511 = vunpack.c.h.b16 %v999
        %v1512 = vunpack.c.l.b16 %v1000
        %v1513 = vunpack.c.h.b16 %v1000
        %v1514 = vunpack.c.l.b16 %v1001
        %v1515 = vunpack.c.h.b16 %v1001
        %v1516 = vunpack.c.l.b16 %v1002
        %v1517 = vunpack.c.h.b16 %v1002
        %v1518 = vunpack.c.l.b16 %v1003
        %v1519 = vunpack.c.h.b16 %v1003
        %v1520 = vunpack.c.l.b16 %v1004
        %v1521 = vunpack.c.h.b16 %v1004
        %v1522 = vunpack.c.l.b16 %v1005
        %v1523 = vunpack.c.h.b16 %v1005
        %v1524 = vunpack.c.l.b16 %v1006
        %v1525 = vunpack.c.h.b16 %v1006
        %v1526 = vunpack.c.l.b16 %v1007
        %v1527 = vunpack.c.h.b16 %v1007
        %v1528 = vunpack.c.l.b16 %v1008
        %v1529 = vunpack.c.h.b16 %v1008
        %v1530 = vunpack.c.l.b16 %v1009
        %v1531 = vunpack.c.h.b16 %v1009
        %v1532 = vunpack.c.l.b16 %v1010
        %v1533 = vunpack.c.h.b16 %v1010
        %v1534 = vunpack.c.l.b16 %v1011
        %v1535 = vunpack.c.h.b16 %v1011
        %v1536 = vpack.c.b16 %v1250, %v1248
        %v1537 = vpack.c.b16 %v1251, %v1249
        %v1538 = vpack.c.b16 %v1254, %v1252
        %v1539 = vpack.c.b16 %v1255, %v1253
        %v1540 = vpack.c.b16 %v1258, %v1256
        %v1541 = vpack.c.b16 %v1259, %v1257
        %v1542 = vpack.c.b16 %v1262, %v1260
        %v1543 = vpack.c.b16 %v1263, %v1261
        %v1544 = vpack.c.b16 %v1266, %v1264
        %v1545 = vpack.c.b16 %v1267, %v1265
        %v1546 = vpack.c.b16 %v1270, %v1268
        %v1547 = vpack.c.b16 %v1271, %v1269
        %v1548 = vpack.c.b16 %v1274, %v1272
        %v1549 = vpack.c.b16 %v1275, %v1273
        %v1550 = vpack.c.b16 %v1278, %v1276
        %v1551 = vpack.c.b16 %v1279, %v1277
        %v1552 = vpack.c.b16 %v1282, %v1280
        %v1553 = vpack.c.b16 %v1283, %v1281
        %v1554 = vpack.c.b16 %v1286, %v1284
        %v1555 = vpack.c.b16 %v1287, %v1285
        %v1556 = vpack.c.b16 %v1290, %v1288
        %v1557 = vpack.c.b16 %v1291, %v1289
        %v1558 = vpack.c.b16 %v1294, %v1292
        %v1559 = vpack.c.b16 %v1295, %v1293
        %v1560 = vpack.c.b16 %v1298, %v1296
        %v1561 = vpack.c.b16 %v1299, %v1297
        %v1562 = vpack.c.b16 %v1302, %v1300
        %v1563 = vpack.c.b16 %v1303, %v1301
        %v1564 = vpack.c.b16 %v1306, %v1304
        %v1565 = vpack.c.b16 %v1307, %v1305
        %v1566 = vpack.c.b16 %v1310, %v1308
        %v1567 = vpack.c.b16 %v1311, %v1309
        %v1568 = vpack.c.b16 %v1314, %v1312
        %v1569 = vpack.c.b16 %v1315, %v1313
        %v1570 = vpack.c.b16 %v1318, %v1316
        %v1571 = vpack.c.b16 %v1319, %v1317
        %v1572 = vpack.c.b16 %v1322, %v1320
        %v1573 = vpack.c.b16 %v1323, %v1321
        %v1574 = vpack.c.b16 %v1326, %v1324
        %v1575 = vpack.c.b16 %v1327, %v1325
        %v1576 = vpack.c.b16 %v1330, %v1328
        %v1577 = vpack.c.b16 %v1331, %v1329
        %v1578 = vpack.c.b16 %v1334, %v1332
        %v1579 = vpack.c.b16 %v1335, %v1333
        %v1580 = vpack.c.b16 %v1338, %v1336
        %v1581 = vpack.c.b16 %v1339, %v1337
        %v1582 = vpack.c.b16 %v1342, %v1340
        %v1583 = vpack.c.b16 %v1343, %v1341
        %v1584 = vpack.c.b16 %v1346, %v1344
        %v1585 = vpack.c.b16 %v1347, %v1345
        %v1586 = vpack.c.b16 %v1350, %v1348
        %v1587 = vpack.c.b16 %v1351, %v1349
        %v1588 = vpack.c.b16 %v1354, %v1352
        %v1589 = vpack.c.b16 %v1355, %v1353
        %v1590 = vpack.c.b16 %v1358, %v1356
        %v1591 = vpack.c.b16 %v1359, %v1357
        %v1592 = vpack.c.b16 %v1362, %v1360
        %v1593 = vpack.c.b16 %v1363, %v1361
        %v1594 = vpack.c.b16 %v1366, %v1364
        %v1595 = vpack.c.b16 %v1367, %v1365
        %v1596 = vpack.c.b16 %v1370, %v1368
        %v1597 = vpack.c.b16 %v1371, %v1369
        %v1598 = vpack.c.b16 %v1374, %v1372
        %v1599 = vpack.c.b16 %v1375, %v1373
        %v1600 = vpack.c.b16 %v1378, %v1376
        %v1601 = vpack.c.b16 %v1379, %v1377
        %v1602 = vpack.c.b16 %v1382, %v1380
        %v1603 = vpack.c.b16 %v1383, %v1381
        %v1604 = vpack.c.b16 %v1386, %v1384
        %v1605 = vpack.c.b16 %v1387, %v1385
        %v1606 = vpack.c.b16 %v1390, %v1388
        %v1607 = vpack.c.b16 %v1391, %v1389
        %v1608 = vpack.c.b16 %v1394, %v1392
        %v1609 = vpack.c.b16 %v1395, %v1393
        %v1610 = vpack.c.b16 %v1398, %v1396
        %v1611 = vpack.c.b16 %v1399, %v1397
        %v1612 = vpack.c.b16 %v1402, %v1400
        %v1613 = vpack.c.b16 %v1403, %v1401
        %v1614 = vpack.c.b16 %v1406, %v1404
        %v1615 = vpack.c.b16 %v1407, %v1405
        %v1616 = vpack.c.b16 %v1410, %v1408
        %v1617 = vpack.c.b16 %v1411, %v1409
        %v1618 = vpack.c.b16 %v1414, %v1412
        %v1619 = vpack.c.b16 %v1415, %v1413
        %v1620 = vpack.c.b16 %v1418, %v1416
        %v1621 = vpack.c.b16 %v1419, %v1417
        %v1622 = vpack.c.b16 %v1422, %v1420
        %v1623 = vpack.c.b16 %v1423, %v1421
        %v1624 = vpack.c.b16 %v1426, %v1424
        %v1625 = vpack.c.b16 %v1427, %v1425
        %v1626 = vpack.c.b16 %v1430, %v1428
        %v1627 = vpack.c.b16 %v1431, %v1429
        %v1628 = vpack.c.b16 %v1434, %v1432
        %v1629 = vpack.c.b16 %v1435, %v1433
        %v1630 = vpack.c.b16 %v1438, %v1436
        %v1631 = vpack.c.b16 %v1439, %v1437
        %v1632 = vpack.c.b16 %v1442, %v1440
        %v1633 = vpack.c.b16 %v1443, %v1441
        %v1634 = vpack.c.b16 %v1446, %v1444
        %v1635 = vpack.c.b16 %v1447, %v1445
        %v1636 = vpack.c.b16 %v1450, %v1448
        %v1637 = vpack.c.b16 %v1451, %v1449
        %v1638 = vpack.c.b16 %v1454, %v1452
        %v1639 = vpack.c.b16 %v1455, %v1453
        %v1640 = vpack.c.b16 %v1458, %v1456
        %v1641 = vpack.c.b16 %v1459, %v1457
        %v1642 = vpack.c.b16 %v1462, %v1460
        %v1643 = vpack.c.b16 %v1463, %v1461
        %v1644 = vpack.c.b16 %v1466, %v1464
        %v1645 = vpack.c.b16 %v1467, %v1465
        %v1646 = vpack.c.b16 %v1470, %v1468
        %v1647 = vpack.c.b16 %v1471, %v1469
        %v1648 = vpack.c.b16 %v1474, %v1472
        %v1649 = vpack.c.b16 %v1475, %v1473
        %v1650 = vpack.c.b16 %v1478, %v1476
        %v1651 = vpack.c.b16 %v1479, %v1477
        %v1652 = vpack.c.b16 %v1482, %v1480
        %v1653 = vpack.c.b16 %v1483, %v1481
        %v1654 = vpack.c.b16 %v1486, %v1484
        %v1655 = vpack.c.b16 %v1487, %v1485
        %v1656 = vpack.c.b16 %v1490, %v1488
        %v1657 = vpack.c.b16 %v1491, %v1489
        %v1658 = vpack.c.b16 %v1494, %v1492
        %v1659 = vpack.c.b16 %v1495, %v1493
        %v1660 = vpack.c.b16 %v1498, %v1496
        %v1661 = vpack.c.b16 %v1499, %v1497
        %v1662 = vpack.c.b16 %v1502, %v1500
        %v1663 = vpack.c.b16 %v1503, %v1501
        %v1664 = vpack.c.b16 %v1506, %v1504
        %v1665 = vpack.c.b16 %v1507, %v1505
        %v1666 = vpack.c.b16 %v1510, %v1508
        %v1667 = vpack.c.b16 %v1511, %v1509
        %v1668 = vpack.c.b16 %v1514, %v1512
        %v1669 = vpack.c.b16 %v1515, %v1513
        %v1670 = vpack.c.b16 %v1518, %v1516
        %v1671 = vpack.c.b16 %v1519, %v1517
        %v1672 = vpack.c.b16 %v1522, %v1520
        %v1673 = vpack.c.b16 %v1523, %v1521
        %v1674 = vpack.c.b16 %v1526, %v1524
        %v1675 = vpack.c.b16 %v1527, %v1525
        %v1676 = vpack.c.b16 %v1530, %v1528
        %v1677 = vpack.c.b16 %v1531, %v1529
        %v1678 = vpack.c.b16 %v1534, %v1532
        %v1679 = vpack.c.b16 %v1535, %v1533
        %1824 = vmatprep.subr.bf16.mxu0 %v1551
        %1825 = vmatpush1.bf16.msra.mxu0 %v1550
        %1826 = vmatprep.subr.bf16.mxu0 %v1549
        %1827 = vmatpush1.bf16.msra.mxu0 %v1548
        %1828 = vmatprep.subr.bf16.mxu0 %v1547
        %1829 = vmatpush1.bf16.msra.mxu0 %v1546
        %1830 = vmatprep.subr.bf16.mxu0 %v1545
        %1831 = vmatpush1.bf16.msra.mxu0 %v1544
        %1832 = vmatprep.subr.bf16.mxu0 %v1543
        %1833 = vmatpush1.bf16.msra.mxu0 %v1542
        %1834 = vmatprep.subr.bf16.mxu0 %v1541
        %1835 = vmatpush1.bf16.msra.mxu0 %v1540
        %1836 = vmatprep.subr.bf16.mxu0 %v1539
        %1837 = vmatpush1.bf16.msra.mxu0 %v1538
        %1838 = vmatprep.subr.bf16.mxu0 %v1537
        %1839 = vmatpush1.bf16.msra.mxu0 %v1536
        %1840 = vmatprep.subr.bf16.mxu0 %v1567
        %1841 = vmatpush2.bf16.msra.mxu0 %v1566
        %1842 = vmatprep.subr.bf16.mxu0 %v1565
        %1843 = vmatpush2.bf16.msra.mxu0 %v1564
        %1844 = vmatprep.subr.bf16.mxu0 %v1563
        %1845 = vmatpush2.bf16.msra.mxu0 %v1562
        %1846 = vmatprep.subr.bf16.mxu0 %v1561
        %1847 = vmatpush2.bf16.msra.mxu0 %v1560
        %1848 = vmatprep.subr.bf16.mxu0 %v1559
        %1849 = vmatpush2.bf16.msra.mxu0 %v1558
        %1850 = vmatprep.subr.bf16.mxu0 %v1557
        %1851 = vmatpush2.bf16.msra.mxu0 %v1556
        %1852 = vmatprep.subr.bf16.mxu0 %v1555
        %1853 = vmatpush2.bf16.msra.mxu0 %v1554
        %1854 = vmatprep.subr.bf16.mxu0 %v1553
        %1855 = vmatpush2.bf16.msra.mxu0 %v1552
        %1856 = vmatprep.mubr.bf16.mxu0 %v1069
        %1857 = vmatmul.mubr.bf16.gmra.mxu0 %v1068
        %v1858 = vpop.f32.mrf.mxu0
        %v1859 = vadd.f32 0.0, %v1858
        %v1860 = vpop.f32.mrf.mxu0
        %v1861 = vadd.f32 0.0, %v1860
        %v1862 = vpop.f32.mrf.mxu0
        %v1863 = vadd.f32 0.0, %v1862
        %v1864 = vpop.f32.mrf.mxu0
        %v1865 = vadd.f32 0.0, %v1864
        %1866 = vmatprep.mubr.bf16.mxu0 %v1078
        %1867 = vmatmul.mubr.bf16.gmra.mxu0 %v1077
        %v1868 = vpop.f32.mrf.mxu0
        %v1869 = vadd.f32 0.0, %v1868
        %v1870 = vpop.f32.mrf.mxu0
        %v1871 = vadd.f32 0.0, %v1870
        %v1872 = vpop.f32.mrf.mxu0
        %v1873 = vadd.f32 0.0, %v1872
        %v1874 = vpop.f32.mrf.mxu0
        %v1875 = vadd.f32 0.0, %v1874
        %1876 = vdwg.mxu0
        %1877 = vmatprep.subr.bf16.mxu0 %v1583
        %1878 = vmatpush1.bf16.msra.mxu0 %v1582
        %1879 = vmatprep.subr.bf16.mxu0 %v1581
        %1880 = vmatpush1.bf16.msra.mxu0 %v1580
        %1881 = vmatprep.subr.bf16.mxu0 %v1579
        %1882 = vmatpush1.bf16.msra.mxu0 %v1578
        %1883 = vmatprep.subr.bf16.mxu0 %v1577
        %1884 = vmatpush1.bf16.msra.mxu0 %v1576
        %1885 = vmatprep.subr.bf16.mxu0 %v1575
        %1886 = vmatpush1.bf16.msra.mxu0 %v1574
        %1887 = vmatprep.subr.bf16.mxu0 %v1573
        %1888 = vmatpush1.bf16.msra.mxu0 %v1572
        %1889 = vmatprep.subr.bf16.mxu0 %v1571
        %1890 = vmatpush1.bf16.msra.mxu0 %v1570
        %1891 = vmatprep.subr.bf16.mxu0 %v1569
        %1892 = vmatpush1.bf16.msra.mxu0 %v1568
        %1893 = vmatprep.subr.bf16.mxu0 %v1599
        %1894 = vmatpush2.bf16.msra.mxu0 %v1598
        %1895 = vmatprep.subr.bf16.mxu0 %v1597
        %1896 = vmatpush2.bf16.msra.mxu0 %v1596
        %1897 = vmatprep.subr.bf16.mxu0 %v1595
        %1898 = vmatpush2.bf16.msra.mxu0 %v1594
        %1899 = vmatprep.subr.bf16.mxu0 %v1593
        %1900 = vmatpush2.bf16.msra.mxu0 %v1592
        %1901 = vmatprep.subr.bf16.mxu0 %v1591
        %1902 = vmatpush2.bf16.msra.mxu0 %v1590
        %1903 = vmatprep.subr.bf16.mxu0 %v1589
        %1904 = vmatpush2.bf16.msra.mxu0 %v1588
        %1905 = vmatprep.subr.bf16.mxu0 %v1587
        %1906 = vmatpush2.bf16.msra.mxu0 %v1586
        %1907 = vmatprep.subr.bf16.mxu0 %v1585
        %1908 = vmatpush2.bf16.msra.mxu0 %v1584
        %1909 = vmatprep.mubr.bf16.mxu0 %v1071
        %1910 = vmatmul.mubr.bf16.gmra.mxu0 %v1070
        %v1911 = vpop.f32.mrf.mxu0
        %v1912 = vadd.f32 %v1859, %v1911
        %v1913 = vpop.f32.mrf.mxu0
        %v1914 = vadd.f32 %v1861, %v1913
        %v1915 = vpop.f32.mrf.mxu0
        %v1916 = vadd.f32 %v1863, %v1915
        %v1917 = vpop.f32.mrf.mxu0
        %v1918 = vadd.f32 %v1865, %v1917
        %1919 = vmatprep.mubr.bf16.mxu0 %v1080
        %1920 = vmatmul.mubr.bf16.gmra.mxu0 %v1079
        %v1921 = vpop.f32.mrf.mxu0
        %v1922 = vadd.f32 %v1869, %v1921
        %v1923 = vpop.f32.mrf.mxu0
        %v1924 = vadd.f32 %v1871, %v1923
        %v1925 = vpop.f32.mrf.mxu0
        %v1926 = vadd.f32 %v1873, %v1925
        %v1927 = vpop.f32.mrf.mxu0
        %v1928 = vadd.f32 %v1875, %v1927
        %1929 = vdwg.mxu0
        %1930 = vmatprep.subr.bf16.mxu0 %v1615
        %1931 = vmatpush1.bf16.msra.mxu0 %v1614
        %1932 = vmatprep.subr.bf16.mxu0 %v1613
        %1933 = vmatpush1.bf16.msra.mxu0 %v1612
        %1934 = vmatprep.subr.bf16.mxu0 %v1611
        %1935 = vmatpush1.bf16.msra.mxu0 %v1610
        %1936 = vmatprep.subr.bf16.mxu0 %v1609
        %1937 = vmatpush1.bf16.msra.mxu0 %v1608
        %1938 = vmatprep.subr.bf16.mxu0 %v1607
        %1939 = vmatpush1.bf16.msra.mxu0 %v1606
        %1940 = vmatprep.subr.bf16.mxu0 %v1605
        %1941 = vmatpush1.bf16.msra.mxu0 %v1604
        %1942 = vmatprep.subr.bf16.mxu0 %v1603
        %1943 = vmatpush1.bf16.msra.mxu0 %v1602
        %1944 = vmatprep.subr.bf16.mxu0 %v1601
        %1945 = vmatpush1.bf16.msra.mxu0 %v1600
        %1946 = vmatprep.subr.bf16.mxu0 %v1631
        %1947 = vmatpush2.bf16.msra.mxu0 %v1630
        %1948 = vmatprep.subr.bf16.mxu0 %v1629
        %1949 = vmatpush2.bf16.msra.mxu0 %v1628
        %1950 = vmatprep.subr.bf16.mxu0 %v1627
        %1951 = vmatpush2.bf16.msra.mxu0 %v1626
        %1952 = vmatprep.subr.bf16.mxu0 %v1625
        %1953 = vmatpush2.bf16.msra.mxu0 %v1624
        %1954 = vmatprep.subr.bf16.mxu0 %v1623
        %1955 = vmatpush2.bf16.msra.mxu0 %v1622
        %1956 = vmatprep.subr.bf16.mxu0 %v1621
        %1957 = vmatpush2.bf16.msra.mxu0 %v1620
        %1958 = vmatprep.subr.bf16.mxu0 %v1619
        %1959 = vmatpush2.bf16.msra.mxu0 %v1618
        %1960 = vmatprep.subr.bf16.mxu0 %v1617
        %1961 = vmatpush2.bf16.msra.mxu0 %v1616
        %1962 = vmatprep.mubr.bf16.mxu0 %v1073
        %1963 = vmatmul.mubr.bf16.gmra.mxu0 %v1072
        %v1964 = vpop.f32.mrf.mxu0
        %v1965 = vadd.f32 %v1912, %v1964
        %v1966 = vpop.f32.mrf.mxu0
        %v1967 = vadd.f32 %v1914, %v1966
        %v1968 = vpop.f32.mrf.mxu0
        %v1969 = vadd.f32 %v1916, %v1968
        %v1970 = vpop.f32.mrf.mxu0
        %v1971 = vadd.f32 %v1918, %v1970
        %1972 = vmatprep.mubr.bf16.mxu0 %v1082
        %1973 = vmatmul.mubr.bf16.gmra.mxu0 %v1081
        %v1974 = vpop.f32.mrf.mxu0
        %v1975 = vadd.f32 %v1922, %v1974
        %v1976 = vpop.f32.mrf.mxu0
        %v1977 = vadd.f32 %v1924, %v1976
        %v1978 = vpop.f32.mrf.mxu0
        %v1979 = vadd.f32 %v1926, %v1978
        %v1980 = vpop.f32.mrf.mxu0
        %v1981 = vadd.f32 %v1928, %v1980
        %1982 = vdwg.mxu0
        %1983 = vmatprep.subr.bf16.mxu0 %v1647
        %1984 = vmatpush1.bf16.msra.mxu0 %v1646
        %1985 = vmatprep.subr.bf16.mxu0 %v1645
        %1986 = vmatpush1.bf16.msra.mxu0 %v1644
        %1987 = vmatprep.subr.bf16.mxu0 %v1643
        %1988 = vmatpush1.bf16.msra.mxu0 %v1642
        %1989 = vmatprep.subr.bf16.mxu0 %v1641
        %1990 = vmatpush1.bf16.msra.mxu0 %v1640
        %1991 = vmatprep.subr.bf16.mxu0 %v1639
        %1992 = vmatpush1.bf16.msra.mxu0 %v1638
        %1993 = vmatprep.subr.bf16.mxu0 %v1637
        %1994 = vmatpush1.bf16.msra.mxu0 %v1636
        %1995 = vmatprep.subr.bf16.mxu0 %v1635
        %1996 = vmatpush1.bf16.msra.mxu0 %v1634
        %1997 = vmatprep.subr.bf16.mxu0 %v1633
        %1998 = vmatpush1.bf16.msra.mxu0 %v1632
        %1999 = vmatprep.subr.bf16.mxu0 %v1663
        %2000 = vmatpush2.bf16.msra.mxu0 %v1662
        %2001 = vmatprep.subr.bf16.mxu0 %v1661
        %2002 = vmatpush2.bf16.msra.mxu0 %v1660
        %2003 = vmatprep.subr.bf16.mxu0 %v1659
        %2004 = vmatpush2.bf16.msra.mxu0 %v1658
        %2005 = vmatprep.subr.bf16.mxu0 %v1657
        %2006 = vmatpush2.bf16.msra.mxu0 %v1656
        %2007 = vmatprep.subr.bf16.mxu0 %v1655
        %2008 = vmatpush2.bf16.msra.mxu0 %v1654
        %2009 = vmatprep.subr.bf16.mxu0 %v1653
        %2010 = vmatpush2.bf16.msra.mxu0 %v1652
        %2011 = vmatprep.subr.bf16.mxu0 %v1651
        %2012 = vmatpush2.bf16.msra.mxu0 %v1650
        %2013 = vmatprep.subr.bf16.mxu0 %v1649
        %2014 = vmatpush2.bf16.msra.mxu0 %v1648
        %2015 = vmatprep.mubr.bf16.mxu0 %v1075
        %2016 = vmatmul.mubr.bf16.gmra.mxu0 %v1074
        %v2017 = vpop.f32.mrf.mxu0
        %v2018 = vadd.f32 %v1965, %v2017
        %v2019 = vpop.f32.mrf.mxu0
        %v2020 = vadd.f32 %v1967, %v2019
        %v2021 = vpop.f32.mrf.mxu0
        %v2022 = vadd.f32 %v1969, %v2021
        %v2023 = vpop.f32.mrf.mxu0
        %v2024 = vadd.f32 %v1971, %v2023
        %2025 = vmatprep.mubr.bf16.mxu0 %v1084
        %2026 = vmatmul.mubr.bf16.gmra.mxu0 %v1083
        %v2027 = vpop.f32.mrf.mxu0
        %v2028 = vadd.f32 %v1975, %v2027
        %v2029 = vpop.f32.mrf.mxu0
        %v2030 = vadd.f32 %v1977, %v2029
        %v2031 = vpop.f32.mrf.mxu0
        %v2032 = vadd.f32 %v1979, %v2031
        %v2033 = vpop.f32.mrf.mxu0
        %v2034 = vadd.f32 %v1981, %v2033
        %2035 = vdwg.mxu0
        %2036 = vmatprep.subr.bf16.mxu0 %v1679
        %2037 = vmatpush1.bf16.msra.mxu0 %v1678
        %2038 = vmatprep.subr.bf16.mxu0 %v1677
        %2039 = vmatpush1.bf16.msra.mxu0 %v1676
        %2040 = vmatprep.subr.bf16.mxu0 %v1675
        %2041 = vmatpush1.bf16.msra.mxu0 %v1674
        %2042 = vmatprep.subr.bf16.mxu0 %v1673
        %2043 = vmatpush1.bf16.msra.mxu0 %v1672
        %2044 = vmatprep.subr.bf16.mxu0 %v1671
        %2045 = vmatpush1.bf16.msra.mxu0 %v1670
        %2046 = vmatprep.subr.bf16.mxu0 %v1669
        %2047 = vmatpush1.bf16.msra.mxu0 %v1668
        %2048 = vmatprep.subr.bf16.mxu0 %v1667
        %2049 = vmatpush1.bf16.msra.mxu0 %v1666
        %2050 = vmatprep.subr.bf16.mxu0 %v1665
        %2051 = vmatpush1.bf16.msra.mxu0 %v1664
        %2052 = vmatprep.subr.bf16.mxu0 0
        %2053 = vmatpush2.bf16.msra.mxu0 0
        %2054 = vmatprep.subr.bf16.mxu0 0
        %2055 = vmatpush2.bf16.msra.mxu0 0
        %2056 = vmatprep.subr.bf16.mxu0 0
        %2057 = vmatpush2.bf16.msra.mxu0 0
        %2058 = vmatprep.subr.bf16.mxu0 0
        %2059 = vmatpush2.bf16.msra.mxu0 0
        %2060 = vmatprep.subr.bf16.mxu0 0
        %2061 = vmatpush2.bf16.msra.mxu0 0
        %2062 = vmatprep.subr.bf16.mxu0 0
        %2063 = vmatpush2.bf16.msra.mxu0 0
        %2064 = vmatprep.subr.bf16.mxu0 0
        %2065 = vmatpush2.bf16.msra.mxu0 0
        %2066 = vmatprep.subr.bf16.mxu0 0
        %2067 = vmatpush2.bf16.msra.mxu0 0
        %2068 = vmatprep.mubr.bf16.mxu0 0
        %2069 = vmatmul.mubr.bf16.gmra.mxu0 %v1076
        %v2070 = vpop.f32.mrf.mxu0
        %v2071 = vadd.f32 %v2018, %v2070
        %v2072 = vpop.f32.mrf.mxu0
        %v2073 = vadd.f32 %v2020, %v2072
        %v2074 = vpop.f32.mrf.mxu0
        %v2075 = vadd.f32 %v2022, %v2074
        %v2076 = vpop.f32.mrf.mxu0
        %v2077 = vadd.f32 %v2024, %v2076
        %2078 = vmatprep.mubr.bf16.mxu0 0
        %2079 = vmatmul.mubr.bf16.gmra.mxu0 %v1085
        %v2080 = vpop.f32.mrf.mxu0
        %v2081 = vadd.f32 %v2028, %v2080
        %v2082 = vpop.f32.mrf.mxu0
        %v2083 = vadd.f32 %v2030, %v2082
        %v2084 = vpop.f32.mrf.mxu0
        %v2085 = vadd.f32 %v2032, %v2084
        %v2086 = vpop.f32.mrf.mxu0
        %v2087 = vadd.f32 %v2034, %v2086
        %2088 = vdwg.mxu0
        %v2089 = vmax.f32 %v2071, %v2075
        %v2090 = vmax.f32 %v2073, %v2077
        %v2091 = vmax.f32 %v2081, %v2085
        %v2092 = vmax.f32 %v2083, %v2087
        %v2093 = vmax.f32 %v2089, %v2091
        %v2094 = vmax.f32 %v2090, %v2092
        %v2095 = vld [vmem:[%s835] sm:$0x3]
        %v2097 = vlaneseq
        %v2098 = vshrl.u32 %v2097, 7
        %v2099 = vsub.s32 0, %v2098
        %v2100 = vrot.slane %v2095, %v2099
        %v2101 = vlaneseq
        %v2102 = vshrl.u32 %v2101, 7
        %v2103 = vsub.s32 1, %v2102
        %v2104 = vrot.slane %v2095, %v2103
        %v2107 = vadd.f32 %v2093, %v2100
        %v2108 = vadd.f32 %v2094, %v2104
        %v2109 = vmax.f32 %v2107, 0.0
        %v2110 = vmax.f32 %v2108, 0.0
        %v2111 = vpack.c.bf16 %v2109, %v2109
        %v2112 = vpack.c.bf16 %v2110, %v2110
        %v2115 = vunpack.c.l.b16 %v2111
        %v2116 = vunpack.c.l.b16 %v2112
        %v2117 = vpack.c.b16 %v2116, %v2115
        %2119 = vst [vmem:[%s845] sm:$0xff] %v2117
        %s2120 = smul.u32 2, %s19
        %p2121 = scmp.lt.s32.totalorder %s18, 0
        %s2122 = scalar_select %p2121, %s18, 0
        %p2123 = scmp.lt.s32.totalorder %s2120, 3
        %s2124 = scalar_select %p2123, %s2120, 3
        %s2125 = smul.addr %s2122, 4
        %s2126 = sadd.s32 %s2124, %s2125
        %s2127 = smul.addr %s2126, 4
        %s2128 = scalar_lea.vmem %s3, %s2127
        // Predicated region
        $region71: #{vgg_forward.6} parent=65 // pred_check
          %p2129 = pneg %p124
        $region72: #{vgg_forward.6} parent=65 // pred_check_branch
          %2131 = sbr.rel (%p2129) target = $region74
        $region73: #{vgg_forward.6} parent=65 // pred_region
          %s2132 = smul.u32 2, %s19
        $region74: #{vgg_forward.6} parent=65 // pred_fallthru
          _
      $region66: #{vgg_forward.6} parent=5 // pred_fallthru
        _
      %p2133 = scmp.le.s32.totalorder 2, %s9
      // Predicated region
      $region75: #{vgg_forward.6} parent=5 // pred_check
        %p2134 = pneg %p2133
      $region76: #{vgg_forward.6} parent=5 // pred_check_branch
        %2136 = sbr.rel (%p2134) target = $region78
      $region77: #{vgg_forward.6} parent=5 // pred_region
        %s2137 = ssub.s32 %s9, 2
        // Predicated region
        $region79: #{vgg_forward.6} parent=77 // pred_check
          %p2138 = pneg %p130
        $region80: #{vgg_forward.6} parent=77 // pred_check_branch
          %2140 = sbr.rel (%p2138) target = $region82
        $region81: #{vgg_forward.6} parent=77 // pred_region
          %s2141 = smul.u32 2, %s21
          %p2142 = scmp.lt.s32.totalorder %s20, 0
          %s2143 = scalar_select %p2142, %s20, 0
          %p2144 = scmp.lt.s32.totalorder %s2141, 3
          %s2145 = scalar_select %p2144, %s2141, 3
          %s2146 = smul.addr %s2143, 4
          %s2147 = sadd.s32 %s2145, %s2146
          %s2148 = smul.addr %s2147, 4
          %s2149 = scalar_lea.vmem %s3, %s2148
        $region82: #{vgg_forward.6} parent=77 // pred_fallthru
          _
      $region78: #{vgg_forward.6} parent=5 // pred_fallthru
        _
    $region6: #{vgg_forward.6} parent=1 // loop_footer
      %s13 = sadd.s32 1, %s9
    $region7: #{vgg_forward.6} parent=1 // loop_footer_branch
      %8 = sbr.rel target = $region3
    $region8: #{vgg_forward.6} parent=1 // loop_exit
      _

// kernel: vgg_forward.7
$region0: #{vgg_forward.7}
  #allocation0 [shape = 'u32[]', space=smem, size = 0x4, offset = 0x4, fixed_abs, tag = 'smem constant byte address 0x4 - core index']
  #allocation1 [shape = 'u32[144,128]{1,0:T(1,128)}', space=vmem, size = 0x12000, scoped, tag = 'internal scratch']
  %s0 = inlined_call_operand.vmem [shape: bf16[8,512], index: 0, kind: input, shape index: {}]
  %s1 = inlined_call_operand.vmem [shape: bf16[512,512], index: 1, kind: input, shape index: {}]
  %s2 = inlined_call_operand.vmem [shape: f32[1,512], index: 2, kind: input, shape index: {}]
  %s3 = inlined_call_operand.vmem [shape: bf16[512,512], index: 3, kind: input, shape index: {}]
  %s4 = inlined_call_operand.vmem [shape: f32[1,512], index: 4, kind: input, shape index: {}]
  %s5 = inlined_call_operand.vmem [shape: bf16[512,128], index: 5, kind: input, shape index: {}]
  %s6 = inlined_call_operand.vmem [shape: f32[1,128], index: 6, kind: input, shape index: {}]
  %s7 = inlined_call_operand.vmem [shape: f32[8,128], index: 7, kind: output, shape index: {}]
  %s8 = sld [smem:[#allocation0]]
  $region38: #{vgg_forward.7} parent=0
    _
  %s10 = ssub.s32 1, %s8
  %s11 = scalar_select 0, %s10, %s8
  // Predicated region
  $region2: #{vgg_forward.7} parent=0 // pred_check
    _
  $region3: #{vgg_forward.7} parent=0 // pred_check_branch
    %13 = sbr.rel (0) target = $region5
  $region4: #{vgg_forward.7} parent=0 // pred_region
    _
  $region5: #{vgg_forward.7} parent=0 // pred_fallthru
    _
  // Predicated region
  $region6: #{vgg_forward.7} parent=0 // pred_check
    _
  $region7: #{vgg_forward.7} parent=0 // pred_check_branch
    %15 = sbr.rel (0) target = $region9
  $region8: #{vgg_forward.7} parent=0 // pred_region
    _
  $region9: #{vgg_forward.7} parent=0 // pred_fallthru
    _
  // Predicated region
  $region10: #{vgg_forward.7} parent=0 // pred_check
    _
  $region11: #{vgg_forward.7} parent=0 // pred_check_branch
    %17 = sbr.rel (0) target = $region13
  $region12: #{vgg_forward.7} parent=0 // pred_region
    _
  $region13: #{vgg_forward.7} parent=0 // pred_fallthru
    _
  // Predicated region
  $region14: #{vgg_forward.7} parent=0 // pred_check
    _
  $region15: #{vgg_forward.7} parent=0 // pred_check_branch
    %19 = sbr.rel (0) target = $region17
  $region16: #{vgg_forward.7} parent=0 // pred_region
    _
  $region17: #{vgg_forward.7} parent=0 // pred_fallthru
    _
  // Predicated region
  $region18: #{vgg_forward.7} parent=0 // pred_check
    _
  $region19: #{vgg_forward.7} parent=0 // pred_check_branch
    %21 = sbr.rel (0) target = $region21
  $region20: #{vgg_forward.7} parent=0 // pred_region
    _
  $region21: #{vgg_forward.7} parent=0 // pred_fallthru
    _
  // Predicated region
  $region22: #{vgg_forward.7} parent=0 // pred_check
    _
  $region23: #{vgg_forward.7} parent=0 // pred_check_branch
    %23 = sbr.rel (0) target = $region25
  $region24: #{vgg_forward.7} parent=0 // pred_region
    _
  $region25: #{vgg_forward.7} parent=0 // pred_fallthru
    _
  // Predicated region
  $region26: #{vgg_forward.7} parent=0 // pred_check
    _
  $region27: #{vgg_forward.7} parent=0 // pred_check_branch
    %25 = sbr.rel (0) target = $region29
  $region28: #{vgg_forward.7} parent=0 // pred_region
    _
  $region29: #{vgg_forward.7} parent=0 // pred_fallthru
    _
  %v27 = vld [vmem:[%s0] sm:$0xff]
  %v28 = vld [vmem:[%s0 + $0x8] sm:$0xff]
  %v29 = vld [vmem:[%s1] sm:$0xff]
  %v30 = vld [vmem:[%s1 + $0x8] sm:$0xff]
  %v31 = vld [vmem:[%s1 + $0x10] sm:$0xff]
  %v32 = vld [vmem:[%s1 + $0x18] sm:$0xff]
  %v33 = vld [vmem:[%s1 + $0x20] sm:$0xff]
  %v34 = vld [vmem:[%s1 + $0x28] sm:$0xff]
  %v35 = vld [vmem:[%s1 + $0x30] sm:$0xff]
  %v36 = vld [vmem:[%s1 + $0x38] sm:$0xff]
  %v37 = vld [vmem:[%s1 + $0x40] sm:$0xff]
  %v38 = vld [vmem:[%s1 + $0x48] sm:$0xff]
  %v39 = vld [vmem:[%s1 + $0x50] sm:$0xff]
  %v40 = vld [vmem:[%s1 + $0x58] sm:$0xff]
  %v41 = vld [vmem:[%s1 + $0x60] sm:$0xff]
  %v42 = vld [vmem:[%s1 + $0x68] sm:$0xff]
  %v43 = vld [vmem:[%s1 + $0x70] sm:$0xff]
  %v44 = vld [vmem:[%s1 + $0x78] sm:$0xff]
  %v45 = vld [vmem:[%s1 + $0x80] sm:$0xff]
  %v46 = vld [vmem:[%s1 + $0x88] sm:$0xff]
  %v47 = vld [vmem:[%s1 + $0x90] sm:$0xff]
  %v48 = vld [vmem:[%s1 + $0x98] sm:$0xff]
  %v49 = vld [vmem:[%s1 + $0xa0] sm:$0xff]
  %v50 = vld [vmem:[%s1 + $0xa8] sm:$0xff]
  %v51 = vld [vmem:[%s1 + $0xb0] sm:$0xff]
  %v52 = vld [vmem:[%s1 + $0xb8] sm:$0xff]
  %v53 = vld [vmem:[%s1 + $0xc0] sm:$0xff]
  %v54 = vld [vmem:[%s1 + $0xc8] sm:$0xff]
  %v55 = vld [vmem:[%s1 + $0xd0] sm:$0xff]
  %v56 = vld [vmem:[%s1 + $0xd8] sm:$0xff]
  %v57 = vld [vmem:[%s1 + $0xe0] sm:$0xff]
  %v58 = vld [vmem:[%s1 + $0xe8] sm:$0xff]
  %v59 = vld [vmem:[%s1 + $0xf0] sm:$0xff]
  %v60 = vld [vmem:[%s1 + $0xf8] sm:$0xff]
  %v61 = vld [vmem:[%s1 + $0x100] sm:$0xff]
  %v62 = vld [vmem:[%s1 + $0x108] sm:$0xff]
  %v63 = vld [vmem:[%s1 + $0x110] sm:$0xff]
  %v64 = vld [vmem:[%s1 + $0x118] sm:$0xff]
  %v65 = vld [vmem:[%s1 + $0x120] sm:$0xff]
  %v66 = vld [vmem:[%s1 + $0x128] sm:$0xff]
  %v67 = vld [vmem:[%s1 + $0x130] sm:$0xff]
  %v68 = vld [vmem:[%s1 + $0x138] sm:$0xff]
  %v69 = vld [vmem:[%s1 + $0x140] sm:$0xff]
  %v70 = vld [vmem:[%s1 + $0x148] sm:$0xff]
  %v71 = vld [vmem:[%s1 + $0x150] sm:$0xff]
  %v72 = vld [vmem:[%s1 + $0x158] sm:$0xff]
  %v73 = vld [vmem:[%s1 + $0x160] sm:$0xff]
  %v74 = vld [vmem:[%s1 + $0x168] sm:$0xff]
  %v75 = vld [vmem:[%s1 + $0x170] sm:$0xff]
  %v76 = vld [vmem:[%s1 + $0x178] sm:$0xff]
  %v77 = vld [vmem:[%s1 + $0x180] sm:$0xff]
  %v78 = vld [vmem:[%s1 + $0x188] sm:$0xff]
  %v79 = vld [vmem:[%s1 + $0x190] sm:$0xff]
  %v80 = vld [vmem:[%s1 + $0x198] sm:$0xff]
  %v81 = vld [vmem:[%s1 + $0x1a0] sm:$0xff]
  %v82 = vld [vmem:[%s1 + $0x1a8] sm:$0xff]
  %v83 = vld [vmem:[%s1 + $0x1b0] sm:$0xff]
  %v84 = vld [vmem:[%s1 + $0x1b8] sm:$0xff]
  %v85 = vld [vmem:[%s1 + $0x1c0] sm:$0xff]
  %v86 = vld [vmem:[%s1 + $0x1c8] sm:$0xff]
  %v87 = vld [vmem:[%s1 + $0x1d0] sm:$0xff]
  %v88 = vld [vmem:[%s1 + $0x1d8] sm:$0xff]
  %v89 = vld [vmem:[%s1 + $0x1e0] sm:$0xff]
  %v90 = vld [vmem:[%s1 + $0x1e8] sm:$0xff]
  %v91 = vld [vmem:[%s1 + $0x1f0] sm:$0xff]
  %v92 = vld [vmem:[%s1 + $0x1f8] sm:$0xff]
  %v93 = vld [vmem:[%s1 + $0x200] sm:$0xff]
  %v94 = vld [vmem:[%s1 + $0x208] sm:$0xff]
  %v95 = vld [vmem:[%s1 + $0x210] sm:$0xff]
  %v96 = vld [vmem:[%s1 + $0x218] sm:$0xff]
  %v97 = vld [vmem:[%s1 + $0x220] sm:$0xff]
  %v98 = vld [vmem:[%s1 + $0x228] sm:$0xff]
  %v99 = vld [vmem:[%s1 + $0x230] sm:$0xff]
  %v100 = vld [vmem:[%s1 + $0x238] sm:$0xff]
  %v101 = vld [vmem:[%s1 + $0x240] sm:$0xff]
  %v102 = vld [vmem:[%s1 + $0x248] sm:$0xff]
  %v103 = vld [vmem:[%s1 + $0x250] sm:$0xff]
  %v104 = vld [vmem:[%s1 + $0x258] sm:$0xff]
  %v105 = vld [vmem:[%s1 + $0x260] sm:$0xff]
  %v106 = vld [vmem:[%s1 + $0x268] sm:$0xff]
  %v107 = vld [vmem:[%s1 + $0x270] sm:$0xff]
  %v108 = vld [vmem:[%s1 + $0x278] sm:$0xff]
  %v109 = vld [vmem:[%s1 + $0x280] sm:$0xff]
  %v110 = vld [vmem:[%s1 + $0x288] sm:$0xff]
  %v111 = vld [vmem:[%s1 + $0x290] sm:$0xff]
  %v112 = vld [vmem:[%s1 + $0x298] sm:$0xff]
  %v113 = vld [vmem:[%s1 + $0x2a0] sm:$0xff]
  %v114 = vld [vmem:[%s1 + $0x2a8] sm:$0xff]
  %v115 = vld [vmem:[%s1 + $0x2b0] sm:$0xff]
  %v116 = vld [vmem:[%s1 + $0x2b8] sm:$0xff]
  %v117 = vld [vmem:[%s1 + $0x2c0] sm:$0xff]
  %v118 = vld [vmem:[%s1 + $0x2c8] sm:$0xff]
  %v119 = vld [vmem:[%s1 + $0x2d0] sm:$0xff]
  %v120 = vld [vmem:[%s1 + $0x2d8] sm:$0xff]
  %v121 = vld [vmem:[%s1 + $0x2e0] sm:$0xff]
  %v122 = vld [vmem:[%s1 + $0x2e8] sm:$0xff]
  %v123 = vld [vmem:[%s1 + $0x2f0] sm:$0xff]
  %v124 = vld [vmem:[%s1 + $0x2f8] sm:$0xff]
  %v125 = vld [vmem:[%s1 + $0x300] sm:$0xff]
  %v126 = vld [vmem:[%s1 + $0x308] sm:$0xff]
  %v127 = vld [vmem:[%s1 + $0x310] sm:$0xff]
  %v128 = vld [vmem:[%s1 + $0x318] sm:$0xff]
  %v129 = vld [vmem:[%s1 + $0x320] sm:$0xff]
  %v130 = vld [vmem:[%s1 + $0x328] sm:$0xff]
  %v131 = vld [vmem:[%s1 + $0x330] sm:$0xff]
  %v132 = vld [vmem:[%s1 + $0x338] sm:$0xff]
  %v133 = vld [vmem:[%s1 + $0x340] sm:$0xff]
  %v134 = vld [vmem:[%s1 + $0x348] sm:$0xff]
  %v135 = vld [vmem:[%s1 + $0x350] sm:$0xff]
  %v136 = vld [vmem:[%s1 + $0x358] sm:$0xff]
  %v137 = vld [vmem:[%s1 + $0x360] sm:$0xff]
  %v138 = vld [vmem:[%s1 + $0x368] sm:$0xff]
  %v139 = vld [vmem:[%s1 + $0x370] sm:$0xff]
  %v140 = vld [vmem:[%s1 + $0x378] sm:$0xff]
  %v141 = vld [vmem:[%s1 + $0x380] sm:$0xff]
  %v142 = vld [vmem:[%s1 + $0x388] sm:$0xff]
  %v143 = vld [vmem:[%s1 + $0x390] sm:$0xff]
  %v144 = vld [vmem:[%s1 + $0x398] sm:$0xff]
  %v145 = vld [vmem:[%s1 + $0x3a0] sm:$0xff]
  %v146 = vld [vmem:[%s1 + $0x3a8] sm:$0xff]
  %v147 = vld [vmem:[%s1 + $0x3b0] sm:$0xff]
  %v148 = vld [vmem:[%s1 + $0x3b8] sm:$0xff]
  %v149 = vld [vmem:[%s1 + $0x3c0] sm:$0xff]
  %v150 = vld [vmem:[%s1 + $0x3c8] sm:$0xff]
  %v151 = vld [vmem:[%s1 + $0x3d0] sm:$0xff]
  %v152 = vld [vmem:[%s1 + $0x3d8] sm:$0xff]
  %v153 = vld [vmem:[%s1 + $0x3e0] sm:$0xff]
  %v154 = vld [vmem:[%s1 + $0x3e8] sm:$0xff]
  %v155 = vld [vmem:[%s1 + $0x3f0] sm:$0xff]
  %v156 = vld [vmem:[%s1 + $0x3f8] sm:$0xff]
  %v157 = vld [vmem:[%s2] sm:$0xf]
  %v159 = vlaneseq
  %v160 = vshrl.u32 %v159, 7
  %v161 = vsub.s32 0, %v160
  %v162 = vrot.slane %v157, %v161
  %v163 = vlaneseq
  %v164 = vshrl.u32 %v163, 7
  %v165 = vsub.s32 1, %v164
  %v166 = vrot.slane %v157, %v165
  %v167 = vlaneseq
  %v168 = vshrl.u32 %v167, 7
  %v169 = vsub.s32 2, %v168
  %v170 = vrot.slane %v157, %v169
  %v171 = vlaneseq
  %v172 = vshrl.u32 %v171, 7
  %v173 = vsub.s32 3, %v172
  %v174 = vrot.slane %v157, %v173
  %v181 = vunpack.c.l.b16 %v27
  %v182 = vunpack.c.h.b16 %v27
  %v183 = vunpack.c.l.b16 %v28
  %v184 = vunpack.c.h.b16 %v28
  %v185 = vpack.c.b16 %v181, %v181
  %v186 = vpack.c.b16 %v182, %v182
  %v187 = vpack.c.b16 %v183, %v183
  %v188 = vpack.c.b16 %v184, %v184
  %v321 = vunpack.c.l.b16 %v29
  %v322 = vunpack.c.h.b16 %v29
  %v323 = vunpack.c.l.b16 %v30
  %v324 = vunpack.c.h.b16 %v30
  %v325 = vunpack.c.l.b16 %v31
  %v326 = vunpack.c.h.b16 %v31
  %v327 = vunpack.c.l.b16 %v32
  %v328 = vunpack.c.h.b16 %v32
  %v329 = vunpack.c.l.b16 %v33
  %v330 = vunpack.c.h.b16 %v33
  %v331 = vunpack.c.l.b16 %v34
  %v332 = vunpack.c.h.b16 %v34
  %v333 = vunpack.c.l.b16 %v35
  %v334 = vunpack.c.h.b16 %v35
  %v335 = vunpack.c.l.b16 %v36
  %v336 = vunpack.c.h.b16 %v36
  %v337 = vunpack.c.l.b16 %v37
  %v338 = vunpack.c.h.b16 %v37
  %v339 = vunpack.c.l.b16 %v38
  %v340 = vunpack.c.h.b16 %v38
  %v341 = vunpack.c.l.b16 %v39
  %v342 = vunpack.c.h.b16 %v39
  %v343 = vunpack.c.l.b16 %v40
  %v344 = vunpack.c.h.b16 %v40
  %v345 = vunpack.c.l.b16 %v41
  %v346 = vunpack.c.h.b16 %v41
  %v347 = vunpack.c.l.b16 %v42
  %v348 = vunpack.c.h.b16 %v42
  %v349 = vunpack.c.l.b16 %v43
  %v350 = vunpack.c.h.b16 %v43
  %v351 = vunpack.c.l.b16 %v44
  %v352 = vunpack.c.h.b16 %v44
  %v353 = vunpack.c.l.b16 %v45
  %v354 = vunpack.c.h.b16 %v45
  %v355 = vunpack.c.l.b16 %v46
  %v356 = vunpack.c.h.b16 %v46
  %v357 = vunpack.c.l.b16 %v47
  %v358 = vunpack.c.h.b16 %v47
  %v359 = vunpack.c.l.b16 %v48
  %v360 = vunpack.c.h.b16 %v48
  %v361 = vunpack.c.l.b16 %v49
  %v362 = vunpack.c.h.b16 %v49
  %v363 = vunpack.c.l.b16 %v50
  %v364 = vunpack.c.h.b16 %v50
  %v365 = vunpack.c.l.b16 %v51
  %v366 = vunpack.c.h.b16 %v51
  %v367 = vunpack.c.l.b16 %v52
  %v368 = vunpack.c.h.b16 %v52
  %v369 = vunpack.c.l.b16 %v53
  %v370 = vunpack.c.h.b16 %v53
  %v371 = vunpack.c.l.b16 %v54
  %v372 = vunpack.c.h.b16 %v54
  %v373 = vunpack.c.l.b16 %v55
  %v374 = vunpack.c.h.b16 %v55
  %v375 = vunpack.c.l.b16 %v56
  %v376 = vunpack.c.h.b16 %v56
  %v377 = vunpack.c.l.b16 %v57
  %v378 = vunpack.c.h.b16 %v57
  %v379 = vunpack.c.l.b16 %v58
  %v380 = vunpack.c.h.b16 %v58
  %v381 = vunpack.c.l.b16 %v59
  %v382 = vunpack.c.h.b16 %v59
  %v383 = vunpack.c.l.b16 %v60
  %v384 = vunpack.c.h.b16 %v60
  %v385 = vunpack.c.l.b16 %v61
  %v386 = vunpack.c.h.b16 %v61
  %v387 = vunpack.c.l.b16 %v62
  %v388 = vunpack.c.h.b16 %v62
  %v389 = vunpack.c.l.b16 %v63
  %v390 = vunpack.c.h.b16 %v63
  %v391 = vunpack.c.l.b16 %v64
  %v392 = vunpack.c.h.b16 %v64
  %v393 = vunpack.c.l.b16 %v65
  %v394 = vunpack.c.h.b16 %v65
  %v395 = vunpack.c.l.b16 %v66
  %v396 = vunpack.c.h.b16 %v66
  %v397 = vunpack.c.l.b16 %v67
  %v398 = vunpack.c.h.b16 %v67
  %v399 = vunpack.c.l.b16 %v68
  %v400 = vunpack.c.h.b16 %v68
  %v401 = vunpack.c.l.b16 %v69
  %v402 = vunpack.c.h.b16 %v69
  %v403 = vunpack.c.l.b16 %v70
  %v404 = vunpack.c.h.b16 %v70
  %v405 = vunpack.c.l.b16 %v71
  %v406 = vunpack.c.h.b16 %v71
  %v407 = vunpack.c.l.b16 %v72
  %v408 = vunpack.c.h.b16 %v72
  %v409 = vunpack.c.l.b16 %v73
  %v410 = vunpack.c.h.b16 %v73
  %v411 = vunpack.c.l.b16 %v74
  %v412 = vunpack.c.h.b16 %v74
  %v413 = vunpack.c.l.b16 %v75
  %v414 = vunpack.c.h.b16 %v75
  %v415 = vunpack.c.l.b16 %v76
  %v416 = vunpack.c.h.b16 %v76
  %v417 = vunpack.c.l.b16 %v77
  %v418 = vunpack.c.h.b16 %v77
  %v419 = vunpack.c.l.b16 %v78
  %v420 = vunpack.c.h.b16 %v78
  %v421 = vunpack.c.l.b16 %v79
  %v422 = vunpack.c.h.b16 %v79
  %v423 = vunpack.c.l.b16 %v80
  %v424 = vunpack.c.h.b16 %v80
  %v425 = vunpack.c.l.b16 %v81
  %v426 = vunpack.c.h.b16 %v81
  %v427 = vunpack.c.l.b16 %v82
  %v428 = vunpack.c.h.b16 %v82
  %v429 = vunpack.c.l.b16 %v83
  %v430 = vunpack.c.h.b16 %v83
  %v431 = vunpack.c.l.b16 %v84
  %v432 = vunpack.c.h.b16 %v84
  %v433 = vunpack.c.l.b16 %v85
  %v434 = vunpack.c.h.b16 %v85
  %v435 = vunpack.c.l.b16 %v86
  %v436 = vunpack.c.h.b16 %v86
  %v437 = vunpack.c.l.b16 %v87
  %v438 = vunpack.c.h.b16 %v87
  %v439 = vunpack.c.l.b16 %v88
  %v440 = vunpack.c.h.b16 %v88
  %v441 = vunpack.c.l.b16 %v89
  %v442 = vunpack.c.h.b16 %v89
  %v443 = vunpack.c.l.b16 %v90
  %v444 = vunpack.c.h.b16 %v90
  %v445 = vunpack.c.l.b16 %v91
  %v446 = vunpack.c.h.b16 %v91
  %v447 = vunpack.c.l.b16 %v92
  %v448 = vunpack.c.h.b16 %v92
  %v449 = vunpack.c.l.b16 %v93
  %v450 = vunpack.c.h.b16 %v93
  %v451 = vunpack.c.l.b16 %v94
  %v452 = vunpack.c.h.b16 %v94
  %v453 = vunpack.c.l.b16 %v95
  %v454 = vunpack.c.h.b16 %v95
  %v455 = vunpack.c.l.b16 %v96
  %v456 = vunpack.c.h.b16 %v96
  %v457 = vunpack.c.l.b16 %v97
  %v458 = vunpack.c.h.b16 %v97
  %v459 = vunpack.c.l.b16 %v98
  %v460 = vunpack.c.h.b16 %v98
  %v461 = vunpack.c.l.b16 %v99
  %v462 = vunpack.c.h.b16 %v99
  %v463 = vunpack.c.l.b16 %v100
  %v464 = vunpack.c.h.b16 %v100
  %v465 = vunpack.c.l.b16 %v101
  %v466 = vunpack.c.h.b16 %v101
  %v467 = vunpack.c.l.b16 %v102
  %v468 = vunpack.c.h.b16 %v102
  %v469 = vunpack.c.l.b16 %v103
  %v470 = vunpack.c.h.b16 %v103
  %v471 = vunpack.c.l.b16 %v104
  %v472 = vunpack.c.h.b16 %v104
  %v473 = vunpack.c.l.b16 %v105
  %v474 = vunpack.c.h.b16 %v105
  %v475 = vunpack.c.l.b16 %v106
  %v476 = vunpack.c.h.b16 %v106
  %v477 = vunpack.c.l.b16 %v107
  %v478 = vunpack.c.h.b16 %v107
  %v479 = vunpack.c.l.b16 %v108
  %v480 = vunpack.c.h.b16 %v108
  %v481 = vunpack.c.l.b16 %v109
  %v482 = vunpack.c.h.b16 %v109
  %v483 = vunpack.c.l.b16 %v110
  %v484 = vunpack.c.h.b16 %v110
  %v485 = vunpack.c.l.b16 %v111
  %v486 = vunpack.c.h.b16 %v111
  %v487 = vunpack.c.l.b16 %v112
  %v488 = vunpack.c.h.b16 %v112
  %v489 = vunpack.c.l.b16 %v113
  %v490 = vunpack.c.h.b16 %v113
  %v491 = vunpack.c.l.b16 %v114
  %v492 = vunpack.c.h.b16 %v114
  %v493 = vunpack.c.l.b16 %v115
  %v494 = vunpack.c.h.b16 %v115
  %v495 = vunpack.c.l.b16 %v116
  %v496 = vunpack.c.h.b16 %v116
  %v497 = vunpack.c.l.b16 %v117
  %v498 = vunpack.c.h.b16 %v117
  %v499 = vunpack.c.l.b16 %v118
  %v500 = vunpack.c.h.b16 %v118
  %v501 = vunpack.c.l.b16 %v119
  %v502 = vunpack.c.h.b16 %v119
  %v503 = vunpack.c.l.b16 %v120
  %v504 = vunpack.c.h.b16 %v120
  %v505 = vunpack.c.l.b16 %v121
  %v506 = vunpack.c.h.b16 %v121
  %v507 = vunpack.c.l.b16 %v122
  %v508 = vunpack.c.h.b16 %v122
  %v509 = vunpack.c.l.b16 %v123
  %v510 = vunpack.c.h.b16 %v123
  %v511 = vunpack.c.l.b16 %v124
  %v512 = vunpack.c.h.b16 %v124
  %v513 = vunpack.c.l.b16 %v125
  %v514 = vunpack.c.h.b16 %v125
  %v515 = vunpack.c.l.b16 %v126
  %v516 = vunpack.c.h.b16 %v126
  %v517 = vunpack.c.l.b16 %v127
  %v518 = vunpack.c.h.b16 %v127
  %v519 = vunpack.c.l.b16 %v128
  %v520 = vunpack.c.h.b16 %v128
  %v521 = vunpack.c.l.b16 %v129
  %v522 = vunpack.c.h.b16 %v129
  %v523 = vunpack.c.l.b16 %v130
  %v524 = vunpack.c.h.b16 %v130
  %v525 = vunpack.c.l.b16 %v131
  %v526 = vunpack.c.h.b16 %v131
  %v527 = vunpack.c.l.b16 %v132
  %v528 = vunpack.c.h.b16 %v132
  %v529 = vunpack.c.l.b16 %v133
  %v530 = vunpack.c.h.b16 %v133
  %v531 = vunpack.c.l.b16 %v134
  %v532 = vunpack.c.h.b16 %v134
  %v533 = vunpack.c.l.b16 %v135
  %v534 = vunpack.c.h.b16 %v135
  %v535 = vunpack.c.l.b16 %v136
  %v536 = vunpack.c.h.b16 %v136
  %v537 = vunpack.c.l.b16 %v137
  %v538 = vunpack.c.h.b16 %v137
  %v539 = vunpack.c.l.b16 %v138
  %v540 = vunpack.c.h.b16 %v138
  %v541 = vunpack.c.l.b16 %v139
  %v542 = vunpack.c.h.b16 %v139
  %v543 = vunpack.c.l.b16 %v140
  %v544 = vunpack.c.h.b16 %v140
  %v545 = vunpack.c.l.b16 %v141
  %v546 = vunpack.c.h.b16 %v141
  %v547 = vunpack.c.l.b16 %v142
  %v548 = vunpack.c.h.b16 %v142
  %v549 = vunpack.c.l.b16 %v143
  %v550 = vunpack.c.h.b16 %v143
  %v551 = vunpack.c.l.b16 %v144
  %v552 = vunpack.c.h.b16 %v144
  %v553 = vunpack.c.l.b16 %v145
  %v554 = vunpack.c.h.b16 %v145
  %v555 = vunpack.c.l.b16 %v146
  %v556 = vunpack.c.h.b16 %v146
  %v557 = vunpack.c.l.b16 %v147
  %v558 = vunpack.c.h.b16 %v147
  %v559 = vunpack.c.l.b16 %v148
  %v560 = vunpack.c.h.b16 %v148
  %v561 = vunpack.c.l.b16 %v149
  %v562 = vunpack.c.h.b16 %v149
  %v563 = vunpack.c.l.b16 %v150
  %v564 = vunpack.c.h.b16 %v150
  %v565 = vunpack.c.l.b16 %v151
  %v566 = vunpack.c.h.b16 %v151
  %v567 = vunpack.c.l.b16 %v152
  %v568 = vunpack.c.h.b16 %v152
  %v569 = vunpack.c.l.b16 %v153
  %v570 = vunpack.c.h.b16 %v153
  %v571 = vunpack.c.l.b16 %v154
  %v572 = vunpack.c.h.b16 %v154
  %v573 = vunpack.c.l.b16 %v155
  %v574 = vunpack.c.h.b16 %v155
  %v575 = vunpack.c.l.b16 %v156
  %v576 = vunpack.c.h.b16 %v156
  %v577 = vpack.c.b16 %v325, %v321
  %v578 = vpack.c.b16 %v326, %v322
  %v579 = vpack.c.b16 %v327, %v323
  %v580 = vpack.c.b16 %v328, %v324
  %v581 = vpack.c.b16 %v333, %v329
  %v582 = vpack.c.b16 %v334, %v330
  %v583 = vpack.c.b16 %v335, %v331
  %v584 = vpack.c.b16 %v336, %v332
  %v585 = vpack.c.b16 %v341, %v337
  %v586 = vpack.c.b16 %v342, %v338
  %v587 = vpack.c.b16 %v343, %v339
  %v588 = vpack.c.b16 %v344, %v340
  %v589 = vpack.c.b16 %v349, %v345
  %v590 = vpack.c.b16 %v350, %v346
  %v591 = vpack.c.b16 %v351, %v347
  %v592 = vpack.c.b16 %v352, %v348
  %v593 = vpack.c.b16 %v357, %v353
  %v594 = vpack.c.b16 %v358, %v354
  %v595 = vpack.c.b16 %v359, %v355
  %v596 = vpack.c.b16 %v360, %v356
  %v597 = vpack.c.b16 %v365, %v361
  %v598 = vpack.c.b16 %v366, %v362
  %v599 = vpack.c.b16 %v367, %v363
  %v600 = vpack.c.b16 %v368, %v364
  %v601 = vpack.c.b16 %v373, %v369
  %v602 = vpack.c.b16 %v374, %v370
  %v603 = vpack.c.b16 %v375, %v371
  %v604 = vpack.c.b16 %v376, %v372
  %v605 = vpack.c.b16 %v381, %v377
  %v606 = vpack.c.b16 %v382, %v378
  %v607 = vpack.c.b16 %v383, %v379
  %v608 = vpack.c.b16 %v384, %v380
  %v609 = vpack.c.b16 %v389, %v385
  %v610 = vpack.c.b16 %v390, %v386
  %v611 = vpack.c.b16 %v391, %v387
  %v612 = vpack.c.b16 %v392, %v388
  %v613 = vpack.c.b16 %v397, %v393
  %v614 = vpack.c.b16 %v398, %v394
  %v615 = vpack.c.b16 %v399, %v395
  %v616 = vpack.c.b16 %v400, %v396
  %v617 = vpack.c.b16 %v405, %v401
  %v618 = vpack.c.b16 %v406, %v402
  %v619 = vpack.c.b16 %v407, %v403
  %v620 = vpack.c.b16 %v408, %v404
  %v621 = vpack.c.b16 %v413, %v409
  %v622 = vpack.c.b16 %v414, %v410
  %v623 = vpack.c.b16 %v415, %v411
  %v624 = vpack.c.b16 %v416, %v412
  %v625 = vpack.c.b16 %v421, %v417
  %v626 = vpack.c.b16 %v422, %v418
  %v627 = vpack.c.b16 %v423, %v419
  %v628 = vpack.c.b16 %v424, %v420
  %v629 = vpack.c.b16 %v429, %v425
  %v630 = vpack.c.b16 %v430, %v426
  %v631 = vpack.c.b16 %v431, %v427
  %v632 = vpack.c.b16 %v432, %v428
  %v633 = vpack.c.b16 %v437, %v433
  %v634 = vpack.c.b16 %v438, %v434
  %v635 = vpack.c.b16 %v439, %v435
  %v636 = vpack.c.b16 %v440, %v436
  %v637 = vpack.c.b16 %v445, %v441
  %v638 = vpack.c.b16 %v446, %v442
  %v639 = vpack.c.b16 %v447, %v443
  %v640 = vpack.c.b16 %v448, %v444
  %v641 = vpack.c.b16 %v453, %v449
  %v642 = vpack.c.b16 %v454, %v450
  %v643 = vpack.c.b16 %v455, %v451
  %v644 = vpack.c.b16 %v456, %v452
  %v645 = vpack.c.b16 %v461, %v457
  %v646 = vpack.c.b16 %v462, %v458
  %v647 = vpack.c.b16 %v463, %v459
  %v648 = vpack.c.b16 %v464, %v460
  %v649 = vpack.c.b16 %v469, %v465
  %v650 = vpack.c.b16 %v470, %v466
  %v651 = vpack.c.b16 %v471, %v467
  %v652 = vpack.c.b16 %v472, %v468
  %v653 = vpack.c.b16 %v477, %v473
  %v654 = vpack.c.b16 %v478, %v474
  %v655 = vpack.c.b16 %v479, %v475
  %v656 = vpack.c.b16 %v480, %v476
  %v657 = vpack.c.b16 %v485, %v481
  %v658 = vpack.c.b16 %v486, %v482
  %v659 = vpack.c.b16 %v487, %v483
  %v660 = vpack.c.b16 %v488, %v484
  %v661 = vpack.c.b16 %v493, %v489
  %v662 = vpack.c.b16 %v494, %v490
  %v663 = vpack.c.b16 %v495, %v491
  %v664 = vpack.c.b16 %v496, %v492
  %v665 = vpack.c.b16 %v501, %v497
  %v666 = vpack.c.b16 %v502, %v498
  %v667 = vpack.c.b16 %v503, %v499
  %v668 = vpack.c.b16 %v504, %v500
  %v669 = vpack.c.b16 %v509, %v505
  %v670 = vpack.c.b16 %v510, %v506
  %v671 = vpack.c.b16 %v511, %v507
  %v672 = vpack.c.b16 %v512, %v508
  %v673 = vpack.c.b16 %v517, %v513
  %v674 = vpack.c.b16 %v518, %v514
  %v675 = vpack.c.b16 %v519, %v515
  %v676 = vpack.c.b16 %v520, %v516
  %v677 = vpack.c.b16 %v525, %v521
  %v678 = vpack.c.b16 %v526, %v522
  %v679 = vpack.c.b16 %v527, %v523
  %v680 = vpack.c.b16 %v528, %v524
  %v681 = vpack.c.b16 %v533, %v529
  %v682 = vpack.c.b16 %v534, %v530
  %v683 = vpack.c.b16 %v535, %v531
  %v684 = vpack.c.b16 %v536, %v532
  %v685 = vpack.c.b16 %v541, %v537
  %v686 = vpack.c.b16 %v542, %v538
  %v687 = vpack.c.b16 %v543, %v539
  %v688 = vpack.c.b16 %v544, %v540
  %v689 = vpack.c.b16 %v549, %v545
  %v690 = vpack.c.b16 %v550, %v546
  %v691 = vpack.c.b16 %v551, %v547
  %v692 = vpack.c.b16 %v552, %v548
  %v693 = vpack.c.b16 %v557, %v553
  %v694 = vpack.c.b16 %v558, %v554
  %v695 = vpack.c.b16 %v559, %v555
  %v696 = vpack.c.b16 %v560, %v556
  %v697 = vpack.c.b16 %v565, %v561
  %v698 = vpack.c.b16 %v566, %v562
  %v699 = vpack.c.b16 %v567, %v563
  %v700 = vpack.c.b16 %v568, %v564
  %v701 = vpack.c.b16 %v573, %v569
  %v702 = vpack.c.b16 %v574, %v570
  %v703 = vpack.c.b16 %v575, %v571
  %v704 = vpack.c.b16 %v576, %v572
  %833 = vmatprep.subr.bf16.mxu0 %v606
  %834 = vmatpush1.bf16.msra.mxu0 %v605
  %835 = vmatprep.subr.bf16.mxu0 %v602
  %836 = vmatpush1.bf16.msra.mxu0 %v601
  %837 = vmatprep.subr.bf16.mxu0 %v598
  %838 = vmatpush1.bf16.msra.mxu0 %v597
  %839 = vmatprep.subr.bf16.mxu0 %v594
  %840 = vmatpush1.bf16.msra.mxu0 %v593
  %841 = vmatprep.subr.bf16.mxu0 %v590
  %842 = vmatpush1.bf16.msra.mxu0 %v589
  %843 = vmatprep.subr.bf16.mxu0 %v586
  %844 = vmatpush1.bf16.msra.mxu0 %v585
  %845 = vmatprep.subr.bf16.mxu0 %v582
  %846 = vmatpush1.bf16.msra.mxu0 %v581
  %847 = vmatprep.subr.bf16.mxu0 %v578
  %848 = vmatpush1.bf16.msra.mxu0 %v577
  %849 = vmatprep.subr.bf16.mxu0 %v638
  %850 = vmatpush2.bf16.msra.mxu0 %v637
  %851 = vmatprep.subr.bf16.mxu0 %v634
  %852 = vmatpush2.bf16.msra.mxu0 %v633
  %853 = vmatprep.subr.bf16.mxu0 %v630
  %854 = vmatpush2.bf16.msra.mxu0 %v629
  %855 = vmatprep.subr.bf16.mxu0 %v626
  %856 = vmatpush2.bf16.msra.mxu0 %v625
  %857 = vmatprep.subr.bf16.mxu0 %v622
  %858 = vmatpush2.bf16.msra.mxu0 %v621
  %859 = vmatprep.subr.bf16.mxu0 %v618
  %860 = vmatpush2.bf16.msra.mxu0 %v617
  %861 = vmatprep.subr.bf16.mxu0 %v614
  %862 = vmatpush2.bf16.msra.mxu0 %v613
  %863 = vmatprep.subr.bf16.mxu0 %v610
  %864 = vmatpush2.bf16.msra.mxu0 %v609
  %865 = vmatprep.mubr.bf16.mxu0 %v186
  %866 = vmatmul.mubr.bf16.gmra.mxu0 %v185
  %v867 = vpop.f32.mrf.mxu0
  %v868 = vadd.f32 %v162, %v867
  %v869 = vpop.f32.mrf.mxu0
  %v870 = vadd.f32 %v166, %v869
  %v871 = vpop.f32.mrf.mxu0
  %v872 = vpop.f32.mrf.mxu0
  %873 = vdwg.mxu0
  %874 = vmatprep.subr.bf16.mxu0 %v670
  %875 = vmatpush1.bf16.msra.mxu0 %v669
  %876 = vmatprep.subr.bf16.mxu0 %v666
  %877 = vmatpush1.bf16.msra.mxu0 %v665
  %878 = vmatprep.subr.bf16.mxu0 %v662
  %879 = vmatpush1.bf16.msra.mxu0 %v661
  %880 = vmatprep.subr.bf16.mxu0 %v658
  %881 = vmatpush1.bf16.msra.mxu0 %v657
  %882 = vmatprep.subr.bf16.mxu0 %v654
  %883 = vmatpush1.bf16.msra.mxu0 %v653
  %884 = vmatprep.subr.bf16.mxu0 %v650
  %885 = vmatpush1.bf16.msra.mxu0 %v649
  %886 = vmatprep.subr.bf16.mxu0 %v646
  %887 = vmatpush1.bf16.msra.mxu0 %v645
  %888 = vmatprep.subr.bf16.mxu0 %v642
  %889 = vmatpush1.bf16.msra.mxu0 %v641
  %890 = vmatprep.subr.bf16.mxu0 %v702
  %891 = vmatpush2.bf16.msra.mxu0 %v701
  %892 = vmatprep.subr.bf16.mxu0 %v698
  %893 = vmatpush2.bf16.msra.mxu0 %v697
  %894 = vmatprep.subr.bf16.mxu0 %v694
  %895 = vmatpush2.bf16.msra.mxu0 %v693
  %896 = vmatprep.subr.bf16.mxu0 %v690
  %897 = vmatpush2.bf16.msra.mxu0 %v689
  %898 = vmatprep.subr.bf16.mxu0 %v686
  %899 = vmatpush2.bf16.msra.mxu0 %v685
  %900 = vmatprep.subr.bf16.mxu0 %v682
  %901 = vmatpush2.bf16.msra.mxu0 %v681
  %902 = vmatprep.subr.bf16.mxu0 %v678
  %903 = vmatpush2.bf16.msra.mxu0 %v677
  %904 = vmatprep.subr.bf16.mxu0 %v674
  %905 = vmatpush2.bf16.msra.mxu0 %v673
  %906 = vmatprep.mubr.bf16.mxu0 %v188
  %907 = vmatmul.mubr.bf16.gmra.mxu0 %v187
  %v908 = vpop.f32.mrf.mxu0
  %v909 = vadd.f32 %v868, %v908
  %v910 = vpop.f32.mrf.mxu0
  %v911 = vadd.f32 %v870, %v910
  %v912 = vpop.f32.mrf.mxu0
  %v913 = vpop.f32.mrf.mxu0
  %914 = vdwg.mxu0
  %915 = vmatprep.subr.bf16.mxu0 %v608
  %916 = vmatpush1.bf16.msra.mxu0 %v607
  %917 = vmatprep.subr.bf16.mxu0 %v604
  %918 = vmatpush1.bf16.msra.mxu0 %v603
  %919 = vmatprep.subr.bf16.mxu0 %v600
  %920 = vmatpush1.bf16.msra.mxu0 %v599
  %921 = vmatprep.subr.bf16.mxu0 %v596
  %922 = vmatpush1.bf16.msra.mxu0 %v595
  %923 = vmatprep.subr.bf16.mxu0 %v592
  %924 = vmatpush1.bf16.msra.mxu0 %v591
  %925 = vmatprep.subr.bf16.mxu0 %v588
  %926 = vmatpush1.bf16.msra.mxu0 %v587
  %927 = vmatprep.subr.bf16.mxu0 %v584
  %928 = vmatpush1.bf16.msra.mxu0 %v583
  %929 = vmatprep.subr.bf16.mxu0 %v580
  %930 = vmatpush1.bf16.msra.mxu0 %v579
  %931 = vmatprep.subr.bf16.mxu0 %v640
  %932 = vmatpush2.bf16.msra.mxu0 %v639
  %933 = vmatprep.subr.bf16.mxu0 %v636
  %934 = vmatpush2.bf16.msra.mxu0 %v635
  %935 = vmatprep.subr.bf16.mxu0 %v632
  %936 = vmatpush2.bf16.msra.mxu0 %v631
  %937 = vmatprep.subr.bf16.mxu0 %v628
  %938 = vmatpush2.bf16.msra.mxu0 %v627
  %939 = vmatprep.subr.bf16.mxu0 %v624
  %940 = vmatpush2.bf16.msra.mxu0 %v623
  %941 = vmatprep.subr.bf16.mxu0 %v620
  %942 = vmatpush2.bf16.msra.mxu0 %v619
  %943 = vmatprep.subr.bf16.mxu0 %v616
  %944 = vmatpush2.bf16.msra.mxu0 %v615
  %945 = vmatprep.subr.bf16.mxu0 %v612
  %946 = vmatpush2.bf16.msra.mxu0 %v611
  %947 = vmatprep.mubr.bf16.mxu0 %v186
  %948 = vmatmul.mubr.bf16.gmra.mxu0 %v185
  %v949 = vpop.f32.mrf.mxu0
  %v950 = vadd.f32 %v170, %v949
  %v951 = vpop.f32.mrf.mxu0
  %v952 = vadd.f32 %v174, %v951
  %v953 = vpop.f32.mrf.mxu0
  %v954 = vpop.f32.mrf.mxu0
  %955 = vdwg.mxu0
  %956 = vmatprep.subr.bf16.mxu0 %v672
  %957 = vmatpush1.bf16.msra.mxu0 %v671
  %958 = vmatprep.subr.bf16.mxu0 %v668
  %959 = vmatpush1.bf16.msra.mxu0 %v667
  %960 = vmatprep.subr.bf16.mxu0 %v664
  %961 = vmatpush1.bf16.msra.mxu0 %v663
  %962 = vmatprep.subr.bf16.mxu0 %v660
  %963 = vmatpush1.bf16.msra.mxu0 %v659
  %964 = vmatprep.subr.bf16.mxu0 %v656
  %965 = vmatpush1.bf16.msra.mxu0 %v655
  %966 = vmatprep.subr.bf16.mxu0 %v652
  %967 = vmatpush1.bf16.msra.mxu0 %v651
  %968 = vmatprep.subr.bf16.mxu0 %v648
  %969 = vmatpush1.bf16.msra.mxu0 %v647
  %970 = vmatprep.subr.bf16.mxu0 %v644
  %971 = vmatpush1.bf16.msra.mxu0 %v643
  %972 = vmatprep.subr.bf16.mxu0 %v704
  %973 = vmatpush2.bf16.msra.mxu0 %v703
  %974 = vmatprep.subr.bf16.mxu0 %v700
  %975 = vmatpush2.bf16.msra.mxu0 %v699
  %976 = vmatprep.subr.bf16.mxu0 %v696
  %977 = vmatpush2.bf16.msra.mxu0 %v695
  %978 = vmatprep.subr.bf16.mxu0 %v692
  %979 = vmatpush2.bf16.msra.mxu0 %v691
  %980 = vmatprep.subr.bf16.mxu0 %v688
  %981 = vmatpush2.bf16.msra.mxu0 %v687
  %982 = vmatprep.subr.bf16.mxu0 %v684
  %983 = vmatpush2.bf16.msra.mxu0 %v683
  %984 = vmatprep.subr.bf16.mxu0 %v680
  %985 = vmatpush2.bf16.msra.mxu0 %v679
  %986 = vmatprep.subr.bf16.mxu0 %v676
  %987 = vmatpush2.bf16.msra.mxu0 %v675
  %988 = vmatprep.mubr.bf16.mxu0 %v188
  %989 = vmatmul.mubr.bf16.gmra.mxu0 %v187
  %v990 = vpop.f32.mrf.mxu0
  %v991 = vadd.f32 %v950, %v990
  %v992 = vpop.f32.mrf.mxu0
  %v993 = vadd.f32 %v952, %v992
  %v994 = vpop.f32.mrf.mxu0
  %v995 = vpop.f32.mrf.mxu0
  %996 = vdwg.mxu0
  %v997 = vmax.f32 %v909, 0.0
  %v998 = vmax.f32 %v911, 0.0
  %v999 = vmax.f32 %v991, 0.0
  %v1000 = vmax.f32 %v993, 0.0
  %v1001 = vpack.c.bf16 %v997, %v997
  %v1002 = vpack.c.bf16 %v998, %v998
  %v1003 = vpack.c.bf16 %v999, %v999
  %v1004 = vpack.c.bf16 %v1000, %v1000
  %v1005 = vld [vmem:[%s3] sm:$0xff]
  %v1006 = vld [vmem:[%s3 + $0x8] sm:$0xff]
  %v1007 = vld [vmem:[%s3 + $0x10] sm:$0xff]
  %v1008 = vld [vmem:[%s3 + $0x18] sm:$0xff]
  %v1009 = vld [vmem:[%s3 + $0x20] sm:$0xff]
  %v1010 = vld [vmem:[%s3 + $0x28] sm:$0xff]
  %v1011 = vld [vmem:[%s3 + $0x30] sm:$0xff]
  %v1012 = vld [vmem:[%s3 + $0x38] sm:$0xff]
  %v1013 = vld [vmem:[%s3 + $0x40] sm:$0xff]
  %v1014 = vld [vmem:[%s3 + $0x48] sm:$0xff]
  %v1015 = vld [vmem:[%s3 + $0x50] sm:$0xff]
  %v1016 = vld [vmem:[%s3 + $0x58] sm:$0xff]
  %v1017 = vld [vmem:[%s3 + $0x60] sm:$0xff]
  %v1018 = vld [vmem:[%s3 + $0x68] sm:$0xff]
  %v1019 = vld [vmem:[%s3 + $0x70] sm:$0xff]
  %v1020 = vld [vmem:[%s3 + $0x78] sm:$0xff]
  %v1021 = vld [vmem:[%s3 + $0x80] sm:$0xff]
  %v1022 = vld [vmem:[%s3 + $0x88] sm:$0xff]
  %v1023 = vld [vmem:[%s3 + $0x90] sm:$0xff]
  %v1024 = vld [vmem:[%s3 + $0x98] sm:$0xff]
  %v1025 = vld [vmem:[%s3 + $0xa0] sm:$0xff]
  %v1026 = vld [vmem:[%s3 + $0xa8] sm:$0xff]
  %v1027 = vld [vmem:[%s3 + $0xb0] sm:$0xff]
  %v1028 = vld [vmem:[%s3 + $0xb8] sm:$0xff]
  %v1029 = vld [vmem:[%s3 + $0xc0] sm:$0xff]
  %v1030 = vld [vmem:[%s3 + $0xc8] sm:$0xff]
  %v1031 = vld [vmem:[%s3 + $0xd0] sm:$0xff]
  %v1032 = vld [vmem:[%s3 + $0xd8] sm:$0xff]
  %v1033 = vld [vmem:[%s3 + $0xe0] sm:$0xff]
  %v1034 = vld [vmem:[%s3 + $0xe8] sm:$0xff]
  %v1035 = vld [vmem:[%s3 + $0xf0] sm:$0xff]
  %v1036 = vld [vmem:[%s3 + $0xf8] sm:$0xff]
  %v1037 = vld [vmem:[%s3 + $0x100] sm:$0xff]
  %v1038 = vld [vmem:[%s3 + $0x108] sm:$0xff]
  %v1039 = vld [vmem:[%s3 + $0x110] sm:$0xff]
  %v1040 = vld [vmem:[%s3 + $0x118] sm:$0xff]
  %v1041 = vld [vmem:[%s3 + $0x120] sm:$0xff]
  %v1042 = vld [vmem:[%s3 + $0x128] sm:$0xff]
  %v1043 = vld [vmem:[%s3 + $0x130] sm:$0xff]
  %v1044 = vld [vmem:[%s3 + $0x138] sm:$0xff]
  %v1045 = vld [vmem:[%s3 + $0x140] sm:$0xff]
  %v1046 = vld [vmem:[%s3 + $0x148] sm:$0xff]
  %v1047 = vld [vmem:[%s3 + $0x150] sm:$0xff]
  %v1048 = vld [vmem:[%s3 + $0x158] sm:$0xff]
  %v1049 = vld [vmem:[%s3 + $0x160] sm:$0xff]
  %v1050 = vld [vmem:[%s3 + $0x168] sm:$0xff]
  %v1051 = vld [vmem:[%s3 + $0x170] sm:$0xff]
  %v1052 = vld [vmem:[%s3 + $0x178] sm:$0xff]
  %v1053 = vld [vmem:[%s3 + $0x180] sm:$0xff]
  %v1054 = vld [vmem:[%s3 + $0x188] sm:$0xff]
  %v1055 = vld [vmem:[%s3 + $0x190] sm:$0xff]
  %v1056 = vld [vmem:[%s3 + $0x198] sm:$0xff]
  %v1057 = vld [vmem:[%s3 + $0x1a0] sm:$0xff]
  %v1058 = vld [vmem:[%s3 + $0x1a8] sm:$0xff]
  %v1059 = vld [vmem:[%s3 + $0x1b0] sm:$0xff]
  %v1060 = vld [vmem:[%s3 + $0x1b8] sm:$0xff]
  %v1061 = vld [vmem:[%s3 + $0x1c0] sm:$0xff]
  %v1062 = vld [vmem:[%s3 + $0x1c8] sm:$0xff]
  %v1063 = vld [vmem:[%s3 + $0x1d0] sm:$0xff]
  %v1064 = vld [vmem:[%s3 + $0x1d8] sm:$0xff]
  %v1065 = vld [vmem:[%s3 + $0x1e0] sm:$0xff]
  %v1066 = vld [vmem:[%s3 + $0x1e8] sm:$0xff]
  %v1067 = vld [vmem:[%s3 + $0x1f0] sm:$0xff]
  %v1068 = vld [vmem:[%s3 + $0x1f8] sm:$0xff]
  %v1069 = vld [vmem:[%s3 + $0x200] sm:$0xff]
  %v1070 = vld [vmem:[%s3 + $0x208] sm:$0xff]
  %v1071 = vld [vmem:[%s3 + $0x210] sm:$0xff]
  %v1072 = vld [vmem:[%s3 + $0x218] sm:$0xff]
  %v1073 = vld [vmem:[%s3 + $0x220] sm:$0xff]
  %v1074 = vld [vmem:[%s3 + $0x228] sm:$0xff]
  %v1075 = vld [vmem:[%s3 + $0x230] sm:$0xff]
  %v1076 = vld [vmem:[%s3 + $0x238] sm:$0xff]
  %v1077 = vld [vmem:[%s3 + $0x240] sm:$0xff]
  %v1078 = vld [vmem:[%s3 + $0x248] sm:$0xff]
  %v1079 = vld [vmem:[%s3 + $0x250] sm:$0xff]
  %v1080 = vld [vmem:[%s3 + $0x258] sm:$0xff]
  %v1081 = vld [vmem:[%s3 + $0x260] sm:$0xff]
  %v1082 = vld [vmem:[%s3 + $0x268] sm:$0xff]
  %v1083 = vld [vmem:[%s3 + $0x270] sm:$0xff]
  %v1084 = vld [vmem:[%s3 + $0x278] sm:$0xff]
  %v1085 = vld [vmem:[%s3 + $0x280] sm:$0xff]
  %v1086 = vld [vmem:[%s3 + $0x288] sm:$0xff]
  %v1087 = vld [vmem:[%s3 + $0x290] sm:$0xff]
  %v1088 = vld [vmem:[%s3 + $0x298] sm:$0xff]
  %v1089 = vld [vmem:[%s3 + $0x2a0] sm:$0xff]
  %v1090 = vld [vmem:[%s3 + $0x2a8] sm:$0xff]
  %v1091 = vld [vmem:[%s3 + $0x2b0] sm:$0xff]
  %v1092 = vld [vmem:[%s3 + $0x2b8] sm:$0xff]
  %v1093 = vld [vmem:[%s3 + $0x2c0] sm:$0xff]
  %v1094 = vld [vmem:[%s3 + $0x2c8] sm:$0xff]
  %v1095 = vld [vmem:[%s3 + $0x2d0] sm:$0xff]
  %v1096 = vld [vmem:[%s3 + $0x2d8] sm:$0xff]
  %v1097 = vld [vmem:[%s3 + $0x2e0] sm:$0xff]
  %v1098 = vld [vmem:[%s3 + $0x2e8] sm:$0xff]
  %v1099 = vld [vmem:[%s3 + $0x2f0] sm:$0xff]
  %v1100 = vld [vmem:[%s3 + $0x2f8] sm:$0xff]
  %v1101 = vld [vmem:[%s3 + $0x300] sm:$0xff]
  %v1102 = vld [vmem:[%s3 + $0x308] sm:$0xff]
  %v1103 = vld [vmem:[%s3 + $0x310] sm:$0xff]
  %v1104 = vld [vmem:[%s3 + $0x318] sm:$0xff]
  %v1105 = vld [vmem:[%s3 + $0x320] sm:$0xff]
  %v1106 = vld [vmem:[%s3 + $0x328] sm:$0xff]
  %v1107 = vld [vmem:[%s3 + $0x330] sm:$0xff]
  %v1108 = vld [vmem:[%s3 + $0x338] sm:$0xff]
  %v1109 = vld [vmem:[%s3 + $0x340] sm:$0xff]
  %v1110 = vld [vmem:[%s3 + $0x348] sm:$0xff]
  %v1111 = vld [vmem:[%s3 + $0x350] sm:$0xff]
  %v1112 = vld [vmem:[%s3 + $0x358] sm:$0xff]
  %v1113 = vld [vmem:[%s3 + $0x360] sm:$0xff]
  %v1114 = vld [vmem:[%s3 + $0x368] sm:$0xff]
  %v1115 = vld [vmem:[%s3 + $0x370] sm:$0xff]
  %v1116 = vld [vmem:[%s3 + $0x378] sm:$0xff]
  %v1117 = vld [vmem:[%s3 + $0x380] sm:$0xff]
  %v1118 = vld [vmem:[%s3 + $0x388] sm:$0xff]
  %v1119 = vld [vmem:[%s3 + $0x390] sm:$0xff]
  %v1120 = vld [vmem:[%s3 + $0x398] sm:$0xff]
  %v1121 = vld [vmem:[%s3 + $0x3a0] sm:$0xff]
  %v1122 = vld [vmem:[%s3 + $0x3a8] sm:$0xff]
  %v1123 = vld [vmem:[%s3 + $0x3b0] sm:$0xff]
  %v1124 = vld [vmem:[%s3 + $0x3b8] sm:$0xff]
  %v1125 = vld [vmem:[%s3 + $0x3c0] sm:$0xff]
  %v1126 = vld [vmem:[%s3 + $0x3c8] sm:$0xff]
  %v1127 = vld [vmem:[%s3 + $0x3d0] sm:$0xff]
  %v1128 = vld [vmem:[%s3 + $0x3d8] sm:$0xff]
  %v1129 = vld [vmem:[%s3 + $0x3e0] sm:$0xff]
  %v1130 = vld [vmem:[%s3 + $0x3e8] sm:$0xff]
  %v1131 = vld [vmem:[%s3 + $0x3f0] sm:$0xff]
  %v1132 = vld [vmem:[%s3 + $0x3f8] sm:$0xff]
  %v1133 = vld [vmem:[%s4] sm:$0xf]
  %v1135 = vlaneseq
  %v1136 = vshrl.u32 %v1135, 7
  %v1137 = vsub.s32 0, %v1136
  %v1138 = vrot.slane %v1133, %v1137
  %v1139 = vlaneseq
  %v1140 = vshrl.u32 %v1139, 7
  %v1141 = vsub.s32 1, %v1140
  %v1142 = vrot.slane %v1133, %v1141
  %v1143 = vlaneseq
  %v1144 = vshrl.u32 %v1143, 7
  %v1145 = vsub.s32 2, %v1144
  %v1146 = vrot.slane %v1133, %v1145
  %v1147 = vlaneseq
  %v1148 = vshrl.u32 %v1147, 7
  %v1149 = vsub.s32 3, %v1148
  %v1150 = vrot.slane %v1133, %v1149
  %v1283 = vunpack.c.l.b16 %v1005
  %v1284 = vunpack.c.h.b16 %v1005
  %v1285 = vunpack.c.l.b16 %v1006
  %v1286 = vunpack.c.h.b16 %v1006
  %v1287 = vunpack.c.l.b16 %v1007
  %v1288 = vunpack.c.h.b16 %v1007
  %v1289 = vunpack.c.l.b16 %v1008
  %v1290 = vunpack.c.h.b16 %v1008
  %v1291 = vunpack.c.l.b16 %v1009
  %v1292 = vunpack.c.h.b16 %v1009
  %v1293 = vunpack.c.l.b16 %v1010
  %v1294 = vunpack.c.h.b16 %v1010
  %v1295 = vunpack.c.l.b16 %v1011
  %v1296 = vunpack.c.h.b16 %v1011
  %v1297 = vunpack.c.l.b16 %v1012
  %v1298 = vunpack.c.h.b16 %v1012
  %v1299 = vunpack.c.l.b16 %v1013
  %v1300 = vunpack.c.h.b16 %v1013
  %v1301 = vunpack.c.l.b16 %v1014
  %v1302 = vunpack.c.h.b16 %v1014
  %v1303 = vunpack.c.l.b16 %v1015
  %v1304 = vunpack.c.h.b16 %v1015
  %v1305 = vunpack.c.l.b16 %v1016
  %v1306 = vunpack.c.h.b16 %v1016
  %v1307 = vunpack.c.l.b16 %v1017
  %v1308 = vunpack.c.h.b16 %v1017
  %v1309 = vunpack.c.l.b16 %v1018
  %v1310 = vunpack.c.h.b16 %v1018
  %v1311 = vunpack.c.l.b16 %v1019
  %v1312 = vunpack.c.h.b16 %v1019
  %v1313 = vunpack.c.l.b16 %v1020
  %v1314 = vunpack.c.h.b16 %v1020
  %v1315 = vunpack.c.l.b16 %v1021
  %v1316 = vunpack.c.h.b16 %v1021
  %v1317 = vunpack.c.l.b16 %v1022
  %v1318 = vunpack.c.h.b16 %v1022
  %v1319 = vunpack.c.l.b16 %v1023
  %v1320 = vunpack.c.h.b16 %v1023
  %v1321 = vunpack.c.l.b16 %v1024
  %v1322 = vunpack.c.h.b16 %v1024
  %v1323 = vunpack.c.l.b16 %v1025
  %v1324 = vunpack.c.h.b16 %v1025
  %v1325 = vunpack.c.l.b16 %v1026
  %v1326 = vunpack.c.h.b16 %v1026
  %v1327 = vunpack.c.l.b16 %v1027
  %v1328 = vunpack.c.h.b16 %v1027
  %v1329 = vunpack.c.l.b16 %v1028
  %v1330 = vunpack.c.h.b16 %v1028
  %v1331 = vunpack.c.l.b16 %v1029
  %v1332 = vunpack.c.h.b16 %v1029
  %v1333 = vunpack.c.l.b16 %v1030
  %v1334 = vunpack.c.h.b16 %v1030
  %v1335 = vunpack.c.l.b16 %v1031
  %v1336 = vunpack.c.h.b16 %v1031
  %v1337 = vunpack.c.l.b16 %v1032
  %v1338 = vunpack.c.h.b16 %v1032
  %v1339 = vunpack.c.l.b16 %v1033
  %v1340 = vunpack.c.h.b16 %v1033
  %v1341 = vunpack.c.l.b16 %v1034
  %v1342 = vunpack.c.h.b16 %v1034
  %v1343 = vunpack.c.l.b16 %v1035
  %v1344 = vunpack.c.h.b16 %v1035
  %v1345 = vunpack.c.l.b16 %v1036
  %v1346 = vunpack.c.h.b16 %v1036
  %v1347 = vunpack.c.l.b16 %v1037
  %v1348 = vunpack.c.h.b16 %v1037
  %v1349 = vunpack.c.l.b16 %v1038
  %v1350 = vunpack.c.h.b16 %v1038
  %v1351 = vunpack.c.l.b16 %v1039
  %v1352 = vunpack.c.h.b16 %v1039
  %v1353 = vunpack.c.l.b16 %v1040
  %v1354 = vunpack.c.h.b16 %v1040
  %v1355 = vunpack.c.l.b16 %v1041
  %v1356 = vunpack.c.h.b16 %v1041
  %v1357 = vunpack.c.l.b16 %v1042
  %v1358 = vunpack.c.h.b16 %v1042
  %v1359 = vunpack.c.l.b16 %v1043
  %v1360 = vunpack.c.h.b16 %v1043
  %v1361 = vunpack.c.l.b16 %v1044
  %v1362 = vunpack.c.h.b16 %v1044
  %v1363 = vunpack.c.l.b16 %v1045
  %v1364 = vunpack.c.h.b16 %v1045
  %v1365 = vunpack.c.l.b16 %v1046
  %v1366 = vunpack.c.h.b16 %v1046
  %v1367 = vunpack.c.l.b16 %v1047
  %v1368 = vunpack.c.h.b16 %v1047
  %v1369 = vunpack.c.l.b16 %v1048
  %v1370 = vunpack.c.h.b16 %v1048
  %v1371 = vunpack.c.l.b16 %v1049
  %v1372 = vunpack.c.h.b16 %v1049
  %v1373 = vunpack.c.l.b16 %v1050
  %v1374 = vunpack.c.h.b16 %v1050
  %v1375 = vunpack.c.l.b16 %v1051
  %v1376 = vunpack.c.h.b16 %v1051
  %v1377 = vunpack.c.l.b16 %v1052
  %v1378 = vunpack.c.h.b16 %v1052
  %v1379 = vunpack.c.l.b16 %v1053
  %v1380 = vunpack.c.h.b16 %v1053
  %v1381 = vunpack.c.l.b16 %v1054
  %v1382 = vunpack.c.h.b16 %v1054
  %v1383 = vunpack.c.l.b16 %v1055
  %v1384 = vunpack.c.h.b16 %v1055
  %v1385 = vunpack.c.l.b16 %v1056
  %v1386 = vunpack.c.h.b16 %v1056
  %v1387 = vunpack.c.l.b16 %v1057
  %v1388 = vunpack.c.h.b16 %v1057
  %v1389 = vunpack.c.l.b16 %v1058
  %v1390 = vunpack.c.h.b16 %v1058
  %v1391 = vunpack.c.l.b16 %v1059
  %v1392 = vunpack.c.h.b16 %v1059
  %v1393 = vunpack.c.l.b16 %v1060
  %v1394 = vunpack.c.h.b16 %v1060
  %v1395 = vunpack.c.l.b16 %v1061
  %v1396 = vunpack.c.h.b16 %v1061
  %v1397 = vunpack.c.l.b16 %v1062
  %v1398 = vunpack.c.h.b16 %v1062
  %v1399 = vunpack.c.l.b16 %v1063
  %v1400 = vunpack.c.h.b16 %v1063
  %v1401 = vunpack.c.l.b16 %v1064
  %v1402 = vunpack.c.h.b16 %v1064
  %v1403 = vunpack.c.l.b16 %v1065
  %v1404 = vunpack.c.h.b16 %v1065
  %v1405 = vunpack.c.l.b16 %v1066
  %v1406 = vunpack.c.h.b16 %v1066
  %v1407 = vunpack.c.l.b16 %v1067
  %v1408 = vunpack.c.h.b16 %v1067
  %v1409 = vunpack.c.l.b16 %v1068
  %v1410 = vunpack.c.h.b16 %v1068
  %v1411 = vunpack.c.l.b16 %v1069
  %v1412 = vunpack.c.h.b16 %v1069
  %v1413 = vunpack.c.l.b16 %v1070
  %v1414 = vunpack.c.h.b16 %v1070
  %v1415 = vunpack.c.l.b16 %v1071
  %v1416 = vunpack.c.h.b16 %v1071
  %v1417 = vunpack.c.l.b16 %v1072
  %v1418 = vunpack.c.h.b16 %v1072
  %v1419 = vunpack.c.l.b16 %v1073
  %v1420 = vunpack.c.h.b16 %v1073
  %v1421 = vunpack.c.l.b16 %v1074
  %v1422 = vunpack.c.h.b16 %v1074
  %v1423 = vunpack.c.l.b16 %v1075
  %v1424 = vunpack.c.h.b16 %v1075
  %v1425 = vunpack.c.l.b16 %v1076
  %v1426 = vunpack.c.h.b16 %v1076
  %v1427 = vunpack.c.l.b16 %v1077
  %v1428 = vunpack.c.h.b16 %v1077
  %v1429 = vunpack.c.l.b16 %v1078
  %v1430 = vunpack.c.h.b16 %v1078
  %v1431 = vunpack.c.l.b16 %v1079
  %v1432 = vunpack.c.h.b16 %v1079
  %v1433 = vunpack.c.l.b16 %v1080
  %v1434 = vunpack.c.h.b16 %v1080
  %v1435 = vunpack.c.l.b16 %v1081
  %v1436 = vunpack.c.h.b16 %v1081
  %v1437 = vunpack.c.l.b16 %v1082
  %v1438 = vunpack.c.h.b16 %v1082
  %v1439 = vunpack.c.l.b16 %v1083
  %v1440 = vunpack.c.h.b16 %v1083
  %v1441 = vunpack.c.l.b16 %v1084
  %v1442 = vunpack.c.h.b16 %v1084
  %v1443 = vunpack.c.l.b16 %v1085
  %v1444 = vunpack.c.h.b16 %v1085
  %v1445 = vunpack.c.l.b16 %v1086
  %v1446 = vunpack.c.h.b16 %v1086
  %v1447 = vunpack.c.l.b16 %v1087
  %v1448 = vunpack.c.h.b16 %v1087
  %v1449 = vunpack.c.l.b16 %v1088
  %v1450 = vunpack.c.h.b16 %v1088
  %v1451 = vunpack.c.l.b16 %v1089
  %v1452 = vunpack.c.h.b16 %v1089
  %v1453 = vunpack.c.l.b16 %v1090
  %v1454 = vunpack.c.h.b16 %v1090
  %v1455 = vunpack.c.l.b16 %v1091
  %v1456 = vunpack.c.h.b16 %v1091
  %v1457 = vunpack.c.l.b16 %v1092
  %v1458 = vunpack.c.h.b16 %v1092
  %v1459 = vunpack.c.l.b16 %v1093
  %v1460 = vunpack.c.h.b16 %v1093
  %v1461 = vunpack.c.l.b16 %v1094
  %v1462 = vunpack.c.h.b16 %v1094
  %v1463 = vunpack.c.l.b16 %v1095
  %v1464 = vunpack.c.h.b16 %v1095
  %v1465 = vunpack.c.l.b16 %v1096
  %v1466 = vunpack.c.h.b16 %v1096
  %v1467 = vunpack.c.l.b16 %v1097
  %v1468 = vunpack.c.h.b16 %v1097
  %v1469 = vunpack.c.l.b16 %v1098
  %v1470 = vunpack.c.h.b16 %v1098
  %v1471 = vunpack.c.l.b16 %v1099
  %v1472 = vunpack.c.h.b16 %v1099
  %v1473 = vunpack.c.l.b16 %v1100
  %v1474 = vunpack.c.h.b16 %v1100
  %v1475 = vunpack.c.l.b16 %v1101
  %v1476 = vunpack.c.h.b16 %v1101
  %v1477 = vunpack.c.l.b16 %v1102
  %v1478 = vunpack.c.h.b16 %v1102
  %v1479 = vunpack.c.l.b16 %v1103
  %v1480 = vunpack.c.h.b16 %v1103
  %v1481 = vunpack.c.l.b16 %v1104
  %v1482 = vunpack.c.h.b16 %v1104
  %v1483 = vunpack.c.l.b16 %v1105
  %v1484 = vunpack.c.h.b16 %v1105
  %v1485 = vunpack.c.l.b16 %v1106
  %v1486 = vunpack.c.h.b16 %v1106
  %v1487 = vunpack.c.l.b16 %v1107
  %v1488 = vunpack.c.h.b16 %v1107
  %v1489 = vunpack.c.l.b16 %v1108
  %v1490 = vunpack.c.h.b16 %v1108
  %v1491 = vunpack.c.l.b16 %v1109
  %v1492 = vunpack.c.h.b16 %v1109
  %v1493 = vunpack.c.l.b16 %v1110
  %v1494 = vunpack.c.h.b16 %v1110
  %v1495 = vunpack.c.l.b16 %v1111
  %v1496 = vunpack.c.h.b16 %v1111
  %v1497 = vunpack.c.l.b16 %v1112
  %v1498 = vunpack.c.h.b16 %v1112
  %v1499 = vunpack.c.l.b16 %v1113
  %v1500 = vunpack.c.h.b16 %v1113
  %v1501 = vunpack.c.l.b16 %v1114
  %v1502 = vunpack.c.h.b16 %v1114
  %v1503 = vunpack.c.l.b16 %v1115
  %v1504 = vunpack.c.h.b16 %v1115
  %v1505 = vunpack.c.l.b16 %v1116
  %v1506 = vunpack.c.h.b16 %v1116
  %v1507 = vunpack.c.l.b16 %v1117
  %v1508 = vunpack.c.h.b16 %v1117
  %v1509 = vunpack.c.l.b16 %v1118
  %v1510 = vunpack.c.h.b16 %v1118
  %v1511 = vunpack.c.l.b16 %v1119
  %v1512 = vunpack.c.h.b16 %v1119
  %v1513 = vunpack.c.l.b16 %v1120
  %v1514 = vunpack.c.h.b16 %v1120
  %v1515 = vunpack.c.l.b16 %v1121
  %v1516 = vunpack.c.h.b16 %v1121
  %v1517 = vunpack.c.l.b16 %v1122
  %v1518 = vunpack.c.h.b16 %v1122
  %v1519 = vunpack.c.l.b16 %v1123
  %v1520 = vunpack.c.h.b16 %v1123
  %v1521 = vunpack.c.l.b16 %v1124
  %v1522 = vunpack.c.h.b16 %v1124
  %v1523 = vunpack.c.l.b16 %v1125
  %v1524 = vunpack.c.h.b16 %v1125
  %v1525 = vunpack.c.l.b16 %v1126
  %v1526 = vunpack.c.h.b16 %v1126
  %v1527 = vunpack.c.l.b16 %v1127
  %v1528 = vunpack.c.h.b16 %v1127
  %v1529 = vunpack.c.l.b16 %v1128
  %v1530 = vunpack.c.h.b16 %v1128
  %v1531 = vunpack.c.l.b16 %v1129
  %v1532 = vunpack.c.h.b16 %v1129
  %v1533 = vunpack.c.l.b16 %v1130
  %v1534 = vunpack.c.h.b16 %v1130
  %v1535 = vunpack.c.l.b16 %v1131
  %v1536 = vunpack.c.h.b16 %v1131
  %v1537 = vunpack.c.l.b16 %v1132
  %v1538 = vunpack.c.h.b16 %v1132
  %v1539 = vpack.c.b16 %v1287, %v1283
  %v1540 = vpack.c.b16 %v1288, %v1284
  %v1541 = vpack.c.b16 %v1289, %v1285
  %v1542 = vpack.c.b16 %v1290, %v1286
  %v1543 = vpack.c.b16 %v1295, %v1291
  %v1544 = vpack.c.b16 %v1296, %v1292
  %v1545 = vpack.c.b16 %v1297, %v1293
  %v1546 = vpack.c.b16 %v1298, %v1294
  %v1547 = vpack.c.b16 %v1303, %v1299
  %v1548 = vpack.c.b16 %v1304, %v1300
  %v1549 = vpack.c.b16 %v1305, %v1301
  %v1550 = vpack.c.b16 %v1306, %v1302
  %v1551 = vpack.c.b16 %v1311, %v1307
  %v1552 = vpack.c.b16 %v1312, %v1308
  %v1553 = vpack.c.b16 %v1313, %v1309
  %v1554 = vpack.c.b16 %v1314, %v1310
  %v1555 = vpack.c.b16 %v1319, %v1315
  %v1556 = vpack.c.b16 %v1320, %v1316
  %v1557 = vpack.c.b16 %v1321, %v1317
  %v1558 = vpack.c.b16 %v1322, %v1318
  %v1559 = vpack.c.b16 %v1327, %v1323
  %v1560 = vpack.c.b16 %v1328, %v1324
  %v1561 = vpack.c.b16 %v1329, %v1325
  %v1562 = vpack.c.b16 %v1330, %v1326
  %v1563 = vpack.c.b16 %v1335, %v1331
  %v1564 = vpack.c.b16 %v1336, %v1332
  %v1565 = vpack.c.b16 %v1337, %v1333
  %v1566 = vpack.c.b16 %v1338, %v1334
  %v1567 = vpack.c.b16 %v1343, %v1339
  %v1568 = vpack.c.b16 %v1344, %v1340
  %v1569 = vpack.c.b16 %v1345, %v1341
  %v1570 = vpack.c.b16 %v1346, %v1342
  %v1571 = vpack.c.b16 %v1351, %v1347
  %v1572 = vpack.c.b16 %v1352, %v1348
  %v1573 = vpack.c.b16 %v1353, %v1349
  %v1574 = vpack.c.b16 %v1354, %v1350
  %v1575 = vpack.c.b16 %v1359, %v1355
  %v1576 = vpack.c.b16 %v1360, %v1356
  %v1577 = vpack.c.b16 %v1361, %v1357
  %v1578 = vpack.c.b16 %v1362, %v1358
  %v1579 = vpack.c.b16 %v1367, %v1363
  %v1580 = vpack.c.b16 %v1368, %v1364
  %v1581 = vpack.c.b16 %v1369, %v1365
  %v1582 = vpack.c.b16 %v1370, %v1366
  %v1583 = vpack.c.b16 %v1375, %v1371
  %v1584 = vpack.c.b16 %v1376, %v1372
  %v1585 = vpack.c.b16 %v1377, %v1373
  %v1586 = vpack.c.b16 %v1378, %v1374
  %v1587 = vpack.c.b16 %v1383, %v1379
  %v1588 = vpack.c.b16 %v1384, %v1380
  %v1589 = vpack.c.b16 %v1385, %v1381
  %v1590 = vpack.c.b16 %v1386, %v1382
  %v1591 = vpack.c.b16 %v1391, %v1387
  %v1592 = vpack.c.b16 %v1392, %v1388
  %v1593 = vpack.c.b16 %v1393, %v1389
  %v1594 = vpack.c.b16 %v1394, %v1390
  %v1595 = vpack.c.b16 %v1399, %v1395
  %v1596 = vpack.c.b16 %v1400, %v1396
  %v1597 = vpack.c.b16 %v1401, %v1397
  %v1598 = vpack.c.b16 %v1402, %v1398
  %v1599 = vpack.c.b16 %v1407, %v1403
  %v1600 = vpack.c.b16 %v1408, %v1404
  %v1601 = vpack.c.b16 %v1409, %v1405
  %v1602 = vpack.c.b16 %v1410, %v1406
  %v1603 = vpack.c.b16 %v1415, %v1411
  %v1604 = vpack.c.b16 %v1416, %v1412
  %v1605 = vpack.c.b16 %v1417, %v1413
  %v1606 = vpack.c.b16 %v1418, %v1414
  %v1607 = vpack.c.b16 %v1423, %v1419
  %v1608 = vpack.c.b16 %v1424, %v1420
  %v1609 = vpack.c.b16 %v1425, %v1421
  %v1610 = vpack.c.b16 %v1426, %v1422
  %v1611 = vpack.c.b16 %v1431, %v1427
  %v1612 = vpack.c.b16 %v1432, %v1428
  %v1613 = vpack.c.b16 %v1433, %v1429
  %v1614 = vpack.c.b16 %v1434, %v1430
  %v1615 = vpack.c.b16 %v1439, %v1435
  %v1616 = vpack.c.b16 %v1440, %v1436
  %v1617 = vpack.c.b16 %v1441, %v1437
  %v1618 = vpack.c.b16 %v1442, %v1438
  %v1619 = vpack.c.b16 %v1447, %v1443
  %v1620 = vpack.c.b16 %v1448, %v1444
  %v1621 = vpack.c.b16 %v1449, %v1445
  %v1622 = vpack.c.b16 %v1450, %v1446
  %v1623 = vpack.c.b16 %v1455, %v1451
  %v1624 = vpack.c.b16 %v1456, %v1452
  %v1625 = vpack.c.b16 %v1457, %v1453
  %v1626 = vpack.c.b16 %v1458, %v1454
  %v1627 = vpack.c.b16 %v1463, %v1459
  %v1628 = vpack.c.b16 %v1464, %v1460
  %v1629 = vpack.c.b16 %v1465, %v1461
  %v1630 = vpack.c.b16 %v1466, %v1462
  %v1631 = vpack.c.b16 %v1471, %v1467
  %v1632 = vpack.c.b16 %v1472, %v1468
  %v1633 = vpack.c.b16 %v1473, %v1469
  %v1634 = vpack.c.b16 %v1474, %v1470
  %v1635 = vpack.c.b16 %v1479, %v1475
  %v1636 = vpack.c.b16 %v1480, %v1476
  %v1637 = vpack.c.b16 %v1481, %v1477
  %v1638 = vpack.c.b16 %v1482, %v1478
  %v1639 = vpack.c.b16 %v1487, %v1483
  %v1640 = vpack.c.b16 %v1488, %v1484
  %v1641 = vpack.c.b16 %v1489, %v1485
  %v1642 = vpack.c.b16 %v1490, %v1486
  %v1643 = vpack.c.b16 %v1495, %v1491
  %v1644 = vpack.c.b16 %v1496, %v1492
  %v1645 = vpack.c.b16 %v1497, %v1493
  %v1646 = vpack.c.b16 %v1498, %v1494
  %v1647 = vpack.c.b16 %v1503, %v1499
  %v1648 = vpack.c.b16 %v1504, %v1500
  %v1649 = vpack.c.b16 %v1505, %v1501
  %v1650 = vpack.c.b16 %v1506, %v1502
  %v1651 = vpack.c.b16 %v1511, %v1507
  %v1652 = vpack.c.b16 %v1512, %v1508
  %v1653 = vpack.c.b16 %v1513, %v1509
  %v1654 = vpack.c.b16 %v1514, %v1510
  %v1655 = vpack.c.b16 %v1519, %v1515
  %v1656 = vpack.c.b16 %v1520, %v1516
  %v1657 = vpack.c.b16 %v1521, %v1517
  %v1658 = vpack.c.b16 %v1522, %v1518
  %v1659 = vpack.c.b16 %v1527, %v1523
  %v1660 = vpack.c.b16 %v1528, %v1524
  %v1661 = vpack.c.b16 %v1529, %v1525
  %v1662 = vpack.c.b16 %v1530, %v1526
  %v1663 = vpack.c.b16 %v1535, %v1531
  %v1664 = vpack.c.b16 %v1536, %v1532
  %v1665 = vpack.c.b16 %v1537, %v1533
  %v1666 = vpack.c.b16 %v1538, %v1534
  %1795 = vmatprep.subr.bf16.mxu0 %v1568
  %1796 = vmatpush1.bf16.msra.mxu0 %v1567
  %1797 = vmatprep.subr.bf16.mxu0 %v1564
  %1798 = vmatpush1.bf16.msra.mxu0 %v1563
  %1799 = vmatprep.subr.bf16.mxu0 %v1560
  %1800 = vmatpush1.bf16.msra.mxu0 %v1559
  %1801 = vmatprep.subr.bf16.mxu0 %v1556
  %1802 = vmatpush1.bf16.msra.mxu0 %v1555
  %1803 = vmatprep.subr.bf16.mxu0 %v1552
  %1804 = vmatpush1.bf16.msra.mxu0 %v1551
  %1805 = vmatprep.subr.bf16.mxu0 %v1548
  %1806 = vmatpush1.bf16.msra.mxu0 %v1547
  %1807 = vmatprep.subr.bf16.mxu0 %v1544
  %1808 = vmatpush1.bf16.msra.mxu0 %v1543
  %1809 = vmatprep.subr.bf16.mxu0 %v1540
  %1810 = vmatpush1.bf16.msra.mxu0 %v1539
  %1811 = vmatprep.subr.bf16.mxu0 %v1600
  %1812 = vmatpush2.bf16.msra.mxu0 %v1599
  %1813 = vmatprep.subr.bf16.mxu0 %v1596
  %1814 = vmatpush2.bf16.msra.mxu0 %v1595
  %1815 = vmatprep.subr.bf16.mxu0 %v1592
  %1816 = vmatpush2.bf16.msra.mxu0 %v1591
  %1817 = vmatprep.subr.bf16.mxu0 %v1588
  %1818 = vmatpush2.bf16.msra.mxu0 %v1587
  %1819 = vmatprep.subr.bf16.mxu0 %v1584
  %1820 = vmatpush2.bf16.msra.mxu0 %v1583
  %1821 = vmatprep.subr.bf16.mxu0 %v1580
  %1822 = vmatpush2.bf16.msra.mxu0 %v1579
  %1823 = vmatprep.subr.bf16.mxu0 %v1576
  %1824 = vmatpush2.bf16.msra.mxu0 %v1575
  %1825 = vmatprep.subr.bf16.mxu0 %v1572
  %1826 = vmatpush2.bf16.msra.mxu0 %v1571
  %1827 = vmatprep.mubr.bf16.mxu0 %v1002
  %1828 = vmatmul.mubr.bf16.gmra.mxu0 %v1001
  %v1829 = vpop.f32.mrf.mxu0
  %v1830 = vadd.f32 %v1138, %v1829
  %v1831 = vpop.f32.mrf.mxu0
  %v1832 = vadd.f32 %v1142, %v1831
  %v1833 = vpop.f32.mrf.mxu0
  %v1834 = vpop.f32.mrf.mxu0
  %1835 = vdwg.mxu0
  %1836 = vmatprep.subr.bf16.mxu0 %v1632
  %1837 = vmatpush1.bf16.msra.mxu0 %v1631
  %1838 = vmatprep.subr.bf16.mxu0 %v1628
  %1839 = vmatpush1.bf16.msra.mxu0 %v1627
  %1840 = vmatprep.subr.bf16.mxu0 %v1624
  %1841 = vmatpush1.bf16.msra.mxu0 %v1623
  %1842 = vmatprep.subr.bf16.mxu0 %v1620
  %1843 = vmatpush1.bf16.msra.mxu0 %v1619
  %1844 = vmatprep.subr.bf16.mxu0 %v1616
  %1845 = vmatpush1.bf16.msra.mxu0 %v1615
  %1846 = vmatprep.subr.bf16.mxu0 %v1612
  %1847 = vmatpush1.bf16.msra.mxu0 %v1611
  %1848 = vmatprep.subr.bf16.mxu0 %v1608
  %1849 = vmatpush1.bf16.msra.mxu0 %v1607
  %1850 = vmatprep.subr.bf16.mxu0 %v1604
  %1851 = vmatpush1.bf16.msra.mxu0 %v1603
  %1852 = vmatprep.subr.bf16.mxu0 %v1664
  %1853 = vmatpush2.bf16.msra.mxu0 %v1663
  %1854 = vmatprep.subr.bf16.mxu0 %v1660
  %1855 = vmatpush2.bf16.msra.mxu0 %v1659
  %1856 = vmatprep.subr.bf16.mxu0 %v1656
  %1857 = vmatpush2.bf16.msra.mxu0 %v1655
  %1858 = vmatprep.subr.bf16.mxu0 %v1652
  %1859 = vmatpush2.bf16.msra.mxu0 %v1651
  %1860 = vmatprep.subr.bf16.mxu0 %v1648
  %1861 = vmatpush2.bf16.msra.mxu0 %v1647
  %1862 = vmatprep.subr.bf16.mxu0 %v1644
  %1863 = vmatpush2.bf16.msra.mxu0 %v1643
  %1864 = vmatprep.subr.bf16.mxu0 %v1640
  %1865 = vmatpush2.bf16.msra.mxu0 %v1639
  %1866 = vmatprep.subr.bf16.mxu0 %v1636
  %1867 = vmatpush2.bf16.msra.mxu0 %v1635
  %1868 = vmatprep.mubr.bf16.mxu0 %v1004
  %1869 = vmatmul.mubr.bf16.gmra.mxu0 %v1003
  %v1870 = vpop.f32.mrf.mxu0
  %v1871 = vadd.f32 %v1830, %v1870
  %v1872 = vpop.f32.mrf.mxu0
  %v1873 = vadd.f32 %v1832, %v1872
  %v1874 = vpop.f32.mrf.mxu0
  %v1875 = vpop.f32.mrf.mxu0
  %1876 = vdwg.mxu0
  %1877 = vmatprep.subr.bf16.mxu0 %v1570
  %1878 = vmatpush1.bf16.msra.mxu0 %v1569
  %1879 = vmatprep.subr.bf16.mxu0 %v1566
  %1880 = vmatpush1.bf16.msra.mxu0 %v1565
  %1881 = vmatprep.subr.bf16.mxu0 %v1562
  %1882 = vmatpush1.bf16.msra.mxu0 %v1561
  %1883 = vmatprep.subr.bf16.mxu0 %v1558
  %1884 = vmatpush1.bf16.msra.mxu0 %v1557
  %1885 = vmatprep.subr.bf16.mxu0 %v1554
  %1886 = vmatpush1.bf16.msra.mxu0 %v1553
  %1887 = vmatprep.subr.bf16.mxu0 %v1550
  %1888 = vmatpush1.bf16.msra.mxu0 %v1549
  %1889 = vmatprep.subr.bf16.mxu0 %v1546
  %1890 = vmatpush1.bf16.msra.mxu0 %v1545
  %1891 = vmatprep.subr.bf16.mxu0 %v1542
  %1892 = vmatpush1.bf16.msra.mxu0 %v1541
  %1893 = vmatprep.subr.bf16.mxu0 %v1602
  %1894 = vmatpush2.bf16.msra.mxu0 %v1601
  %1895 = vmatprep.subr.bf16.mxu0 %v1598
  %1896 = vmatpush2.bf16.msra.mxu0 %v1597
  %1897 = vmatprep.subr.bf16.mxu0 %v1594
  %1898 = vmatpush2.bf16.msra.mxu0 %v1593
  %1899 = vmatprep.subr.bf16.mxu0 %v1590
  %1900 = vmatpush2.bf16.msra.mxu0 %v1589
  %1901 = vmatprep.subr.bf16.mxu0 %v1586
  %1902 = vmatpush2.bf16.msra.mxu0 %v1585
  %1903 = vmatprep.subr.bf16.mxu0 %v1582
  %1904 = vmatpush2.bf16.msra.mxu0 %v1581
  %1905 = vmatprep.subr.bf16.mxu0 %v1578
  %1906 = vmatpush2.bf16.msra.mxu0 %v1577
  %1907 = vmatprep.subr.bf16.mxu0 %v1574
  %1908 = vmatpush2.bf16.msra.mxu0 %v1573
  %1909 = vmatprep.mubr.bf16.mxu0 %v1002
  %1910 = vmatmul.mubr.bf16.gmra.mxu0 %v1001
  %v1911 = vpop.f32.mrf.mxu0
  %v1912 = vadd.f32 %v1146, %v1911
  %v1913 = vpop.f32.mrf.mxu0
  %v1914 = vadd.f32 %v1150, %v1913
  %v1915 = vpop.f32.mrf.mxu0
  %v1916 = vpop.f32.mrf.mxu0
  %1917 = vdwg.mxu0
  %1918 = vmatprep.subr.bf16.mxu0 %v1634
  %1919 = vmatpush1.bf16.msra.mxu0 %v1633
  %1920 = vmatprep.subr.bf16.mxu0 %v1630
  %1921 = vmatpush1.bf16.msra.mxu0 %v1629
  %1922 = vmatprep.subr.bf16.mxu0 %v1626
  %1923 = vmatpush1.bf16.msra.mxu0 %v1625
  %1924 = vmatprep.subr.bf16.mxu0 %v1622
  %1925 = vmatpush1.bf16.msra.mxu0 %v1621
  %1926 = vmatprep.subr.bf16.mxu0 %v1618
  %1927 = vmatpush1.bf16.msra.mxu0 %v1617
  %1928 = vmatprep.subr.bf16.mxu0 %v1614
  %1929 = vmatpush1.bf16.msra.mxu0 %v1613
  %1930 = vmatprep.subr.bf16.mxu0 %v1610
  %1931 = vmatpush1.bf16.msra.mxu0 %v1609
  %1932 = vmatprep.subr.bf16.mxu0 %v1606
  %1933 = vmatpush1.bf16.msra.mxu0 %v1605
  %1934 = vmatprep.subr.bf16.mxu0 %v1666
  %1935 = vmatpush2.bf16.msra.mxu0 %v1665
  %1936 = vmatprep.subr.bf16.mxu0 %v1662
  %1937 = vmatpush2.bf16.msra.mxu0 %v1661
  %1938 = vmatprep.subr.bf16.mxu0 %v1658
  %1939 = vmatpush2.bf16.msra.mxu0 %v1657
  %1940 = vmatprep.subr.bf16.mxu0 %v1654
  %1941 = vmatpush2.bf16.msra.mxu0 %v1653
  %1942 = vmatprep.subr.bf16.mxu0 %v1650
  %1943 = vmatpush2.bf16.msra.mxu0 %v1649
  %1944 = vmatprep.subr.bf16.mxu0 %v1646
  %1945 = vmatpush2.bf16.msra.mxu0 %v1645
  %1946 = vmatprep.subr.bf16.mxu0 %v1642
  %1947 = vmatpush2.bf16.msra.mxu0 %v1641
  %1948 = vmatprep.subr.bf16.mxu0 %v1638
  %1949 = vmatpush2.bf16.msra.mxu0 %v1637
  %1950 = vmatprep.mubr.bf16.mxu0 %v1004
  %1951 = vmatmul.mubr.bf16.gmra.mxu0 %v1003
  %v1952 = vpop.f32.mrf.mxu0
  %v1953 = vadd.f32 %v1912, %v1952
  %v1954 = vpop.f32.mrf.mxu0
  %v1955 = vadd.f32 %v1914, %v1954
  %v1956 = vpop.f32.mrf.mxu0
  %v1957 = vpop.f32.mrf.mxu0
  %1958 = vdwg.mxu0
  %v1959 = vmax.f32 %v1871, 0.0
  %v1960 = vmax.f32 %v1873, 0.0
  %v1961 = vmax.f32 %v1953, 0.0
  %v1962 = vmax.f32 %v1955, 0.0
  %v1963 = vpack.c.bf16 %v1959, %v1959
  %v1964 = vpack.c.bf16 %v1960, %v1960
  %v1965 = vpack.c.bf16 %v1961, %v1961
  %v1966 = vpack.c.bf16 %v1962, %v1962
  %v1967 = vld [vmem:[%s5] sm:$0xf]
  %v1968 = vld [vmem:[%s5 + $0x4] sm:$0xf]
  %v1969 = vld [vmem:[%s5 + $0x8] sm:$0xf]
  %v1970 = vld [vmem:[%s5 + $0xc] sm:$0xf]
  %v1971 = vld [vmem:[%s5 + $0x10] sm:$0xf]
  %v1972 = vld [vmem:[%s5 + $0x14] sm:$0xf]
  %v1973 = vld [vmem:[%s5 + $0x18] sm:$0xf]
  %v1974 = vld [vmem:[%s5 + $0x1c] sm:$0xf]
  %v1975 = vld [vmem:[%s5 + $0x20] sm:$0xf]
  %v1976 = vld [vmem:[%s5 + $0x24] sm:$0xf]
  %v1977 = vld [vmem:[%s5 + $0x28] sm:$0xf]
  %v1978 = vld [vmem:[%s5 + $0x2c] sm:$0xf]
  %v1979 = vld [vmem:[%s5 + $0x30] sm:$0xf]
  %v1980 = vld [vmem:[%s5 + $0x34] sm:$0xf]
  %v1981 = vld [vmem:[%s5 + $0x38] sm:$0xf]
  %v1982 = vld [vmem:[%s5 + $0x3c] sm:$0xf]
  %v1983 = vld [vmem:[%s5 + $0x40] sm:$0xf]
  %v1984 = vld [vmem:[%s5 + $0x44] sm:$0xf]
  %v1985 = vld [vmem:[%s5 + $0x48] sm:$0xf]
  %v1986 = vld [vmem:[%s5 + $0x4c] sm:$0xf]
  %v1987 = vld [vmem:[%s5 + $0x50] sm:$0xf]
  %v1988 = vld [vmem:[%s5 + $0x54] sm:$0xf]
  %v1989 = vld [vmem:[%s5 + $0x58] sm:$0xf]
  %v1990 = vld [vmem:[%s5 + $0x5c] sm:$0xf]
  %v1991 = vld [vmem:[%s5 + $0x60] sm:$0xf]
  %v1992 = vld [vmem:[%s5 + $0x64] sm:$0xf]
  %v1993 = vld [vmem:[%s5 + $0x68] sm:$0xf]
  %v1994 = vld [vmem:[%s5 + $0x6c] sm:$0xf]
  %v1995 = vld [vmem:[%s5 + $0x70] sm:$0xf]
  %v1996 = vld [vmem:[%s5 + $0x74] sm:$0xf]
  %v1997 = vld [vmem:[%s5 + $0x78] sm:$0xf]
  %v1998 = vld [vmem:[%s5 + $0x7c] sm:$0xf]
  %v1999 = vld [vmem:[%s5 + $0x80] sm:$0xf]
  %v2000 = vld [vmem:[%s5 + $0x84] sm:$0xf]
  %v2001 = vld [vmem:[%s5 + $0x88] sm:$0xf]
  %v2002 = vld [vmem:[%s5 + $0x8c] sm:$0xf]
  %v2003 = vld [vmem:[%s5 + $0x90] sm:$0xf]
  %v2004 = vld [vmem:[%s5 + $0x94] sm:$0xf]
  %v2005 = vld [vmem:[%s5 + $0x98] sm:$0xf]
  %v2006 = vld [vmem:[%s5 + $0x9c] sm:$0xf]
  %v2007 = vld [vmem:[%s5 + $0xa0] sm:$0xf]
  %v2008 = vld [vmem:[%s5 + $0xa4] sm:$0xf]
  %v2009 = vld [vmem:[%s5 + $0xa8] sm:$0xf]
  %v2010 = vld [vmem:[%s5 + $0xac] sm:$0xf]
  %v2011 = vld [vmem:[%s5 + $0xb0] sm:$0xf]
  %v2012 = vld [vmem:[%s5 + $0xb4] sm:$0xf]
  %v2013 = vld [vmem:[%s5 + $0xb8] sm:$0xf]
  %v2014 = vld [vmem:[%s5 + $0xbc] sm:$0xf]
  %v2015 = vld [vmem:[%s5 + $0xc0] sm:$0xf]
  %v2016 = vld [vmem:[%s5 + $0xc4] sm:$0xf]
  %v2017 = vld [vmem:[%s5 + $0xc8] sm:$0xf]
  %v2018 = vld [vmem:[%s5 + $0xcc] sm:$0xf]
  %v2019 = vld [vmem:[%s5 + $0xd0] sm:$0xf]
  %v2020 = vld [vmem:[%s5 + $0xd4] sm:$0xf]
  %v2021 = vld [vmem:[%s5 + $0xd8] sm:$0xf]
  %v2022 = vld [vmem:[%s5 + $0xdc] sm:$0xf]
  %v2023 = vld [vmem:[%s5 + $0xe0] sm:$0xf]
  %v2024 = vld [vmem:[%s5 + $0xe4] sm:$0xf]
  %v2025 = vld [vmem:[%s5 + $0xe8] sm:$0xf]
  %v2026 = vld [vmem:[%s5 + $0xec] sm:$0xf]
  %v2027 = vld [vmem:[%s5 + $0xf0] sm:$0xf]
  %v2028 = vld [vmem:[%s5 + $0xf4] sm:$0xf]
  %v2029 = vld [vmem:[%s5 + $0xf8] sm:$0xf]
  %v2030 = vld [vmem:[%s5 + $0xfc] sm:$0xf]
  %v2031 = vld [vmem:[%s6] sm:$0x1]
  %v2033 = vlaneseq
  %v2034 = vshrl.u32 %v2033, 7
  %v2035 = vsub.s32 0, %v2034
  %v2036 = vrot.slane %v2031, %v2035
  %v2102 = vunpack.c.l.b16 %v1967
  %v2103 = vunpack.c.l.b16 %v1968
  %v2104 = vunpack.c.l.b16 %v1969
  %v2105 = vunpack.c.l.b16 %v1970
  %v2106 = vunpack.c.l.b16 %v1971
  %v2107 = vunpack.c.l.b16 %v1972
  %v2108 = vunpack.c.l.b16 %v1973
  %v2109 = vunpack.c.l.b16 %v1974
  %v2110 = vunpack.c.l.b16 %v1975
  %v2111 = vunpack.c.l.b16 %v1976
  %v2112 = vunpack.c.l.b16 %v1977
  %v2113 = vunpack.c.l.b16 %v1978
  %v2114 = vunpack.c.l.b16 %v1979
  %v2115 = vunpack.c.l.b16 %v1980
  %v2116 = vunpack.c.l.b16 %v1981
  %v2117 = vunpack.c.l.b16 %v1982
  %v2118 = vunpack.c.l.b16 %v1983
  %v2119 = vunpack.c.l.b16 %v1984
  %v2120 = vunpack.c.l.b16 %v1985
  %v2121 = vunpack.c.l.b16 %v1986
  %v2122 = vunpack.c.l.b16 %v1987
  %v2123 = vunpack.c.l.b16 %v1988
  %v2124 = vunpack.c.l.b16 %v1989
  %v2125 = vunpack.c.l.b16 %v1990
  %v2126 = vunpack.c.l.b16 %v1991
  %v2127 = vunpack.c.l.b16 %v1992
  %v2128 = vunpack.c.l.b16 %v1993
  %v2129 = vunpack.c.l.b16 %v1994
  %v2130 = vunpack.c.l.b16 %v1995
  %v2131 = vunpack.c.l.b16 %v1996
  %v2132 = vunpack.c.l.b16 %v1997
  %v2133 = vunpack.c.l.b16 %v1998
  %v2134 = vunpack.c.l.b16 %v1999
  %v2135 = vunpack.c.l.b16 %v2000
  %v2136 = vunpack.c.l.b16 %v2001
  %v2137 = vunpack.c.l.b16 %v2002
  %v2138 = vunpack.c.l.b16 %v2003
  %v2139 = vunpack.c.l.b16 %v2004
  %v2140 = vunpack.c.l.b16 %v2005
  %v2141 = vunpack.c.l.b16 %v2006
  %v2142 = vunpack.c.l.b16 %v2007
  %v2143 = vunpack.c.l.b16 %v2008
  %v2144 = vunpack.c.l.b16 %v2009
  %v2145 = vunpack.c.l.b16 %v2010
  %v2146 = vunpack.c.l.b16 %v2011
  %v2147 = vunpack.c.l.b16 %v2012
  %v2148 = vunpack.c.l.b16 %v2013
  %v2149 = vunpack.c.l.b16 %v2014
  %v2150 = vunpack.c.l.b16 %v2015
  %v2151 = vunpack.c.l.b16 %v2016
  %v2152 = vunpack.c.l.b16 %v2017
  %v2153 = vunpack.c.l.b16 %v2018
  %v2154 = vunpack.c.l.b16 %v2019
  %v2155 = vunpack.c.l.b16 %v2020
  %v2156 = vunpack.c.l.b16 %v2021
  %v2157 = vunpack.c.l.b16 %v2022
  %v2158 = vunpack.c.l.b16 %v2023
  %v2159 = vunpack.c.l.b16 %v2024
  %v2160 = vunpack.c.l.b16 %v2025
  %v2161 = vunpack.c.l.b16 %v2026
  %v2162 = vunpack.c.l.b16 %v2027
  %v2163 = vunpack.c.l.b16 %v2028
  %v2164 = vunpack.c.l.b16 %v2029
  %v2165 = vunpack.c.l.b16 %v2030
  %v2166 = vpack.c.b16 %v2103, %v2102
  %v2167 = vpack.c.b16 %v2105, %v2104
  %v2168 = vpack.c.b16 %v2107, %v2106
  %v2169 = vpack.c.b16 %v2109, %v2108
  %v2170 = vpack.c.b16 %v2111, %v2110
  %v2171 = vpack.c.b16 %v2113, %v2112
  %v2172 = vpack.c.b16 %v2115, %v2114
  %v2173 = vpack.c.b16 %v2117, %v2116
  %v2174 = vpack.c.b16 %v2119, %v2118
  %v2175 = vpack.c.b16 %v2121, %v2120
  %v2176 = vpack.c.b16 %v2123, %v2122
  %v2177 = vpack.c.b16 %v2125, %v2124
  %v2178 = vpack.c.b16 %v2127, %v2126
  %v2179 = vpack.c.b16 %v2129, %v2128
  %v2180 = vpack.c.b16 %v2131, %v2130
  %v2181 = vpack.c.b16 %v2133, %v2132
  %v2182 = vpack.c.b16 %v2135, %v2134
  %v2183 = vpack.c.b16 %v2137, %v2136
  %v2184 = vpack.c.b16 %v2139, %v2138
  %v2185 = vpack.c.b16 %v2141, %v2140
  %v2186 = vpack.c.b16 %v2143, %v2142
  %v2187 = vpack.c.b16 %v2145, %v2144
  %v2188 = vpack.c.b16 %v2147, %v2146
  %v2189 = vpack.c.b16 %v2149, %v2148
  %v2190 = vpack.c.b16 %v2151, %v2150
  %v2191 = vpack.c.b16 %v2153, %v2152
  %v2192 = vpack.c.b16 %v2155, %v2154
  %v2193 = vpack.c.b16 %v2157, %v2156
  %v2194 = vpack.c.b16 %v2159, %v2158
  %v2195 = vpack.c.b16 %v2161, %v2160
  %v2196 = vpack.c.b16 %v2163, %v2162
  %v2197 = vpack.c.b16 %v2165, %v2164
  %2230 = vmatprep.subr.bf16.mxu0 0
  %2231 = vmatpush1.bf16.msra.mxu0 %v2173
  %2232 = vmatprep.subr.bf16.mxu0 0
  %2233 = vmatpush1.bf16.msra.mxu0 %v2172
  %2234 = vmatprep.subr.bf16.mxu0 0
  %2235 = vmatpush1.bf16.msra.mxu0 %v2171
  %2236 = vmatprep.subr.bf16.mxu0 0
  %2237 = vmatpush1.bf16.msra.mxu0 %v2170
  %2238 = vmatprep.subr.bf16.mxu0 0
  %2239 = vmatpush1.bf16.msra.mxu0 %v2169
  %2240 = vmatprep.subr.bf16.mxu0 0
  %2241 = vmatpush1.bf16.msra.mxu0 %v2168
  %2242 = vmatprep.subr.bf16.mxu0 0
  %2243 = vmatpush1.bf16.msra.mxu0 %v2167
  %2244 = vmatprep.subr.bf16.mxu0 0
  %2245 = vmatpush1.bf16.msra.mxu0 %v2166
  %2246 = vmatprep.subr.bf16.mxu0 0
  %2247 = vmatpush2.bf16.msra.mxu0 %v2181
  %2248 = vmatprep.subr.bf16.mxu0 0
  %2249 = vmatpush2.bf16.msra.mxu0 %v2180
  %2250 = vmatprep.subr.bf16.mxu0 0
  %2251 = vmatpush2.bf16.msra.mxu0 %v2179
  %2252 = vmatprep.subr.bf16.mxu0 0
  %2253 = vmatpush2.bf16.msra.mxu0 %v2178
  %2254 = vmatprep.subr.bf16.mxu0 0
  %2255 = vmatpush2.bf16.msra.mxu0 %v2177
  %2256 = vmatprep.subr.bf16.mxu0 0
  %2257 = vmatpush2.bf16.msra.mxu0 %v2176
  %2258 = vmatprep.subr.bf16.mxu0 0
  %2259 = vmatpush2.bf16.msra.mxu0 %v2175
  %2260 = vmatprep.subr.bf16.mxu0 0
  %2261 = vmatpush2.bf16.msra.mxu0 %v2174
  %2262 = vmatprep.mubr.bf16.mxu0 %v1964
  %2263 = vmatmul.mubr.bf16.gmra.mxu0 %v1963
  %v2264 = vpop.f32.mrf.mxu0
  %v2265 = vadd.f32 %v2036, %v2264
  %v2266 = vpop.f32.mrf.mxu0
  %v2267 = vpop.f32.mrf.mxu0
  %v2268 = vpop.f32.mrf.mxu0
  %2269 = vdwg.mxu0
  %2270 = vmatprep.subr.bf16.mxu0 0
  %2271 = vmatpush1.bf16.msra.mxu0 %v2189
  %2272 = vmatprep.subr.bf16.mxu0 0
  %2273 = vmatpush1.bf16.msra.mxu0 %v2188
  %2274 = vmatprep.subr.bf16.mxu0 0
  %2275 = vmatpush1.bf16.msra.mxu0 %v2187
  %2276 = vmatprep.subr.bf16.mxu0 0
  %2277 = vmatpush1.bf16.msra.mxu0 %v2186
  %2278 = vmatprep.subr.bf16.mxu0 0
  %2279 = vmatpush1.bf16.msra.mxu0 %v2185
  %2280 = vmatprep.subr.bf16.mxu0 0
  %2281 = vmatpush1.bf16.msra.mxu0 %v2184
  %2282 = vmatprep.subr.bf16.mxu0 0
  %2283 = vmatpush1.bf16.msra.mxu0 %v2183
  %2284 = vmatprep.subr.bf16.mxu0 0
  %2285 = vmatpush1.bf16.msra.mxu0 %v2182
  %2286 = vmatprep.subr.bf16.mxu0 0
  %2287 = vmatpush2.bf16.msra.mxu0 %v2197
  %2288 = vmatprep.subr.bf16.mxu0 0
  %2289 = vmatpush2.bf16.msra.mxu0 %v2196
  %2290 = vmatprep.subr.bf16.mxu0 0
  %2291 = vmatpush2.bf16.msra.mxu0 %v2195
  %2292 = vmatprep.subr.bf16.mxu0 0
  %2293 = vmatpush2.bf16.msra.mxu0 %v2194
  %2294 = vmatprep.subr.bf16.mxu0 0
  %2295 = vmatpush2.bf16.msra.mxu0 %v2193
  %2296 = vmatprep.subr.bf16.mxu0 0
  %2297 = vmatpush2.bf16.msra.mxu0 %v2192
  %2298 = vmatprep.subr.bf16.mxu0 0
  %2299 = vmatpush2.bf16.msra.mxu0 %v2191
  %2300 = vmatprep.subr.bf16.mxu0 0
  %2301 = vmatpush2.bf16.msra.mxu0 %v2190
  %2302 = vmatprep.mubr.bf16.mxu0 %v1966
  %2303 = vmatmul.mubr.bf16.gmra.mxu0 %v1965
  %v2304 = vpop.f32.mrf.mxu0
  %v2305 = vadd.f32 %v2265, %v2304
  %v2306 = vpop.f32.mrf.mxu0
  %v2307 = vpop.f32.mrf.mxu0
  %v2308 = vpop.f32.mrf.mxu0
  %2309 = vdwg.mxu0
  %2310 = vst [vmem:[%s7] sm:$0xff] %v2305
  // Predicated region
  $region30: #{vgg_forward.7} parent=0 // pred_check
    _
  $region31: #{vgg_forward.7} parent=0 // pred_check_branch
    %2312 = sbr.rel (0) target = $region33
  $region32: #{vgg_forward.7} parent=0 // pred_region
    _
  $region33: #{vgg_forward.7} parent=0 // pred_fallthru
    _
  // Predicated region
  $region34: #{vgg_forward.7} parent=0 // pred_check
    _
  $region35: #{vgg_forward.7} parent=0 // pred_check_branch
    %2314 = sbr.rel (0) target = $region37
  $region36: #{vgg_forward.7} parent=0 // pred_region
    _
  $region37: #{vgg_forward.7} parent=0 // pred_fallthru
    _

</llo_original>
